<compile_context>
chip_gen: v7x
topology: tpu7x:2x2x1
jax: 0.10.0
libtpu: 0.0.40
codegen_flags: <defaults>
</compile_context>

<pallas_src>
import functools

import jax
import jax.numpy as jnp
from jax.experimental import pallas as pl
from jax.experimental.pallas import tpu as pltpu


# ----------------------------------------------------------------------------
# Packed small-parameter (f32) slab layout: 9 biases + cw4 as a (1, 64) row.
# Every segment is padded to a multiple of 128 lanes so in-kernel static
# slices are lane-aligned (no relayout).
# ----------------------------------------------------------------------------
_SP_DIMS = (1024, 512, 64, 128, 64, 256, 128, 64, 1, 64)
#            fb1   fb2 fb3  lb1 lb2  cb1  cb2 cb3 cb4 cw4row


def _small_param_layout():
    offs = []
    off = 0
    for d in _SP_DIMS:
        offs.append(off)
        off += ((d + 127) // 128) * 128
    return tuple(offs), off


_SP_OFFSETS, _SP_TOTAL = _small_param_layout()


# ----------------------------------------------------------------------------
# Kernel
# ----------------------------------------------------------------------------
def _attack_kernel(
    x_ref, l_ref,
    fw1, fw2, fw3,           # features branch weights (bf16, (in, out))
    lw1, lw2,                # labels branch weights
    cw1x, cw1l, cw2, cw3,    # combine head (cw1 pre-split: top/bottom 64 rows)
    sp_ref,                  # packed f32 slab: 9 biases + cw4 row
    out_ref,
):
    f32 = jnp.float32
    (o_fb1, o_fb2, o_fb3, o_lb1, o_lb2,
     o_cb1, o_cb2, o_cb3, o_cb4, o_cw4) = _SP_OFFSETS

    def bias(off, n):
        return sp_ref[:, off:off + n]          # (1, n) f32, lane-aligned slice

    def dense_relu(h, w_ref, boff, bn):
        # MXU matmul in the weights' (bf16) dtype, f32 accumulation + f32 bias.
        y = jnp.dot(h.astype(w_ref.dtype), w_ref[...],
                    preferred_element_type=f32) + bias(boff, bn)
        return jnp.maximum(y, 0.0)

    # features branch: num_classes -> 1024 -> 512 -> 64 (ReLU after each)
    hx = dense_relu(x_ref[...], fw1, o_fb1, 1024)
    hx = dense_relu(hx, fw2, o_fb2, 512)
    hx = dense_relu(hx, fw3, o_fb3, 64)

    # labels branch: num_classes -> 128 -> 64 (ReLU after each)
    hl = dense_relu(l_ref[...], lw1, o_lb1, 128)
    hl = dense_relu(hl, lw2, o_lb2, 64)

    # combine: concat([hx, hl], 1) @ cw1  ==  hx @ cw1[:64] + hl @ cw1[64:]
    # (two MXU matmuls summed in f32; avoids a lane-axis concat/relayout)
    h = (jnp.dot(hx.astype(cw1x.dtype), cw1x[...], preferred_element_type=f32)
         + jnp.dot(hl.astype(cw1l.dtype), cw1l[...], preferred_element_type=f32)
         + bias(o_cb1, 256))
    h = jnp.maximum(h, 0.0)
    h = dense_relu(h, cw2, o_cb2, 128)
    h = dense_relu(h, cw3, o_cb3, 64)

    # final 64 -> 1 projection on the VPU (mul + cross-lane reduce) instead of
    # an N=1 MXU matmul pass.
    cw4_row = bias(o_cw4, 64)                  # (1, 64) f32
    logit = jnp.sum(h * cw4_row, axis=-1, keepdims=True) + bias(o_cb4, 1)
    out_ref[...] = jax.nn.sigmoid(logit).astype(out_ref.dtype)


# ----------------------------------------------------------------------------
# Parameter handling
# ----------------------------------------------------------------------------
def init_params(key, num_classes, dtype=jnp.float32):
    """Deterministic init matching the PyTorch module: W ~ N(0, 0.01), b = 0.
    Weights are stored transposed as (in, out)."""
    dims = [
        # features
        (num_classes, 1024), (1024, 512), (512, 64),
        # labels
        (num_classes, 128), (128, 64),
        # combine
        (128, 256), (256, 128), (128, 64), (64, 1),
    ]
    params = []
    keys = jax.random.split(key, len(dims))
    for k, (din, dout) in zip(keys, dims):
        w = (0.01 * jax.random.normal(k, (din, dout))).astype(dtype)
        b = jnp.zeros((1, dout), dtype)
        params.append(w)
        params.append(b)
    return params


def pack_params(params, compute_dtype=jnp.bfloat16):
    """One-time packing: bf16 weight casts, cw1 split, biases + cw4 row into a
    single f32 slab.  Call once; reuse the result across forward calls so the
    per-call weight HBM traffic is exactly the resident bf16 weights."""
    (fw1, fb1, fw2, fb2, fw3, fb3,
     lw1, lb1, lw2, lb2,
     cw1, cb1, cw2, cb2, cw3, cb3, cw4, cb4) = params
    cd = compute_dtype

    weights = (
        fw1.astype(cd), fw2.astype(cd), fw3.astype(cd),
        lw1.astype(cd), lw2.astype(cd),
        cw1[:64].astype(cd), cw1[64:].astype(cd),
        cw2.astype(cd), cw3.astype(cd),
    )

    segs = (fb1, fb2, fb3, lb1, lb2, cb1, cb2, cb3, cb4, cw4.reshape(1, 64))
    buf = jnp.zeros((1, _SP_TOTAL), jnp.float32)
    for off, s in zip(_SP_OFFSETS, segs):
        s2 = jnp.asarray(s, jnp.float32).reshape(1, -1)
        buf = buf.at[:, off:off + s2.shape[1]].set(s2)

    return weights + (buf,)


# ----------------------------------------------------------------------------
# Tiling policy
# ----------------------------------------------------------------------------
def _tensorcores_per_chip():
    try:
        kind = jax.devices()[0].device_kind.lower()
    except Exception:
        return 1
    return 2 if ("v7" in kind or "7x" in kind) else 1


def _choose_block_b(B, n_cores):
    """Single-TC chips (v5e/v6e): largest tile (ideally the whole batch, one
    grid step -> no per-step overhead).  v7x: >= 2 grid steps per core so the
    input/output DMAs pipeline against compute on both TensorCores."""
    target_steps = 2 * n_cores if n_cores >= 2 else 1
    best = None
    for cand in (512, 384, 256, 128, 64, 32, 16, 8):   # 128-multiples first
        if cand <= B and B % cand == 0:
            if best is None:
                best = cand
            if B // cand >= target_steps:
                return cand
    # No divisor tile found: run the whole batch as one (full-dim) block.
    return best if best is not None else B


# ----------------------------------------------------------------------------
# Forward
# ----------------------------------------------------------------------------
@functools.partial(jax.jit, static_argnames=("block_b",))
def _forward_impl(x, l, packed, *, block_b):
    weights = packed[:-1]
    sp = packed[-1]

    B, num_classes = x.shape
    grid = (B // block_b,)

    def batch_spec(ncols):
        return pl.BlockSpec((block_b, ncols), lambda i: (i, 0))

    def full_spec(shape):
        return pl.BlockSpec(shape, lambda i: (0, 0))

    in_specs = [batch_spec(num_classes), batch_spec(num_classes)]
    in_specs += [full_spec(w.shape) for w in weights]
    in_specs += [full_spec(sp.shape)]

    out_spec = pl.BlockSpec((block_b, 1), lambda i: (i, 0))

    return pl.pallas_call(
        _attack_kernel,
        out_shape=jax.ShapeDtypeStruct((B, 1), x.dtype),
        grid_spec=pltpu.PrefetchScalarGridSpec(
            num_scalar_prefetch=0,
            grid=grid,
            in_specs=in_specs,
            out_specs=out_spec,
        ),
        compiler_params=pltpu.CompilerParams(
            dimension_semantics=("parallel",),
            vmem_limit_bytes=32 * 1024 * 1024,
        ),
    )(x, l, *weights, sp)


def inference_attack_forward(x, l, packed_params, *, block_b=None):
    """x, l: (B, num_classes).  packed_params: output of pack_params()."""
    B = x.shape[0]
    assert l.shape == x.shape
    if block_b is None:
        block_b = _choose_block_b(B, _tensorcores_per_chip())
    assert B % block_b == 0, "batch must be divisible by block_b"
    return _forward_impl(x, l, packed_params, block_b=block_b)


# ----------------------------------------------------------------------------
# Pure-JAX reference (f32)
# ----------------------------------------------------------------------------
def _reference_forward(x, l, params):
    (fw1, fb1, fw2, fb2, fw3, fb3,
     lw1, lb1, lw2, lb2,
     cw1, cb1, cw2, cb2, cw3, cb3, cw4, cb4) = params
    relu = jax.nn.relu
    hx = relu(x @ fw1 + fb1)
    hx = relu(hx @ fw2 + fb2)
    hx = relu(hx @ fw3 + fb3)
    hl = relu(l @ lw1 + lb1)
    hl = relu(hl @ lw2 + lb2)
    h = jnp.concatenate([hx, hl], axis=1)
    h = relu(h @ cw1 + cb1)
    h = relu(h @ cw2 + cb2)
    h = relu(h @ cw3 + cb3)
    return jax.nn.sigmoid(h @ cw4 + cb4)


if __name__ == "__main__":
    num_classes = 10
    batch = 64   # small demo shape; single grid step on v5e/v6e, 4 steps on v7x

    key = jax.random.PRNGKey(0)
    k_params, k_x, k_l = jax.random.split(key, 3)

    params = init_params(k_params, num_classes)
    packed = pack_params(params)          # one-time: casts / split / bias slab
    packed = jax.block_until_ready(packed)

    # x: softmax-like confidence vector; l: one-hot label.
    logits = jax.random.normal(k_x, (batch, num_classes), jnp.float32)
    x = jax.nn.softmax(logits, axis=-1)
    labels = jax.random.randint(k_l, (batch,), 0, num_classes)
    l = jax.nn.one_hot(labels, num_classes, dtype=jnp.float32)

    out = inference_attack_forward(x, l, packed)
    out = jax.block_until_ready(out)

    ref = _reference_forward(x, l, params)
    assert out.shape == (batch, 1)
    # bf16 matmuls vs f32 reference -> loosened tolerance.
    assert jnp.allclose(out, ref, atol=1e-2, rtol=1e-2), "mismatch vs reference"

    print("KERNEL_OK")
</pallas_src>

<mosaic_0001>
module attributes {stable_mosaic.version = 11 : i64} {
  func.func @_attack_kernel(%arg0: i32, %arg1: memref<64x10xf32, #tpu.memory_space<vmem>>, %arg2: memref<64x10xf32, #tpu.memory_space<vmem>>, %arg3: memref<10x1024xbf16, #tpu.memory_space<vmem>>, %arg4: memref<1024x512xbf16, #tpu.memory_space<vmem>>, %arg5: memref<512x64xbf16, #tpu.memory_space<vmem>>, %arg6: memref<10x128xbf16, #tpu.memory_space<vmem>>, %arg7: memref<128x64xbf16, #tpu.memory_space<vmem>>, %arg8: memref<64x256xbf16, #tpu.memory_space<vmem>>, %arg9: memref<64x256xbf16, #tpu.memory_space<vmem>>, %arg10: memref<256x128xbf16, #tpu.memory_space<vmem>>, %arg11: memref<128x64xbf16, #tpu.memory_space<vmem>>, %arg12: memref<1x2688xf32, #tpu.memory_space<vmem>>, %arg13: memref<64x1xf32, #tpu.memory_space<vmem>>) attributes {dimension_semantics = [#tpu.dimension_semantics<parallel>], iteration_bounds = array<i64: 1>, scalar_prefetch = 0 : i64, scratch_operands = 0 : i64, tpu.core_type = #tpu.core_type<tc>, window_params = [{transform_indices = @transform_0, window_bounds = array<i64: 64, 10>}, {transform_indices = @transform_1, window_bounds = array<i64: 64, 10>}, {pipeline_mode = #tpu.pipeline_mode<synchronous>, transform_indices = @transform_2, window_bounds = array<i64: 10, 1024>}, {pipeline_mode = #tpu.pipeline_mode<synchronous>, transform_indices = @transform_3, window_bounds = array<i64: 1024, 512>}, {pipeline_mode = #tpu.pipeline_mode<synchronous>, transform_indices = @transform_4, window_bounds = array<i64: 512, 64>}, {pipeline_mode = #tpu.pipeline_mode<synchronous>, transform_indices = @transform_5, window_bounds = array<i64: 10, 128>}, {pipeline_mode = #tpu.pipeline_mode<synchronous>, transform_indices = @transform_6, window_bounds = array<i64: 128, 64>}, {pipeline_mode = #tpu.pipeline_mode<synchronous>, transform_indices = @transform_7, window_bounds = array<i64: 64, 256>}, {pipeline_mode = #tpu.pipeline_mode<synchronous>, transform_indices = @transform_8, window_bounds = array<i64: 64, 256>}, {pipeline_mode = #tpu.pipeline_mode<synchronous>, transform_indices = @transform_9, window_bounds = array<i64: 256, 128>}, {pipeline_mode = #tpu.pipeline_mode<synchronous>, transform_indices = @transform_10, window_bounds = array<i64: 128, 64>}, {pipeline_mode = #tpu.pipeline_mode<synchronous>, transform_indices = @transform_11, window_bounds = array<i64: 1, 2688>}, {transform_indices = @transform_12, window_bounds = array<i64: 64, 1>}]} {
    %c0 = arith.constant 0 : index
    %c0_0 = arith.constant 0 : index
    %0 = vector.load %arg1[%c0, %c0_0] : memref<64x10xf32, #tpu.memory_space<vmem>>, vector<64x10xf32>
    %1 = arith.truncf %0 : vector<64x10xf32> to vector<64x10xbf16>
    %c0_1 = arith.constant 0 : index
    %c0_2 = arith.constant 0 : index
    %2 = vector.load %arg3[%c0_1, %c0_2] : memref<10x1024xbf16, #tpu.memory_space<vmem>>, vector<10x1024xbf16>
    %cst = arith.constant dense<0.000000e+00> : vector<64x1024xf32>
    %3 = tpu.matmul %1, %2, %cst {dimension_numbers = #tpu.dot_dimension_numbers<[1], [0], [0], [1], [0, 0, 1, 1], [], []>} : vector<64x10xbf16>, vector<10x1024xbf16>, vector<64x1024xf32> -> vector<64x1024xf32>
    %c0_3 = arith.constant 0 : index
    %c0_4 = arith.constant 0 : index
    %4 = vector.load %arg12[%c0_3, %c0_4] : memref<1x2688xf32, #tpu.memory_space<vmem>>, vector<1x1024xf32>
    %5 = vector.broadcast %4 : vector<1x1024xf32> to vector<64x1024xf32>
    %6 = arith.addf %3, %5 : vector<64x1024xf32>
    %cst_5 = arith.constant 0.000000e+00 : f32
    %7 = vector.broadcast %cst_5 : f32 to vector<64x1024xf32>
    %8 = arith.maximumf %6, %7 : vector<64x1024xf32>
    %9 = arith.truncf %8 : vector<64x1024xf32> to vector<64x1024xbf16>
    %c0_6 = arith.constant 0 : index
    %c0_7 = arith.constant 0 : index
    %10 = vector.load %arg4[%c0_6, %c0_7] : memref<1024x512xbf16, #tpu.memory_space<vmem>>, vector<1024x512xbf16>
    %cst_8 = arith.constant dense<0.000000e+00> : vector<64x512xf32>
    %11 = tpu.matmul %9, %10, %cst_8 {dimension_numbers = #tpu.dot_dimension_numbers<[1], [0], [0], [1], [0, 0, 1, 1], [], []>} : vector<64x1024xbf16>, vector<1024x512xbf16>, vector<64x512xf32> -> vector<64x512xf32>
    %c0_9 = arith.constant 0 : index
    %c1024 = arith.constant 1024 : index
    %12 = vector.load %arg12[%c0_9, %c1024] : memref<1x2688xf32, #tpu.memory_space<vmem>>, vector<1x512xf32>
    %13 = vector.broadcast %12 : vector<1x512xf32> to vector<64x512xf32>
    %14 = arith.addf %11, %13 : vector<64x512xf32>
    %cst_10 = arith.constant 0.000000e+00 : f32
    %15 = vector.broadcast %cst_10 : f32 to vector<64x512xf32>
    %16 = arith.maximumf %14, %15 : vector<64x512xf32>
    %17 = arith.truncf %16 : vector<64x512xf32> to vector<64x512xbf16>
    %c0_11 = arith.constant 0 : index
    %c0_12 = arith.constant 0 : index
    %18 = vector.load %arg5[%c0_11, %c0_12] : memref<512x64xbf16, #tpu.memory_space<vmem>>, vector<512x64xbf16>
    %cst_13 = arith.constant dense<0.000000e+00> : vector<64x64xf32>
    %19 = tpu.matmul %17, %18, %cst_13 {dimension_numbers = #tpu.dot_dimension_numbers<[1], [0], [0], [1], [0, 0, 1, 1], [], []>} : vector<64x512xbf16>, vector<512x64xbf16>, vector<64x64xf32> -> vector<64x64xf32>
    %c0_14 = arith.constant 0 : index
    %c1536 = arith.constant 1536 : index
    %20 = vector.load %arg12[%c0_14, %c1536] : memref<1x2688xf32, #tpu.memory_space<vmem>>, vector<1x64xf32>
    %21 = vector.broadcast %20 : vector<1x64xf32> to vector<64x64xf32>
    %22 = arith.addf %19, %21 : vector<64x64xf32>
    %cst_15 = arith.constant 0.000000e+00 : f32
    %23 = vector.broadcast %cst_15 : f32 to vector<64x64xf32>
    %24 = arith.maximumf %22, %23 : vector<64x64xf32>
    %c0_16 = arith.constant 0 : index
    %c0_17 = arith.constant 0 : index
    %25 = vector.load %arg2[%c0_16, %c0_17] : memref<64x10xf32, #tpu.memory_space<vmem>>, vector<64x10xf32>
    %26 = arith.truncf %25 : vector<64x10xf32> to vector<64x10xbf16>
    %c0_18 = arith.constant 0 : index
    %c0_19 = arith.constant 0 : index
    %27 = vector.load %arg6[%c0_18, %c0_19] : memref<10x128xbf16, #tpu.memory_space<vmem>>, vector<10x128xbf16>
    %cst_20 = arith.constant dense<0.000000e+00> : vector<64x128xf32>
    %28 = tpu.matmul %26, %27, %cst_20 {dimension_numbers = #tpu.dot_dimension_numbers<[1], [0], [0], [1], [0, 0, 1, 1], [], []>} : vector<64x10xbf16>, vector<10x128xbf16>, vector<64x128xf32> -> vector<64x128xf32>
    %c0_21 = arith.constant 0 : index
    %c1664 = arith.constant 1664 : index
    %29 = vector.load %arg12[%c0_21, %c1664] : memref<1x2688xf32, #tpu.memory_space<vmem>>, vector<1x128xf32>
    %30 = vector.broadcast %29 : vector<1x128xf32> to vector<64x128xf32>
    %31 = arith.addf %28, %30 : vector<64x128xf32>
    %cst_22 = arith.constant 0.000000e+00 : f32
    %32 = vector.broadcast %cst_22 : f32 to vector<64x128xf32>
    %33 = arith.maximumf %31, %32 : vector<64x128xf32>
    %34 = arith.truncf %33 : vector<64x128xf32> to vector<64x128xbf16>
    %c0_23 = arith.constant 0 : index
    %c0_24 = arith.constant 0 : index
    %35 = vector.load %arg7[%c0_23, %c0_24] : memref<128x64xbf16, #tpu.memory_space<vmem>>, vector<128x64xbf16>
    %cst_25 = arith.constant dense<0.000000e+00> : vector<64x64xf32>
    %36 = tpu.matmul %34, %35, %cst_25 {dimension_numbers = #tpu.dot_dimension_numbers<[1], [0], [0], [1], [0, 0, 1, 1], [], []>} : vector<64x128xbf16>, vector<128x64xbf16>, vector<64x64xf32> -> vector<64x64xf32>
    %c0_26 = arith.constant 0 : index
    %c1792 = arith.constant 1792 : index
    %37 = vector.load %arg12[%c0_26, %c1792] : memref<1x2688xf32, #tpu.memory_space<vmem>>, vector<1x64xf32>
    %38 = vector.broadcast %37 : vector<1x64xf32> to vector<64x64xf32>
    %39 = arith.addf %36, %38 : vector<64x64xf32>
    %cst_27 = arith.constant 0.000000e+00 : f32
    %40 = vector.broadcast %cst_27 : f32 to vector<64x64xf32>
    %41 = arith.maximumf %39, %40 : vector<64x64xf32>
    %42 = arith.truncf %24 : vector<64x64xf32> to vector<64x64xbf16>
    %c0_28 = arith.constant 0 : index
    %c0_29 = arith.constant 0 : index
    %43 = vector.load %arg8[%c0_28, %c0_29] : memref<64x256xbf16, #tpu.memory_space<vmem>>, vector<64x256xbf16>
    %cst_30 = arith.constant dense<0.000000e+00> : vector<64x256xf32>
    %44 = tpu.matmul %42, %43, %cst_30 {dimension_numbers = #tpu.dot_dimension_numbers<[1], [0], [0], [1], [0, 0, 1, 1], [], []>} : vector<64x64xbf16>, vector<64x256xbf16>, vector<64x256xf32> -> vector<64x256xf32>
    %45 = arith.truncf %41 : vector<64x64xf32> to vector<64x64xbf16>
    %c0_31 = arith.constant 0 : index
    %c0_32 = arith.constant 0 : index
    %46 = vector.load %arg9[%c0_31, %c0_32] : memref<64x256xbf16, #tpu.memory_space<vmem>>, vector<64x256xbf16>
    %cst_33 = arith.constant dense<0.000000e+00> : vector<64x256xf32>
    %47 = tpu.matmul %45, %46, %cst_33 {dimension_numbers = #tpu.dot_dimension_numbers<[1], [0], [0], [1], [0, 0, 1, 1], [], []>} : vector<64x64xbf16>, vector<64x256xbf16>, vector<64x256xf32> -> vector<64x256xf32>
    %48 = arith.addf %44, %47 : vector<64x256xf32>
    %c0_34 = arith.constant 0 : index
    %c1920 = arith.constant 1920 : index
    %49 = vector.load %arg12[%c0_34, %c1920] : memref<1x2688xf32, #tpu.memory_space<vmem>>, vector<1x256xf32>
    %50 = vector.broadcast %49 : vector<1x256xf32> to vector<64x256xf32>
    %51 = arith.addf %48, %50 : vector<64x256xf32>
    %cst_35 = arith.constant 0.000000e+00 : f32
    %52 = vector.broadcast %cst_35 : f32 to vector<64x256xf32>
    %53 = arith.maximumf %51, %52 : vector<64x256xf32>
    %54 = arith.truncf %53 : vector<64x256xf32> to vector<64x256xbf16>
    %c0_36 = arith.constant 0 : index
    %c0_37 = arith.constant 0 : index
    %55 = vector.load %arg10[%c0_36, %c0_37] : memref<256x128xbf16, #tpu.memory_space<vmem>>, vector<256x128xbf16>
    %cst_38 = arith.constant dense<0.000000e+00> : vector<64x128xf32>
    %56 = tpu.matmul %54, %55, %cst_38 {dimension_numbers = #tpu.dot_dimension_numbers<[1], [0], [0], [1], [0, 0, 1, 1], [], []>} : vector<64x256xbf16>, vector<256x128xbf16>, vector<64x128xf32> -> vector<64x128xf32>
    %c0_39 = arith.constant 0 : index
    %c2176 = arith.constant 2176 : index
    %57 = vector.load %arg12[%c0_39, %c2176] : memref<1x2688xf32, #tpu.memory_space<vmem>>, vector<1x128xf32>
    %58 = vector.broadcast %57 : vector<1x128xf32> to vector<64x128xf32>
    %59 = arith.addf %56, %58 : vector<64x128xf32>
    %cst_40 = arith.constant 0.000000e+00 : f32
    %60 = vector.broadcast %cst_40 : f32 to vector<64x128xf32>
    %61 = arith.maximumf %59, %60 : vector<64x128xf32>
    %62 = arith.truncf %61 : vector<64x128xf32> to vector<64x128xbf16>
    %c0_41 = arith.constant 0 : index
    %c0_42 = arith.constant 0 : index
    %63 = vector.load %arg11[%c0_41, %c0_42] : memref<128x64xbf16, #tpu.memory_space<vmem>>, vector<128x64xbf16>
    %cst_43 = arith.constant dense<0.000000e+00> : vector<64x64xf32>
    %64 = tpu.matmul %62, %63, %cst_43 {dimension_numbers = #tpu.dot_dimension_numbers<[1], [0], [0], [1], [0, 0, 1, 1], [], []>} : vector<64x128xbf16>, vector<128x64xbf16>, vector<64x64xf32> -> vector<64x64xf32>
    %c0_44 = arith.constant 0 : index
    %c2304 = arith.constant 2304 : index
    %65 = vector.load %arg12[%c0_44, %c2304] : memref<1x2688xf32, #tpu.memory_space<vmem>>, vector<1x64xf32>
    %66 = vector.broadcast %65 : vector<1x64xf32> to vector<64x64xf32>
    %67 = arith.addf %64, %66 : vector<64x64xf32>
    %cst_45 = arith.constant 0.000000e+00 : f32
    %68 = vector.broadcast %cst_45 : f32 to vector<64x64xf32>
    %69 = arith.maximumf %67, %68 : vector<64x64xf32>
    %c0_46 = arith.constant 0 : index
    %c2560 = arith.constant 2560 : index
    %70 = vector.load %arg12[%c0_46, %c2560] : memref<1x2688xf32, #tpu.memory_space<vmem>>, vector<1x64xf32>
    %71 = vector.broadcast %70 : vector<1x64xf32> to vector<64x64xf32>
    %72 = arith.mulf %69, %71 : vector<64x64xf32>
    %cst_47 = arith.constant dense<0.000000e+00> : vector<64xf32>
    %73 = vector.multi_reduction <add>, %72, %cst_47 [1] : vector<64x64xf32> to vector<64xf32>
    %74 = vector.shape_cast %73 : vector<64xf32> to vector<64x1xf32>
    %c0_48 = arith.constant 0 : index
    %c2432 = arith.constant 2432 : index
    %75 = vector.load %arg12[%c0_48, %c2432] : memref<1x2688xf32, #tpu.memory_space<vmem>>, vector<1x1xf32>
    %76 = vector.broadcast %75 : vector<1x1xf32> to vector<64x1xf32>
    %77 = arith.addf %74, %76 : vector<64x1xf32>
    %78 = arith.negf %77 : vector<64x1xf32>
    %79 = math.exp %78 : vector<64x1xf32>
    %cst_49 = arith.constant 1.000000e+00 : f32
    %80 = vector.broadcast %cst_49 : f32 to vector<64x1xf32>
    %81 = arith.addf %80, %79 : vector<64x1xf32>
    %82 = arith.divf %80, %81 : vector<64x1xf32>
    %c0_50 = arith.constant 0 : index
    %c0_51 = arith.constant 0 : index
    %83 = vector.load %arg13[%c0_50, %c0_51] : memref<64x1xf32, #tpu.memory_space<vmem>>, vector<64x1xf32>
    tpu.vector_store %arg13[%c0_50, %c0_51], %82 {strides = array<i32>} : memref<64x1xf32, #tpu.memory_space<vmem>>, vector<64x1xf32>,
    return
  }
  func.func @transform_0(%arg0: i32) -> (i32, i32) {
    %c0_i32 = arith.constant 0 : i32
    %c0_i32_0 = arith.constant 0 : i32
    return %arg0, %c0_i32 : i32, i32
  }
  func.func @transform_1(%arg0: i32) -> (i32, i32) {
    %c0_i32 = arith.constant 0 : i32
    %c0_i32_0 = arith.constant 0 : i32
    return %arg0, %c0_i32 : i32, i32
  }
  func.func @transform_2(%arg0: i32) -> (i32, i32) {
    %c0_i32 = arith.constant 0 : i32
    %c0_i32_0 = arith.constant 0 : i32
    %c0_i32_1 = arith.constant 0 : i32
    return %c0_i32, %c0_i32_0 : i32, i32
  }
  func.func @transform_3(%arg0: i32) -> (i32, i32) {
    %c0_i32 = arith.constant 0 : i32
    %c0_i32_0 = arith.constant 0 : i32
    %c0_i32_1 = arith.constant 0 : i32
    return %c0_i32, %c0_i32_0 : i32, i32
  }
  func.func @transform_4(%arg0: i32) -> (i32, i32) {
    %c0_i32 = arith.constant 0 : i32
    %c0_i32_0 = arith.constant 0 : i32
    %c0_i32_1 = arith.constant 0 : i32
    return %c0_i32, %c0_i32_0 : i32, i32
  }
  func.func @transform_5(%arg0: i32) -> (i32, i32) {
    %c0_i32 = arith.constant 0 : i32
    %c0_i32_0 = arith.constant 0 : i32
    %c0_i32_1 = arith.constant 0 : i32
    return %c0_i32, %c0_i32_0 : i32, i32
  }
  func.func @transform_6(%arg0: i32) -> (i32, i32) {
    %c0_i32 = arith.constant 0 : i32
    %c0_i32_0 = arith.constant 0 : i32
    %c0_i32_1 = arith.constant 0 : i32
    return %c0_i32, %c0_i32_0 : i32, i32
  }
  func.func @transform_7(%arg0: i32) -> (i32, i32) {
    %c0_i32 = arith.constant 0 : i32
    %c0_i32_0 = arith.constant 0 : i32
    %c0_i32_1 = arith.constant 0 : i32
    return %c0_i32, %c0_i32_0 : i32, i32
  }
  func.func @transform_8(%arg0: i32) -> (i32, i32) {
    %c0_i32 = arith.constant 0 : i32
    %c0_i32_0 = arith.constant 0 : i32
    %c0_i32_1 = arith.constant 0 : i32
    return %c0_i32, %c0_i32_0 : i32, i32
  }
  func.func @transform_9(%arg0: i32) -> (i32, i32) {
    %c0_i32 = arith.constant 0 : i32
    %c0_i32_0 = arith.constant 0 : i32
    %c0_i32_1 = arith.constant 0 : i32
    return %c0_i32, %c0_i32_0 : i32, i32
  }
  func.func @transform_10(%arg0: i32) -> (i32, i32) {
    %c0_i32 = arith.constant 0 : i32
    %c0_i32_0 = arith.constant 0 : i32
    %c0_i32_1 = arith.constant 0 : i32
    return %c0_i32, %c0_i32_0 : i32, i32
  }
  func.func @transform_11(%arg0: i32) -> (i32, i32) {
    %c0_i32 = arith.constant 0 : i32
    %c0_i32_0 = arith.constant 0 : i32
    %c0_i32_1 = arith.constant 0 : i32
    return %c0_i32, %c0_i32_0 : i32, i32
  }
  func.func @transform_12(%arg0: i32) -> (i32, i32) {
    %c0_i32 = arith.constant 0 : i32
    %c0_i32_0 = arith.constant 0 : i32
    return %arg0, %c0_i32 : i32, i32
  }
}

</mosaic_0001>

<llo_original>
// kernel: _forward_impl.1
$region0: #{_forward_impl.1}
  #allocation0 [shape = 'u32[]', space=smem, size = 0x4, offset = 0x4, fixed_abs, tag = 'smem constant byte address 0x4 - core index']
  #allocation1 [shape = 'u32[144,128]{1,0:T(1,128)}', space=vmem, size = 0x12000, scoped, tag = 'internal scratch']
  %s0 = inlined_call_operand.vmem [shape: f32[64,10], index: 0, kind: input, shape index: {}]
  %s1 = inlined_call_operand.vmem [shape: f32[64,10], index: 1, kind: input, shape index: {}]
  %s2 = inlined_call_operand.vmem [shape: bf16[10,1024], index: 2, kind: input, shape index: {}]
  %s3 = inlined_call_operand.hbm [shape: bf16[1024,512], index: 3, kind: input, shape index: {}]
  %s4 = inlined_call_operand.vmem [shape: bf16[512,64], index: 4, kind: input, shape index: {}]
  %s5 = inlined_call_operand.vmem [shape: bf16[10,128], index: 5, kind: input, shape index: {}]
  %s6 = inlined_call_operand.vmem [shape: bf16[128,64], index: 6, kind: input, shape index: {}]
  %s7 = inlined_call_operand.vmem [shape: bf16[64,256], index: 7, kind: input, shape index: {}]
  %s8 = inlined_call_operand.vmem [shape: bf16[64,256], index: 8, kind: input, shape index: {}]
  %s9 = inlined_call_operand.vmem [shape: bf16[256,128], index: 9, kind: input, shape index: {}]
  %s10 = inlined_call_operand.vmem [shape: bf16[128,64], index: 10, kind: input, shape index: {}]
  %s11 = inlined_call_operand.vmem [shape: f32[1,2688], index: 11, kind: input, shape index: {}]
  %s12 = inlined_call_operand.vmem [shape: f32[64,1], index: 12, kind: output, shape index: {}]
  %s13 = sld [smem:[#allocation0]]
  $region62: #{_forward_impl.1} parent=0
    _
  %s15 = ssub.s32 1, %s13
  %s16 = scalar_select 0, %s15, %s13
  $region1: #{_forward_impl.1} parent=0
    #allocation2 [shape = 'u8[1048576]{0}', space=vmem, size = 0x100000, scoped, tag = 'input window, operand 3, single buffered']
    #allocation3 [shape = 's32[1]{0}', space=sflag, size = 0x4, scoped, tag = 'scoped memory for _forward_impl.1']
    %17 = vsyncpa [#allocation3], 0
    // Predicated region
    $region2: #{_forward_impl.1} parent=1 // pred_check
      _
    $region3: #{_forward_impl.1} parent=1 // pred_check_branch
      %19 = sbr.rel (0) target = $region5
    $region4: #{_forward_impl.1} parent=1 // pred_region
      _
    $region5: #{_forward_impl.1} parent=1 // pred_fallthru
      _
    // Predicated region
    $region6: #{_forward_impl.1} parent=1 // pred_check
      _
    $region7: #{_forward_impl.1} parent=1 // pred_check_branch
      %21 = sbr.rel (0) target = $region9
    $region8: #{_forward_impl.1} parent=1 // pred_region
      _
    $region9: #{_forward_impl.1} parent=1 // pred_fallthru
      _
    // Predicated region
    $region10: #{_forward_impl.1} parent=1 // pred_check
      _
    $region11: #{_forward_impl.1} parent=1 // pred_check_branch
      %23 = sbr.rel (0) target = $region13
    $region12: #{_forward_impl.1} parent=1 // pred_region
      _
    $region13: #{_forward_impl.1} parent=1 // pred_fallthru
      _
    // Predicated region
    $region14: #{_forward_impl.1} parent=1 // pred_check
      _
    $region15: #{_forward_impl.1} parent=1 // pred_check_branch
      %25 = sbr.rel (0) target = $region17
    $region16: #{_forward_impl.1} parent=1 // pred_region
      %s27 = ssub.s32 32768, 32768
      %28 = vsyncadd [#allocation3], %s27
      %s29 = sshll.u32 [#allocation2], 4
      %s30 = int_to_ptr.vmem [resolvable:$true] %s29
      %35 = dma.hbm_to_vmem [thread:$0]  %s3, 32768, %s30, [#allocation3], 256, 256, 16
    $region17: #{_forward_impl.1} parent=1 // pred_fallthru
      _
    // Predicated region
    $region18: #{_forward_impl.1} parent=1 // pred_check
      _
    $region19: #{_forward_impl.1} parent=1 // pred_check_branch
      %37 = sbr.rel (0) target = $region21
    $region20: #{_forward_impl.1} parent=1 // pred_region
      _
    $region21: #{_forward_impl.1} parent=1 // pred_fallthru
      _
    // Predicated region
    $region22: #{_forward_impl.1} parent=1 // pred_check
      _
    $region23: #{_forward_impl.1} parent=1 // pred_check_branch
      %39 = sbr.rel (0) target = $region25
    $region24: #{_forward_impl.1} parent=1 // pred_region
      _
    $region25: #{_forward_impl.1} parent=1 // pred_fallthru
      _
    // Predicated region
    $region26: #{_forward_impl.1} parent=1 // pred_check
      _
    $region27: #{_forward_impl.1} parent=1 // pred_check_branch
      %41 = sbr.rel (0) target = $region29
    $region28: #{_forward_impl.1} parent=1 // pred_region
      _
    $region29: #{_forward_impl.1} parent=1 // pred_fallthru
      _
    // Predicated region
    $region30: #{_forward_impl.1} parent=1 // pred_check
      _
    $region31: #{_forward_impl.1} parent=1 // pred_check_branch
      %43 = sbr.rel (0) target = $region33
    $region32: #{_forward_impl.1} parent=1 // pred_region
      _
    $region33: #{_forward_impl.1} parent=1 // pred_fallthru
      _
    // Predicated region
    $region34: #{_forward_impl.1} parent=1 // pred_check
      _
    $region35: #{_forward_impl.1} parent=1 // pred_check_branch
      %45 = sbr.rel (0) target = $region37
    $region36: #{_forward_impl.1} parent=1 // pred_region
      _
    $region37: #{_forward_impl.1} parent=1 // pred_fallthru
      _
    // Predicated region
    $region38: #{_forward_impl.1} parent=1 // pred_check
      _
    $region39: #{_forward_impl.1} parent=1 // pred_check_branch
      %47 = sbr.rel (0) target = $region41
    $region40: #{_forward_impl.1} parent=1 // pred_region
      _
    $region41: #{_forward_impl.1} parent=1 // pred_fallthru
      _
    // Predicated region
    $region42: #{_forward_impl.1} parent=1 // pred_check
      _
    $region43: #{_forward_impl.1} parent=1 // pred_check_branch
      %49 = sbr.rel (0) target = $region45
    $region44: #{_forward_impl.1} parent=1 // pred_region
      _
    $region45: #{_forward_impl.1} parent=1 // pred_fallthru
      _
    // Predicated region
    $region46: #{_forward_impl.1} parent=1 // pred_check
      _
    $region47: #{_forward_impl.1} parent=1 // pred_check_branch
      %51 = sbr.rel (0) target = $region49
    $region48: #{_forward_impl.1} parent=1 // pred_region
      _
    $region49: #{_forward_impl.1} parent=1 // pred_fallthru
      _
    // Predicated region
    $region50: #{_forward_impl.1} parent=1 // pred_check
      _
    $region51: #{_forward_impl.1} parent=1 // pred_check_branch
      %53 = sbr.rel (0) target = $region53
    $region52: #{_forward_impl.1} parent=1 // pred_region
      %54 = dma.done [#allocation3], 32768
    $region53: #{_forward_impl.1} parent=1 // pred_fallthru
      _
    %v56 = vld [vmem:[%s0] sm:$0xff]
    %v57 = vld [vmem:[%s0 + $0x8] sm:$0xff]
    %v58 = vld [vmem:[%s0 + $0x10] sm:$0xff]
    %v59 = vld [vmem:[%s0 + $0x18] sm:$0xff]
    %v60 = vld [vmem:[%s0 + $0x20] sm:$0xff]
    %v61 = vld [vmem:[%s0 + $0x28] sm:$0xff]
    %v62 = vld [vmem:[%s0 + $0x30] sm:$0xff]
    %v63 = vld [vmem:[%s0 + $0x38] sm:$0xff]
    %v64 = vpack.c.bf16 %v57, %v56
    %v65 = vpack.c.bf16 %v59, %v58
    %v66 = vpack.c.bf16 %v61, %v60
    %v67 = vpack.c.bf16 %v63, %v62
    %v68 = vld [vmem:[%s2] sm:$0xff]
    %v69 = vld [vmem:[%s2 + $0x8] sm:$0xff]
    %v70 = vld [vmem:[%s2 + $0x10] sm:$0xff]
    %v71 = vld [vmem:[%s2 + $0x18] sm:$0xff]
    %v72 = vld [vmem:[%s2 + $0x20] sm:$0x11]
    %v73 = vld [vmem:[%s2 + $0x28] sm:$0x11]
    %v74 = vld [vmem:[%s2 + $0x30] sm:$0x11]
    %v75 = vld [vmem:[%s2 + $0x38] sm:$0x11]
    %v76 = vld [vmem:[%s11] sm:$0xff]
    %v78 = vlaneseq
    %v79 = vshrl.u32 %v78, 7
    %v80 = vsub.s32 0, %v79
    %v81 = vrot.slane %v76, %v80
    %v82 = vlaneseq
    %v83 = vshrl.u32 %v82, 7
    %v84 = vsub.s32 1, %v83
    %v85 = vrot.slane %v76, %v84
    %v86 = vlaneseq
    %v87 = vshrl.u32 %v86, 7
    %v88 = vsub.s32 2, %v87
    %v89 = vrot.slane %v76, %v88
    %v90 = vlaneseq
    %v91 = vshrl.u32 %v90, 7
    %v92 = vsub.s32 3, %v91
    %v93 = vrot.slane %v76, %v92
    %v94 = vlaneseq
    %v95 = vshrl.u32 %v94, 7
    %v96 = vsub.s32 4, %v95
    %v97 = vrot.slane %v76, %v96
    %v98 = vlaneseq
    %v99 = vshrl.u32 %v98, 7
    %v100 = vsub.s32 5, %v99
    %v101 = vrot.slane %v76, %v100
    %v102 = vlaneseq
    %v103 = vshrl.u32 %v102, 7
    %v104 = vsub.s32 6, %v103
    %v105 = vrot.slane %v76, %v104
    %v106 = vlaneseq
    %v107 = vshrl.u32 %v106, 7
    %v108 = vsub.s32 7, %v107
    %v109 = vrot.slane %v76, %v108
    %v126 = vunpack.c.l.b16 %v68
    %v127 = vunpack.c.h.b16 %v68
    %v128 = vunpack.c.l.b16 %v69
    %v129 = vunpack.c.h.b16 %v69
    %v130 = vunpack.c.l.b16 %v70
    %v131 = vunpack.c.h.b16 %v70
    %v132 = vunpack.c.l.b16 %v71
    %v133 = vunpack.c.h.b16 %v71
    %v134 = vunpack.c.l.b16 %v72
    %v135 = vunpack.c.h.b16 %v72
    %v136 = vunpack.c.l.b16 %v73
    %v137 = vunpack.c.h.b16 %v73
    %v138 = vunpack.c.l.b16 %v74
    %v139 = vunpack.c.h.b16 %v74
    %v140 = vunpack.c.l.b16 %v75
    %v141 = vunpack.c.h.b16 %v75
    %v142 = vpack.c.b16 %v134, %v126
    %v143 = vpack.c.b16 %v135, %v127
    %v144 = vpack.c.b16 %v136, %v128
    %v145 = vpack.c.b16 %v137, %v129
    %v146 = vpack.c.b16 %v138, %v130
    %v147 = vpack.c.b16 %v139, %v131
    %v148 = vpack.c.b16 %v140, %v132
    %v149 = vpack.c.b16 %v141, %v133
    %vm150 = vcmask 80896
    %v152 = vsel %vm150, %v64, 0
    %v155 = vsel %vm150, %v65, 0
    %v158 = vsel %vm150, %v66, 0
    %v161 = vsel %vm150, %v67, 0
    %vm163 = vcmask 1044480
    %v165 = vsel %vm163, %v142, 0
    %v168 = vsel %vm163, %v143, 0
    %v171 = vsel %vm163, %v144, 0
    %v174 = vsel %vm163, %v145, 0
    %v177 = vsel %vm163, %v146, 0
    %v180 = vsel %vm163, %v147, 0
    %v183 = vsel %vm163, %v148, 0
    %v186 = vsel %vm163, %v149, 0
    %188 = vmatprep.subr.bf16.mxu0 %v168
    %189 = vmatpush1.bf16.msra.mxu0 %v165
    %190 = vmatprep.subr.bf16.mxu0 0
    %191 = vmatpush1.bf16.msra.mxu0 0
    %192 = vmatprep.subr.bf16.mxu0 0
    %193 = vmatpush1.bf16.msra.mxu0 0
    %194 = vmatprep.subr.bf16.mxu0 0
    %195 = vmatpush1.bf16.msra.mxu0 0
    %196 = vmatprep.subr.bf16.mxu0 0
    %197 = vmatpush1.bf16.msra.mxu0 0
    %198 = vmatprep.subr.bf16.mxu0 0
    %199 = vmatpush1.bf16.msra.mxu0 0
    %200 = vmatprep.subr.bf16.mxu0 0
    %201 = vmatpush1.bf16.msra.mxu0 0
    %202 = vmatprep.subr.bf16.mxu0 0
    %203 = vmatpush1.bf16.msra.mxu0 0
    %204 = vmatprep.subr.bf16.mxu0 0
    %205 = vmatpush1.bf16.msra.mxu0 0
    %206 = vmatprep.subr.bf16.mxu0 0
    %207 = vmatpush1.bf16.msra.mxu0 0
    %208 = vmatprep.subr.bf16.mxu0 0
    %209 = vmatpush1.bf16.msra.mxu0 0
    %210 = vmatprep.subr.bf16.mxu0 0
    %211 = vmatpush1.bf16.msra.mxu0 0
    %212 = vmatprep.subr.bf16.mxu0 0
    %213 = vmatpush1.bf16.msra.mxu0 0
    %214 = vmatprep.subr.bf16.mxu0 0
    %215 = vmatpush1.bf16.msra.mxu0 0
    %216 = vmatprep.subr.bf16.mxu0 0
    %217 = vmatpush1.bf16.msra.mxu0 0
    %218 = vmatprep.subr.bf16.mxu0 0
    %219 = vmatpush1.bf16.msra.mxu0 0
    %220 = vmatprep.mubr.bf16.mxu0 0
    %221 = vmatmul.mubr.bf16.gmra.mrb[0].mxu0 %v152
    %v222 = vpop.f32.mrb[0].mxu0
    %v223 = vadd.f32 %v81, %v222
    %v224 = vpop.f32.mrb[0].mxu0
    %v225 = vadd.f32 %v85, %v224
    %v226 = vpop.f32.mrb[0].mxu0
    %v227 = vadd.f32 %v81, %v226
    %v228 = vpop.f32.mrb[0].mxu0
    %v229 = vadd.f32 %v85, %v228
    %230 = vmatprep.mubr.bf16.mxu0 0
    %231 = vmatmul.mubr.bf16.gmra.mrb[0].mxu0 %v155
    %v232 = vpop.f32.mrb[0].mxu0
    %v233 = vadd.f32 %v81, %v232
    %v234 = vpop.f32.mrb[0].mxu0
    %v235 = vadd.f32 %v85, %v234
    %v236 = vpop.f32.mrb[0].mxu0
    %v237 = vadd.f32 %v81, %v236
    %v238 = vpop.f32.mrb[0].mxu0
    %v239 = vadd.f32 %v85, %v238
    %240 = vmatprep.mubr.bf16.mxu0 0
    %241 = vmatmul.mubr.bf16.gmra.mrb[0].mxu0 %v158
    %v242 = vpop.f32.mrb[0].mxu0
    %v243 = vadd.f32 %v81, %v242
    %v244 = vpop.f32.mrb[0].mxu0
    %v245 = vadd.f32 %v85, %v244
    %v246 = vpop.f32.mrb[0].mxu0
    %v247 = vadd.f32 %v81, %v246
    %v248 = vpop.f32.mrb[0].mxu0
    %v249 = vadd.f32 %v85, %v248
    %250 = vmatprep.mubr.bf16.mxu0 0
    %251 = vmatmul.mubr.bf16.gmra.mrb[0].mxu0 %v161
    %v252 = vpop.f32.mrb[0].mxu0
    %v253 = vadd.f32 %v81, %v252
    %v254 = vpop.f32.mrb[0].mxu0
    %v255 = vadd.f32 %v85, %v254
    %v256 = vpop.f32.mrb[0].mxu0
    %v257 = vadd.f32 %v81, %v256
    %v258 = vpop.f32.mrb[0].mxu0
    %v259 = vadd.f32 %v85, %v258
    %260 = vdwg.mxu0
    %261 = vmatprep.subr.bf16.mxu0 %v174
    %262 = vmatpush1.bf16.msra.mxu0 %v171
    %263 = vmatprep.subr.bf16.mxu0 0
    %264 = vmatpush1.bf16.msra.mxu0 0
    %265 = vmatprep.subr.bf16.mxu0 0
    %266 = vmatpush1.bf16.msra.mxu0 0
    %267 = vmatprep.subr.bf16.mxu0 0
    %268 = vmatpush1.bf16.msra.mxu0 0
    %269 = vmatprep.subr.bf16.mxu0 0
    %270 = vmatpush1.bf16.msra.mxu0 0
    %271 = vmatprep.subr.bf16.mxu0 0
    %272 = vmatpush1.bf16.msra.mxu0 0
    %273 = vmatprep.subr.bf16.mxu0 0
    %274 = vmatpush1.bf16.msra.mxu0 0
    %275 = vmatprep.subr.bf16.mxu0 0
    %276 = vmatpush1.bf16.msra.mxu0 0
    %277 = vmatprep.subr.bf16.mxu0 0
    %278 = vmatpush1.bf16.msra.mxu0 0
    %279 = vmatprep.subr.bf16.mxu0 0
    %280 = vmatpush1.bf16.msra.mxu0 0
    %281 = vmatprep.subr.bf16.mxu0 0
    %282 = vmatpush1.bf16.msra.mxu0 0
    %283 = vmatprep.subr.bf16.mxu0 0
    %284 = vmatpush1.bf16.msra.mxu0 0
    %285 = vmatprep.subr.bf16.mxu0 0
    %286 = vmatpush1.bf16.msra.mxu0 0
    %287 = vmatprep.subr.bf16.mxu0 0
    %288 = vmatpush1.bf16.msra.mxu0 0
    %289 = vmatprep.subr.bf16.mxu0 0
    %290 = vmatpush1.bf16.msra.mxu0 0
    %291 = vmatprep.subr.bf16.mxu0 0
    %292 = vmatpush1.bf16.msra.mxu0 0
    %293 = vmatprep.mubr.bf16.mxu0 0
    %294 = vmatmul.mubr.bf16.gmra.mrb[0].mxu0 %v152
    %v295 = vpop.f32.mrb[0].mxu0
    %v296 = vadd.f32 %v89, %v295
    %v297 = vpop.f32.mrb[0].mxu0
    %v298 = vadd.f32 %v93, %v297
    %v299 = vpop.f32.mrb[0].mxu0
    %v300 = vadd.f32 %v89, %v299
    %v301 = vpop.f32.mrb[0].mxu0
    %v302 = vadd.f32 %v93, %v301
    %303 = vmatprep.mubr.bf16.mxu0 0
    %304 = vmatmul.mubr.bf16.gmra.mrb[0].mxu0 %v155
    %v305 = vpop.f32.mrb[0].mxu0
    %v306 = vadd.f32 %v89, %v305
    %v307 = vpop.f32.mrb[0].mxu0
    %v308 = vadd.f32 %v93, %v307
    %v309 = vpop.f32.mrb[0].mxu0
    %v310 = vadd.f32 %v89, %v309
    %v311 = vpop.f32.mrb[0].mxu0
    %v312 = vadd.f32 %v93, %v311
    %313 = vmatprep.mubr.bf16.mxu0 0
    %314 = vmatmul.mubr.bf16.gmra.mrb[0].mxu0 %v158
    %v315 = vpop.f32.mrb[0].mxu0
    %v316 = vadd.f32 %v89, %v315
    %v317 = vpop.f32.mrb[0].mxu0
    %v318 = vadd.f32 %v93, %v317
    %v319 = vpop.f32.mrb[0].mxu0
    %v320 = vadd.f32 %v89, %v319
    %v321 = vpop.f32.mrb[0].mxu0
    %v322 = vadd.f32 %v93, %v321
    %323 = vmatprep.mubr.bf16.mxu0 0
    %324 = vmatmul.mubr.bf16.gmra.mrb[0].mxu0 %v161
    %v325 = vpop.f32.mrb[0].mxu0
    %v326 = vadd.f32 %v89, %v325
    %v327 = vpop.f32.mrb[0].mxu0
    %v328 = vadd.f32 %v93, %v327
    %v329 = vpop.f32.mrb[0].mxu0
    %v330 = vadd.f32 %v89, %v329
    %v331 = vpop.f32.mrb[0].mxu0
    %v332 = vadd.f32 %v93, %v331
    %333 = vdwg.mxu0
    %334 = vmatprep.subr.bf16.mxu0 %v180
    %335 = vmatpush1.bf16.msra.mxu0 %v177
    %336 = vmatprep.subr.bf16.mxu0 0
    %337 = vmatpush1.bf16.msra.mxu0 0
    %338 = vmatprep.subr.bf16.mxu0 0
    %339 = vmatpush1.bf16.msra.mxu0 0
    %340 = vmatprep.subr.bf16.mxu0 0
    %341 = vmatpush1.bf16.msra.mxu0 0
    %342 = vmatprep.subr.bf16.mxu0 0
    %343 = vmatpush1.bf16.msra.mxu0 0
    %344 = vmatprep.subr.bf16.mxu0 0
    %345 = vmatpush1.bf16.msra.mxu0 0
    %346 = vmatprep.subr.bf16.mxu0 0
    %347 = vmatpush1.bf16.msra.mxu0 0
    %348 = vmatprep.subr.bf16.mxu0 0
    %349 = vmatpush1.bf16.msra.mxu0 0
    %350 = vmatprep.subr.bf16.mxu0 0
    %351 = vmatpush1.bf16.msra.mxu0 0
    %352 = vmatprep.subr.bf16.mxu0 0
    %353 = vmatpush1.bf16.msra.mxu0 0
    %354 = vmatprep.subr.bf16.mxu0 0
    %355 = vmatpush1.bf16.msra.mxu0 0
    %356 = vmatprep.subr.bf16.mxu0 0
    %357 = vmatpush1.bf16.msra.mxu0 0
    %358 = vmatprep.subr.bf16.mxu0 0
    %359 = vmatpush1.bf16.msra.mxu0 0
    %360 = vmatprep.subr.bf16.mxu0 0
    %361 = vmatpush1.bf16.msra.mxu0 0
    %362 = vmatprep.subr.bf16.mxu0 0
    %363 = vmatpush1.bf16.msra.mxu0 0
    %364 = vmatprep.subr.bf16.mxu0 0
    %365 = vmatpush1.bf16.msra.mxu0 0
    %366 = vmatprep.mubr.bf16.mxu0 0
    %367 = vmatmul.mubr.bf16.gmra.mrb[0].mxu0 %v152
    %v368 = vpop.f32.mrb[0].mxu0
    %v369 = vadd.f32 %v97, %v368
    %v370 = vpop.f32.mrb[0].mxu0
    %v371 = vadd.f32 %v101, %v370
    %v372 = vpop.f32.mrb[0].mxu0
    %v373 = vadd.f32 %v97, %v372
    %v374 = vpop.f32.mrb[0].mxu0
    %v375 = vadd.f32 %v101, %v374
    %376 = vmatprep.mubr.bf16.mxu0 0
    %377 = vmatmul.mubr.bf16.gmra.mrb[0].mxu0 %v155
    %v378 = vpop.f32.mrb[0].mxu0
    %v379 = vadd.f32 %v97, %v378
    %v380 = vpop.f32.mrb[0].mxu0
    %v381 = vadd.f32 %v101, %v380
    %v382 = vpop.f32.mrb[0].mxu0
    %v383 = vadd.f32 %v97, %v382
    %v384 = vpop.f32.mrb[0].mxu0
    %v385 = vadd.f32 %v101, %v384
    %386 = vmatprep.mubr.bf16.mxu0 0
    %387 = vmatmul.mubr.bf16.gmra.mrb[0].mxu0 %v158
    %v388 = vpop.f32.mrb[0].mxu0
    %v389 = vadd.f32 %v97, %v388
    %v390 = vpop.f32.mrb[0].mxu0
    %v391 = vadd.f32 %v101, %v390
    %v392 = vpop.f32.mrb[0].mxu0
    %v393 = vadd.f32 %v97, %v392
    %v394 = vpop.f32.mrb[0].mxu0
    %v395 = vadd.f32 %v101, %v394
    %396 = vmatprep.mubr.bf16.mxu0 0
    %397 = vmatmul.mubr.bf16.gmra.mrb[0].mxu0 %v161
    %v398 = vpop.f32.mrb[0].mxu0
    %v399 = vadd.f32 %v97, %v398
    %v400 = vpop.f32.mrb[0].mxu0
    %v401 = vadd.f32 %v101, %v400
    %v402 = vpop.f32.mrb[0].mxu0
    %v403 = vadd.f32 %v97, %v402
    %v404 = vpop.f32.mrb[0].mxu0
    %v405 = vadd.f32 %v101, %v404
    %406 = vdwg.mxu0
    %407 = vmatprep.subr.bf16.mxu0 %v186
    %408 = vmatpush1.bf16.msra.mxu0 %v183
    %409 = vmatprep.subr.bf16.mxu0 0
    %410 = vmatpush1.bf16.msra.mxu0 0
    %411 = vmatprep.subr.bf16.mxu0 0
    %412 = vmatpush1.bf16.msra.mxu0 0
    %413 = vmatprep.subr.bf16.mxu0 0
    %414 = vmatpush1.bf16.msra.mxu0 0
    %415 = vmatprep.subr.bf16.mxu0 0
    %416 = vmatpush1.bf16.msra.mxu0 0
    %417 = vmatprep.subr.bf16.mxu0 0
    %418 = vmatpush1.bf16.msra.mxu0 0
    %419 = vmatprep.subr.bf16.mxu0 0
    %420 = vmatpush1.bf16.msra.mxu0 0
    %421 = vmatprep.subr.bf16.mxu0 0
    %422 = vmatpush1.bf16.msra.mxu0 0
    %423 = vmatprep.subr.bf16.mxu0 0
    %424 = vmatpush1.bf16.msra.mxu0 0
    %425 = vmatprep.subr.bf16.mxu0 0
    %426 = vmatpush1.bf16.msra.mxu0 0
    %427 = vmatprep.subr.bf16.mxu0 0
    %428 = vmatpush1.bf16.msra.mxu0 0
    %429 = vmatprep.subr.bf16.mxu0 0
    %430 = vmatpush1.bf16.msra.mxu0 0
    %431 = vmatprep.subr.bf16.mxu0 0
    %432 = vmatpush1.bf16.msra.mxu0 0
    %433 = vmatprep.subr.bf16.mxu0 0
    %434 = vmatpush1.bf16.msra.mxu0 0
    %435 = vmatprep.subr.bf16.mxu0 0
    %436 = vmatpush1.bf16.msra.mxu0 0
    %437 = vmatprep.subr.bf16.mxu0 0
    %438 = vmatpush1.bf16.msra.mxu0 0
    %439 = vmatprep.mubr.bf16.mxu0 0
    %440 = vmatmul.mubr.bf16.gmra.mrb[0].mxu0 %v152
    %v441 = vpop.f32.mrb[0].mxu0
    %v442 = vadd.f32 %v105, %v441
    %v443 = vpop.f32.mrb[0].mxu0
    %v444 = vadd.f32 %v109, %v443
    %v445 = vpop.f32.mrb[0].mxu0
    %v446 = vadd.f32 %v105, %v445
    %v447 = vpop.f32.mrb[0].mxu0
    %v448 = vadd.f32 %v109, %v447
    %449 = vmatprep.mubr.bf16.mxu0 0
    %450 = vmatmul.mubr.bf16.gmra.mrb[0].mxu0 %v155
    %v451 = vpop.f32.mrb[0].mxu0
    %v452 = vadd.f32 %v105, %v451
    %v453 = vpop.f32.mrb[0].mxu0
    %v454 = vadd.f32 %v109, %v453
    %v455 = vpop.f32.mrb[0].mxu0
    %v456 = vadd.f32 %v105, %v455
    %v457 = vpop.f32.mrb[0].mxu0
    %v458 = vadd.f32 %v109, %v457
    %459 = vmatprep.mubr.bf16.mxu0 0
    %460 = vmatmul.mubr.bf16.gmra.mrb[0].mxu0 %v158
    %v461 = vpop.f32.mrb[0].mxu0
    %v462 = vadd.f32 %v105, %v461
    %v463 = vpop.f32.mrb[0].mxu0
    %v464 = vadd.f32 %v109, %v463
    %v465 = vpop.f32.mrb[0].mxu0
    %v466 = vadd.f32 %v105, %v465
    %v467 = vpop.f32.mrb[0].mxu0
    %v468 = vadd.f32 %v109, %v467
    %469 = vmatprep.mubr.bf16.mxu0 0
    %470 = vmatmul.mubr.bf16.gmra.mrb[0].mxu0 %v161
    %v471 = vpop.f32.mrb[0].mxu0
    %v472 = vadd.f32 %v105, %v471
    %v473 = vpop.f32.mrb[0].mxu0
    %v474 = vadd.f32 %v109, %v473
    %v475 = vpop.f32.mrb[0].mxu0
    %v476 = vadd.f32 %v105, %v475
    %v477 = vpop.f32.mrb[0].mxu0
    %v478 = vadd.f32 %v109, %v477
    %479 = vdwg.mxu0
    %v480 = vmax.f32 %v223, 0.0
    %v481 = vmax.f32 %v225, 0.0
    %v482 = vmax.f32 %v296, 0.0
    %v483 = vmax.f32 %v298, 0.0
    %v484 = vmax.f32 %v369, 0.0
    %v485 = vmax.f32 %v371, 0.0
    %v486 = vmax.f32 %v442, 0.0
    %v487 = vmax.f32 %v444, 0.0
    %v488 = vmax.f32 %v227, 0.0
    %v489 = vmax.f32 %v229, 0.0
    %v490 = vmax.f32 %v300, 0.0
    %v491 = vmax.f32 %v302, 0.0
    %v492 = vmax.f32 %v373, 0.0
    %v493 = vmax.f32 %v375, 0.0
    %v494 = vmax.f32 %v446, 0.0
    %v495 = vmax.f32 %v448, 0.0
    %v496 = vmax.f32 %v233, 0.0
    %v497 = vmax.f32 %v235, 0.0
    %v498 = vmax.f32 %v306, 0.0
    %v499 = vmax.f32 %v308, 0.0
    %v500 = vmax.f32 %v379, 0.0
    %v501 = vmax.f32 %v381, 0.0
    %v502 = vmax.f32 %v452, 0.0
    %v503 = vmax.f32 %v454, 0.0
    %v504 = vmax.f32 %v237, 0.0
    %v505 = vmax.f32 %v239, 0.0
    %v506 = vmax.f32 %v310, 0.0
    %v507 = vmax.f32 %v312, 0.0
    %v508 = vmax.f32 %v383, 0.0
    %v509 = vmax.f32 %v385, 0.0
    %v510 = vmax.f32 %v456, 0.0
    %v511 = vmax.f32 %v458, 0.0
    %v512 = vmax.f32 %v243, 0.0
    %v513 = vmax.f32 %v245, 0.0
    %v514 = vmax.f32 %v316, 0.0
    %v515 = vmax.f32 %v318, 0.0
    %v516 = vmax.f32 %v389, 0.0
    %v517 = vmax.f32 %v391, 0.0
    %v518 = vmax.f32 %v462, 0.0
    %v519 = vmax.f32 %v464, 0.0
    %v520 = vmax.f32 %v247, 0.0
    %v521 = vmax.f32 %v249, 0.0
    %v522 = vmax.f32 %v320, 0.0
    %v523 = vmax.f32 %v322, 0.0
    %v524 = vmax.f32 %v393, 0.0
    %v525 = vmax.f32 %v395, 0.0
    %v526 = vmax.f32 %v466, 0.0
    %v527 = vmax.f32 %v468, 0.0
    %v528 = vmax.f32 %v253, 0.0
    %v529 = vmax.f32 %v255, 0.0
    %v530 = vmax.f32 %v326, 0.0
    %v531 = vmax.f32 %v328, 0.0
    %v532 = vmax.f32 %v399, 0.0
    %v533 = vmax.f32 %v401, 0.0
    %v534 = vmax.f32 %v472, 0.0
    %v535 = vmax.f32 %v474, 0.0
    %v536 = vmax.f32 %v257, 0.0
    %v537 = vmax.f32 %v259, 0.0
    %v538 = vmax.f32 %v330, 0.0
    %v539 = vmax.f32 %v332, 0.0
    %v540 = vmax.f32 %v403, 0.0
    %v541 = vmax.f32 %v405, 0.0
    %v542 = vmax.f32 %v476, 0.0
    %v543 = vmax.f32 %v478, 0.0
    %v544 = vpack.c.bf16 %v488, %v480
    %v545 = vpack.c.bf16 %v489, %v481
    %v546 = vpack.c.bf16 %v490, %v482
    %v547 = vpack.c.bf16 %v491, %v483
    %v548 = vpack.c.bf16 %v492, %v484
    %v549 = vpack.c.bf16 %v493, %v485
    %v550 = vpack.c.bf16 %v494, %v486
    %v551 = vpack.c.bf16 %v495, %v487
    %v552 = vpack.c.bf16 %v504, %v496
    %v553 = vpack.c.bf16 %v505, %v497
    %v554 = vpack.c.bf16 %v506, %v498
    %v555 = vpack.c.bf16 %v507, %v499
    %v556 = vpack.c.bf16 %v508, %v500
    %v557 = vpack.c.bf16 %v509, %v501
    %v558 = vpack.c.bf16 %v510, %v502
    %v559 = vpack.c.bf16 %v511, %v503
    %v560 = vpack.c.bf16 %v520, %v512
    %v561 = vpack.c.bf16 %v521, %v513
    %v562 = vpack.c.bf16 %v522, %v514
    %v563 = vpack.c.bf16 %v523, %v515
    %v564 = vpack.c.bf16 %v524, %v516
    %v565 = vpack.c.bf16 %v525, %v517
    %v566 = vpack.c.bf16 %v526, %v518
    %v567 = vpack.c.bf16 %v527, %v519
    %v568 = vpack.c.bf16 %v536, %v528
    %v569 = vpack.c.bf16 %v537, %v529
    %v570 = vpack.c.bf16 %v538, %v530
    %v571 = vpack.c.bf16 %v539, %v531
    %v572 = vpack.c.bf16 %v540, %v532
    %v573 = vpack.c.bf16 %v541, %v533
    %v574 = vpack.c.bf16 %v542, %v534
    %v575 = vpack.c.bf16 %v543, %v535
    %v576 = vld [vmem:[#allocation2] sm:$0xff]
    %v577 = vld [vmem:[#allocation2 + $0x8] sm:$0xff]
    %v578 = vld [vmem:[#allocation2 + $0x10] sm:$0xff]
    %v579 = vld [vmem:[#allocation2 + $0x18] sm:$0xff]
    %v580 = vld [vmem:[#allocation2 + $0x20] sm:$0xff]
    %v581 = vld [vmem:[#allocation2 + $0x28] sm:$0xff]
    %v582 = vld [vmem:[#allocation2 + $0x30] sm:$0xff]
    %v583 = vld [vmem:[#allocation2 + $0x38] sm:$0xff]
    %v584 = vld [vmem:[#allocation2 + $0x40] sm:$0xff]
    %v585 = vld [vmem:[#allocation2 + $0x48] sm:$0xff]
    %v586 = vld [vmem:[#allocation2 + $0x50] sm:$0xff]
    %v587 = vld [vmem:[#allocation2 + $0x58] sm:$0xff]
    %v588 = vld [vmem:[#allocation2 + $0x60] sm:$0xff]
    %v589 = vld [vmem:[#allocation2 + $0x68] sm:$0xff]
    %v590 = vld [vmem:[#allocation2 + $0x70] sm:$0xff]
    %v591 = vld [vmem:[#allocation2 + $0x78] sm:$0xff]
    %v592 = vld [vmem:[#allocation2 + $0x80] sm:$0xff]
    %v593 = vld [vmem:[#allocation2 + $0x88] sm:$0xff]
    %v594 = vld [vmem:[#allocation2 + $0x90] sm:$0xff]
    %v595 = vld [vmem:[#allocation2 + $0x98] sm:$0xff]
    %v596 = vld [vmem:[#allocation2 + $0xa0] sm:$0xff]
    %v597 = vld [vmem:[#allocation2 + $0xa8] sm:$0xff]
    %v598 = vld [vmem:[#allocation2 + $0xb0] sm:$0xff]
    %v599 = vld [vmem:[#allocation2 + $0xb8] sm:$0xff]
    %v600 = vld [vmem:[#allocation2 + $0xc0] sm:$0xff]
    %v601 = vld [vmem:[#allocation2 + $0xc8] sm:$0xff]
    %v602 = vld [vmem:[#allocation2 + $0xd0] sm:$0xff]
    %v603 = vld [vmem:[#allocation2 + $0xd8] sm:$0xff]
    %v604 = vld [vmem:[#allocation2 + $0xe0] sm:$0xff]
    %v605 = vld [vmem:[#allocation2 + $0xe8] sm:$0xff]
    %v606 = vld [vmem:[#allocation2 + $0xf0] sm:$0xff]
    %v607 = vld [vmem:[#allocation2 + $0xf8] sm:$0xff]
    %v608 = vld [vmem:[#allocation2 + $0x100] sm:$0xff]
    %v609 = vld [vmem:[#allocation2 + $0x108] sm:$0xff]
    %v610 = vld [vmem:[#allocation2 + $0x110] sm:$0xff]
    %v611 = vld [vmem:[#allocation2 + $0x118] sm:$0xff]
    %v612 = vld [vmem:[#allocation2 + $0x120] sm:$0xff]
    %v613 = vld [vmem:[#allocation2 + $0x128] sm:$0xff]
    %v614 = vld [vmem:[#allocation2 + $0x130] sm:$0xff]
    %v615 = vld [vmem:[#allocation2 + $0x138] sm:$0xff]
    %v616 = vld [vmem:[#allocation2 + $0x140] sm:$0xff]
    %v617 = vld [vmem:[#allocation2 + $0x148] sm:$0xff]
    %v618 = vld [vmem:[#allocation2 + $0x150] sm:$0xff]
    %v619 = vld [vmem:[#allocation2 + $0x158] sm:$0xff]
    %v620 = vld [vmem:[#allocation2 + $0x160] sm:$0xff]
    %v621 = vld [vmem:[#allocation2 + $0x168] sm:$0xff]
    %v622 = vld [vmem:[#allocation2 + $0x170] sm:$0xff]
    %v623 = vld [vmem:[#allocation2 + $0x178] sm:$0xff]
    %v624 = vld [vmem:[#allocation2 + $0x180] sm:$0xff]
    %v625 = vld [vmem:[#allocation2 + $0x188] sm:$0xff]
    %v626 = vld [vmem:[#allocation2 + $0x190] sm:$0xff]
    %v627 = vld [vmem:[#allocation2 + $0x198] sm:$0xff]
    %v628 = vld [vmem:[#allocation2 + $0x1a0] sm:$0xff]
    %v629 = vld [vmem:[#allocation2 + $0x1a8] sm:$0xff]
    %v630 = vld [vmem:[#allocation2 + $0x1b0] sm:$0xff]
    %v631 = vld [vmem:[#allocation2 + $0x1b8] sm:$0xff]
    %v632 = vld [vmem:[#allocation2 + $0x1c0] sm:$0xff]
    %v633 = vld [vmem:[#allocation2 + $0x1c8] sm:$0xff]
    %v634 = vld [vmem:[#allocation2 + $0x1d0] sm:$0xff]
    %v635 = vld [vmem:[#allocation2 + $0x1d8] sm:$0xff]
    %v636 = vld [vmem:[#allocation2 + $0x1e0] sm:$0xff]
    %v637 = vld [vmem:[#allocation2 + $0x1e8] sm:$0xff]
    %v638 = vld [vmem:[#allocation2 + $0x1f0] sm:$0xff]
    %v639 = vld [vmem:[#allocation2 + $0x1f8] sm:$0xff]
    %v640 = vld [vmem:[#allocation2 + $0x200] sm:$0xff]
    %v641 = vld [vmem:[#allocation2 + $0x208] sm:$0xff]
    %v642 = vld [vmem:[#allocation2 + $0x210] sm:$0xff]
    %v643 = vld [vmem:[#allocation2 + $0x218] sm:$0xff]
    %v644 = vld [vmem:[#allocation2 + $0x220] sm:$0xff]
    %v645 = vld [vmem:[#allocation2 + $0x228] sm:$0xff]
    %v646 = vld [vmem:[#allocation2 + $0x230] sm:$0xff]
    %v647 = vld [vmem:[#allocation2 + $0x238] sm:$0xff]
    %v648 = vld [vmem:[#allocation2 + $0x240] sm:$0xff]
    %v649 = vld [vmem:[#allocation2 + $0x248] sm:$0xff]
    %v650 = vld [vmem:[#allocation2 + $0x250] sm:$0xff]
    %v651 = vld [vmem:[#allocation2 + $0x258] sm:$0xff]
    %v652 = vld [vmem:[#allocation2 + $0x260] sm:$0xff]
    %v653 = vld [vmem:[#allocation2 + $0x268] sm:$0xff]
    %v654 = vld [vmem:[#allocation2 + $0x270] sm:$0xff]
    %v655 = vld [vmem:[#allocation2 + $0x278] sm:$0xff]
    %v656 = vld [vmem:[#allocation2 + $0x280] sm:$0xff]
    %v657 = vld [vmem:[#allocation2 + $0x288] sm:$0xff]
    %v658 = vld [vmem:[#allocation2 + $0x290] sm:$0xff]
    %v659 = vld [vmem:[#allocation2 + $0x298] sm:$0xff]
    %v660 = vld [vmem:[#allocation2 + $0x2a0] sm:$0xff]
    %v661 = vld [vmem:[#allocation2 + $0x2a8] sm:$0xff]
    %v662 = vld [vmem:[#allocation2 + $0x2b0] sm:$0xff]
    %v663 = vld [vmem:[#allocation2 + $0x2b8] sm:$0xff]
    %v664 = vld [vmem:[#allocation2 + $0x2c0] sm:$0xff]
    %v665 = vld [vmem:[#allocation2 + $0x2c8] sm:$0xff]
    %v666 = vld [vmem:[#allocation2 + $0x2d0] sm:$0xff]
    %v667 = vld [vmem:[#allocation2 + $0x2d8] sm:$0xff]
    %v668 = vld [vmem:[#allocation2 + $0x2e0] sm:$0xff]
    %v669 = vld [vmem:[#allocation2 + $0x2e8] sm:$0xff]
    %v670 = vld [vmem:[#allocation2 + $0x2f0] sm:$0xff]
    %v671 = vld [vmem:[#allocation2 + $0x2f8] sm:$0xff]
    %v672 = vld [vmem:[#allocation2 + $0x300] sm:$0xff]
    %v673 = vld [vmem:[#allocation2 + $0x308] sm:$0xff]
    %v674 = vld [vmem:[#allocation2 + $0x310] sm:$0xff]
    %v675 = vld [vmem:[#allocation2 + $0x318] sm:$0xff]
    %v676 = vld [vmem:[#allocation2 + $0x320] sm:$0xff]
    %v677 = vld [vmem:[#allocation2 + $0x328] sm:$0xff]
    %v678 = vld [vmem:[#allocation2 + $0x330] sm:$0xff]
    %v679 = vld [vmem:[#allocation2 + $0x338] sm:$0xff]
    %v680 = vld [vmem:[#allocation2 + $0x340] sm:$0xff]
    %v681 = vld [vmem:[#allocation2 + $0x348] sm:$0xff]
    %v682 = vld [vmem:[#allocation2 + $0x350] sm:$0xff]
    %v683 = vld [vmem:[#allocation2 + $0x358] sm:$0xff]
    %v684 = vld [vmem:[#allocation2 + $0x360] sm:$0xff]
    %v685 = vld [vmem:[#allocation2 + $0x368] sm:$0xff]
    %v686 = vld [vmem:[#allocation2 + $0x370] sm:$0xff]
    %v687 = vld [vmem:[#allocation2 + $0x378] sm:$0xff]
    %v688 = vld [vmem:[#allocation2 + $0x380] sm:$0xff]
    %v689 = vld [vmem:[#allocation2 + $0x388] sm:$0xff]
    %v690 = vld [vmem:[#allocation2 + $0x390] sm:$0xff]
    %v691 = vld [vmem:[#allocation2 + $0x398] sm:$0xff]
    %v692 = vld [vmem:[#allocation2 + $0x3a0] sm:$0xff]
    %v693 = vld [vmem:[#allocation2 + $0x3a8] sm:$0xff]
    %v694 = vld [vmem:[#allocation2 + $0x3b0] sm:$0xff]
    %v695 = vld [vmem:[#allocation2 + $0x3b8] sm:$0xff]
    %v696 = vld [vmem:[#allocation2 + $0x3c0] sm:$0xff]
    %v697 = vld [vmem:[#allocation2 + $0x3c8] sm:$0xff]
    %v698 = vld [vmem:[#allocation2 + $0x3d0] sm:$0xff]
    %v699 = vld [vmem:[#allocation2 + $0x3d8] sm:$0xff]
    %v700 = vld [vmem:[#allocation2 + $0x3e0] sm:$0xff]
    %v701 = vld [vmem:[#allocation2 + $0x3e8] sm:$0xff]
    %v702 = vld [vmem:[#allocation2 + $0x3f0] sm:$0xff]
    %v703 = vld [vmem:[#allocation2 + $0x3f8] sm:$0xff]
    %v704 = vld [vmem:[#allocation2 + $0x400] sm:$0xff]
    %v705 = vld [vmem:[#allocation2 + $0x408] sm:$0xff]
    %v706 = vld [vmem:[#allocation2 + $0x410] sm:$0xff]
    %v707 = vld [vmem:[#allocation2 + $0x418] sm:$0xff]
    %v708 = vld [vmem:[#allocation2 + $0x420] sm:$0xff]
    %v709 = vld [vmem:[#allocation2 + $0x428] sm:$0xff]
    %v710 = vld [vmem:[#allocation2 + $0x430] sm:$0xff]
    %v711 = vld [vmem:[#allocation2 + $0x438] sm:$0xff]
    %v712 = vld [vmem:[#allocation2 + $0x440] sm:$0xff]
    %v713 = vld [vmem:[#allocation2 + $0x448] sm:$0xff]
    %v714 = vld [vmem:[#allocation2 + $0x450] sm:$0xff]
    %v715 = vld [vmem:[#allocation2 + $0x458] sm:$0xff]
    %v716 = vld [vmem:[#allocation2 + $0x460] sm:$0xff]
    %v717 = vld [vmem:[#allocation2 + $0x468] sm:$0xff]
    %v718 = vld [vmem:[#allocation2 + $0x470] sm:$0xff]
    %v719 = vld [vmem:[#allocation2 + $0x478] sm:$0xff]
    %v720 = vld [vmem:[#allocation2 + $0x480] sm:$0xff]
    %v721 = vld [vmem:[#allocation2 + $0x488] sm:$0xff]
    %v722 = vld [vmem:[#allocation2 + $0x490] sm:$0xff]
    %v723 = vld [vmem:[#allocation2 + $0x498] sm:$0xff]
    %v724 = vld [vmem:[#allocation2 + $0x4a0] sm:$0xff]
    %v725 = vld [vmem:[#allocation2 + $0x4a8] sm:$0xff]
    %v726 = vld [vmem:[#allocation2 + $0x4b0] sm:$0xff]
    %v727 = vld [vmem:[#allocation2 + $0x4b8] sm:$0xff]
    %v728 = vld [vmem:[#allocation2 + $0x4c0] sm:$0xff]
    %v729 = vld [vmem:[#allocation2 + $0x4c8] sm:$0xff]
    %v730 = vld [vmem:[#allocation2 + $0x4d0] sm:$0xff]
    %v731 = vld [vmem:[#allocation2 + $0x4d8] sm:$0xff]
    %v732 = vld [vmem:[#allocation2 + $0x4e0] sm:$0xff]
    %v733 = vld [vmem:[#allocation2 + $0x4e8] sm:$0xff]
    %v734 = vld [vmem:[#allocation2 + $0x4f0] sm:$0xff]
    %v735 = vld [vmem:[#allocation2 + $0x4f8] sm:$0xff]
    %v736 = vld [vmem:[#allocation2 + $0x500] sm:$0xff]
    %v737 = vld [vmem:[#allocation2 + $0x508] sm:$0xff]
    %v738 = vld [vmem:[#allocation2 + $0x510] sm:$0xff]
    %v739 = vld [vmem:[#allocation2 + $0x518] sm:$0xff]
    %v740 = vld [vmem:[#allocation2 + $0x520] sm:$0xff]
    %v741 = vld [vmem:[#allocation2 + $0x528] sm:$0xff]
    %v742 = vld [vmem:[#allocation2 + $0x530] sm:$0xff]
    %v743 = vld [vmem:[#allocation2 + $0x538] sm:$0xff]
    %v744 = vld [vmem:[#allocation2 + $0x540] sm:$0xff]
    %v745 = vld [vmem:[#allocation2 + $0x548] sm:$0xff]
    %v746 = vld [vmem:[#allocation2 + $0x550] sm:$0xff]
    %v747 = vld [vmem:[#allocation2 + $0x558] sm:$0xff]
    %v748 = vld [vmem:[#allocation2 + $0x560] sm:$0xff]
    %v749 = vld [vmem:[#allocation2 + $0x568] sm:$0xff]
    %v750 = vld [vmem:[#allocation2 + $0x570] sm:$0xff]
    %v751 = vld [vmem:[#allocation2 + $0x578] sm:$0xff]
    %v752 = vld [vmem:[#allocation2 + $0x580] sm:$0xff]
    %v753 = vld [vmem:[#allocation2 + $0x588] sm:$0xff]
    %v754 = vld [vmem:[#allocation2 + $0x590] sm:$0xff]
    %v755 = vld [vmem:[#allocation2 + $0x598] sm:$0xff]
    %v756 = vld [vmem:[#allocation2 + $0x5a0] sm:$0xff]
    %v757 = vld [vmem:[#allocation2 + $0x5a8] sm:$0xff]
    %v758 = vld [vmem:[#allocation2 + $0x5b0] sm:$0xff]
    %v759 = vld [vmem:[#allocation2 + $0x5b8] sm:$0xff]
    %v760 = vld [vmem:[#allocation2 + $0x5c0] sm:$0xff]
    %v761 = vld [vmem:[#allocation2 + $0x5c8] sm:$0xff]
    %v762 = vld [vmem:[#allocation2 + $0x5d0] sm:$0xff]
    %v763 = vld [vmem:[#allocation2 + $0x5d8] sm:$0xff]
    %v764 = vld [vmem:[#allocation2 + $0x5e0] sm:$0xff]
    %v765 = vld [vmem:[#allocation2 + $0x5e8] sm:$0xff]
    %v766 = vld [vmem:[#allocation2 + $0x5f0] sm:$0xff]
    %v767 = vld [vmem:[#allocation2 + $0x5f8] sm:$0xff]
    %v768 = vld [vmem:[#allocation2 + $0x600] sm:$0xff]
    %v769 = vld [vmem:[#allocation2 + $0x608] sm:$0xff]
    %v770 = vld [vmem:[#allocation2 + $0x610] sm:$0xff]
    %v771 = vld [vmem:[#allocation2 + $0x618] sm:$0xff]
    %v772 = vld [vmem:[#allocation2 + $0x620] sm:$0xff]
    %v773 = vld [vmem:[#allocation2 + $0x628] sm:$0xff]
    %v774 = vld [vmem:[#allocation2 + $0x630] sm:$0xff]
    %v775 = vld [vmem:[#allocation2 + $0x638] sm:$0xff]
    %v776 = vld [vmem:[#allocation2 + $0x640] sm:$0xff]
    %v777 = vld [vmem:[#allocation2 + $0x648] sm:$0xff]
    %v778 = vld [vmem:[#allocation2 + $0x650] sm:$0xff]
    %v779 = vld [vmem:[#allocation2 + $0x658] sm:$0xff]
    %v780 = vld [vmem:[#allocation2 + $0x660] sm:$0xff]
    %v781 = vld [vmem:[#allocation2 + $0x668] sm:$0xff]
    %v782 = vld [vmem:[#allocation2 + $0x670] sm:$0xff]
    %v783 = vld [vmem:[#allocation2 + $0x678] sm:$0xff]
    %v784 = vld [vmem:[#allocation2 + $0x680] sm:$0xff]
    %v785 = vld [vmem:[#allocation2 + $0x688] sm:$0xff]
    %v786 = vld [vmem:[#allocation2 + $0x690] sm:$0xff]
    %v787 = vld [vmem:[#allocation2 + $0x698] sm:$0xff]
    %v788 = vld [vmem:[#allocation2 + $0x6a0] sm:$0xff]
    %v789 = vld [vmem:[#allocation2 + $0x6a8] sm:$0xff]
    %v790 = vld [vmem:[#allocation2 + $0x6b0] sm:$0xff]
    %v791 = vld [vmem:[#allocation2 + $0x6b8] sm:$0xff]
    %v792 = vld [vmem:[#allocation2 + $0x6c0] sm:$0xff]
    %v793 = vld [vmem:[#allocation2 + $0x6c8] sm:$0xff]
    %v794 = vld [vmem:[#allocation2 + $0x6d0] sm:$0xff]
    %v795 = vld [vmem:[#allocation2 + $0x6d8] sm:$0xff]
    %v796 = vld [vmem:[#allocation2 + $0x6e0] sm:$0xff]
    %v797 = vld [vmem:[#allocation2 + $0x6e8] sm:$0xff]
    %v798 = vld [vmem:[#allocation2 + $0x6f0] sm:$0xff]
    %v799 = vld [vmem:[#allocation2 + $0x6f8] sm:$0xff]
    %v800 = vld [vmem:[#allocation2 + $0x700] sm:$0xff]
    %v801 = vld [vmem:[#allocation2 + $0x708] sm:$0xff]
    %v802 = vld [vmem:[#allocation2 + $0x710] sm:$0xff]
    %v803 = vld [vmem:[#allocation2 + $0x718] sm:$0xff]
    %v804 = vld [vmem:[#allocation2 + $0x720] sm:$0xff]
    %v805 = vld [vmem:[#allocation2 + $0x728] sm:$0xff]
    %v806 = vld [vmem:[#allocation2 + $0x730] sm:$0xff]
    %v807 = vld [vmem:[#allocation2 + $0x738] sm:$0xff]
    %v808 = vld [vmem:[#allocation2 + $0x740] sm:$0xff]
    %v809 = vld [vmem:[#allocation2 + $0x748] sm:$0xff]
    %v810 = vld [vmem:[#allocation2 + $0x750] sm:$0xff]
    %v811 = vld [vmem:[#allocation2 + $0x758] sm:$0xff]
    %v812 = vld [vmem:[#allocation2 + $0x760] sm:$0xff]
    %v813 = vld [vmem:[#allocation2 + $0x768] sm:$0xff]
    %v814 = vld [vmem:[#allocation2 + $0x770] sm:$0xff]
    %v815 = vld [vmem:[#allocation2 + $0x778] sm:$0xff]
    %v816 = vld [vmem:[#allocation2 + $0x780] sm:$0xff]
    %v817 = vld [vmem:[#allocation2 + $0x788] sm:$0xff]
    %v818 = vld [vmem:[#allocation2 + $0x790] sm:$0xff]
    %v819 = vld [vmem:[#allocation2 + $0x798] sm:$0xff]
    %v820 = vld [vmem:[#allocation2 + $0x7a0] sm:$0xff]
    %v821 = vld [vmem:[#allocation2 + $0x7a8] sm:$0xff]
    %v822 = vld [vmem:[#allocation2 + $0x7b0] sm:$0xff]
    %v823 = vld [vmem:[#allocation2 + $0x7b8] sm:$0xff]
    %v824 = vld [vmem:[#allocation2 + $0x7c0] sm:$0xff]
    %v825 = vld [vmem:[#allocation2 + $0x7c8] sm:$0xff]
    %v826 = vld [vmem:[#allocation2 + $0x7d0] sm:$0xff]
    %v827 = vld [vmem:[#allocation2 + $0x7d8] sm:$0xff]
    %v828 = vld [vmem:[#allocation2 + $0x7e0] sm:$0xff]
    %v829 = vld [vmem:[#allocation2 + $0x7e8] sm:$0xff]
    %v830 = vld [vmem:[#allocation2 + $0x7f0] sm:$0xff]
    %v831 = vld [vmem:[#allocation2 + $0x7f8] sm:$0xff]
    %v832 = vld [vmem:[%s11 + $0x8] sm:$0xf]
    %v834 = vlaneseq
    %v835 = vshrl.u32 %v834, 7
    %v836 = vsub.s32 0, %v835
    %v837 = vrot.slane %v832, %v836
    %v838 = vlaneseq
    %v839 = vshrl.u32 %v838, 7
    %v840 = vsub.s32 1, %v839
    %v841 = vrot.slane %v832, %v840
    %v842 = vlaneseq
    %v843 = vshrl.u32 %v842, 7
    %v844 = vsub.s32 2, %v843
    %v845 = vrot.slane %v832, %v844
    %v846 = vlaneseq
    %v847 = vshrl.u32 %v846, 7
    %v848 = vsub.s32 3, %v847
    %v849 = vrot.slane %v832, %v848
    %v1110 = vunpack.c.l.b16 %v576
    %v1111 = vunpack.c.h.b16 %v576
    %v1112 = vunpack.c.l.b16 %v577
    %v1113 = vunpack.c.h.b16 %v577
    %v1114 = vunpack.c.l.b16 %v578
    %v1115 = vunpack.c.h.b16 %v578
    %v1116 = vunpack.c.l.b16 %v579
    %v1117 = vunpack.c.h.b16 %v579
    %v1118 = vunpack.c.l.b16 %v580
    %v1119 = vunpack.c.h.b16 %v580
    %v1120 = vunpack.c.l.b16 %v581
    %v1121 = vunpack.c.h.b16 %v581
    %v1122 = vunpack.c.l.b16 %v582
    %v1123 = vunpack.c.h.b16 %v582
    %v1124 = vunpack.c.l.b16 %v583
    %v1125 = vunpack.c.h.b16 %v583
    %v1126 = vunpack.c.l.b16 %v584
    %v1127 = vunpack.c.h.b16 %v584
    %v1128 = vunpack.c.l.b16 %v585
    %v1129 = vunpack.c.h.b16 %v585
    %v1130 = vunpack.c.l.b16 %v586
    %v1131 = vunpack.c.h.b16 %v586
    %v1132 = vunpack.c.l.b16 %v587
    %v1133 = vunpack.c.h.b16 %v587
    %v1134 = vunpack.c.l.b16 %v588
    %v1135 = vunpack.c.h.b16 %v588
    %v1136 = vunpack.c.l.b16 %v589
    %v1137 = vunpack.c.h.b16 %v589
    %v1138 = vunpack.c.l.b16 %v590
    %v1139 = vunpack.c.h.b16 %v590
    %v1140 = vunpack.c.l.b16 %v591
    %v1141 = vunpack.c.h.b16 %v591
    %v1142 = vunpack.c.l.b16 %v592
    %v1143 = vunpack.c.h.b16 %v592
    %v1144 = vunpack.c.l.b16 %v593
    %v1145 = vunpack.c.h.b16 %v593
    %v1146 = vunpack.c.l.b16 %v594
    %v1147 = vunpack.c.h.b16 %v594
    %v1148 = vunpack.c.l.b16 %v595
    %v1149 = vunpack.c.h.b16 %v595
    %v1150 = vunpack.c.l.b16 %v596
    %v1151 = vunpack.c.h.b16 %v596
    %v1152 = vunpack.c.l.b16 %v597
    %v1153 = vunpack.c.h.b16 %v597
    %v1154 = vunpack.c.l.b16 %v598
    %v1155 = vunpack.c.h.b16 %v598
    %v1156 = vunpack.c.l.b16 %v599
    %v1157 = vunpack.c.h.b16 %v599
    %v1158 = vunpack.c.l.b16 %v600
    %v1159 = vunpack.c.h.b16 %v600
    %v1160 = vunpack.c.l.b16 %v601
    %v1161 = vunpack.c.h.b16 %v601
    %v1162 = vunpack.c.l.b16 %v602
    %v1163 = vunpack.c.h.b16 %v602
    %v1164 = vunpack.c.l.b16 %v603
    %v1165 = vunpack.c.h.b16 %v603
    %v1166 = vunpack.c.l.b16 %v604
    %v1167 = vunpack.c.h.b16 %v604
    %v1168 = vunpack.c.l.b16 %v605
    %v1169 = vunpack.c.h.b16 %v605
    %v1170 = vunpack.c.l.b16 %v606
    %v1171 = vunpack.c.h.b16 %v606
    %v1172 = vunpack.c.l.b16 %v607
    %v1173 = vunpack.c.h.b16 %v607
    %v1174 = vunpack.c.l.b16 %v608
    %v1175 = vunpack.c.h.b16 %v608
    %v1176 = vunpack.c.l.b16 %v609
    %v1177 = vunpack.c.h.b16 %v609
    %v1178 = vunpack.c.l.b16 %v610
    %v1179 = vunpack.c.h.b16 %v610
    %v1180 = vunpack.c.l.b16 %v611
    %v1181 = vunpack.c.h.b16 %v611
    %v1182 = vunpack.c.l.b16 %v612
    %v1183 = vunpack.c.h.b16 %v612
    %v1184 = vunpack.c.l.b16 %v613
    %v1185 = vunpack.c.h.b16 %v613
    %v1186 = vunpack.c.l.b16 %v614
    %v1187 = vunpack.c.h.b16 %v614
    %v1188 = vunpack.c.l.b16 %v615
    %v1189 = vunpack.c.h.b16 %v615
    %v1190 = vunpack.c.l.b16 %v616
    %v1191 = vunpack.c.h.b16 %v616
    %v1192 = vunpack.c.l.b16 %v617
    %v1193 = vunpack.c.h.b16 %v617
    %v1194 = vunpack.c.l.b16 %v618
    %v1195 = vunpack.c.h.b16 %v618
    %v1196 = vunpack.c.l.b16 %v619
    %v1197 = vunpack.c.h.b16 %v619
    %v1198 = vunpack.c.l.b16 %v620
    %v1199 = vunpack.c.h.b16 %v620
    %v1200 = vunpack.c.l.b16 %v621
    %v1201 = vunpack.c.h.b16 %v621
    %v1202 = vunpack.c.l.b16 %v622
    %v1203 = vunpack.c.h.b16 %v622
    %v1204 = vunpack.c.l.b16 %v623
    %v1205 = vunpack.c.h.b16 %v623
    %v1206 = vunpack.c.l.b16 %v624
    %v1207 = vunpack.c.h.b16 %v624
    %v1208 = vunpack.c.l.b16 %v625
    %v1209 = vunpack.c.h.b16 %v625
    %v1210 = vunpack.c.l.b16 %v626
    %v1211 = vunpack.c.h.b16 %v626
    %v1212 = vunpack.c.l.b16 %v627
    %v1213 = vunpack.c.h.b16 %v627
    %v1214 = vunpack.c.l.b16 %v628
    %v1215 = vunpack.c.h.b16 %v628
    %v1216 = vunpack.c.l.b16 %v629
    %v1217 = vunpack.c.h.b16 %v629
    %v1218 = vunpack.c.l.b16 %v630
    %v1219 = vunpack.c.h.b16 %v630
    %v1220 = vunpack.c.l.b16 %v631
    %v1221 = vunpack.c.h.b16 %v631
    %v1222 = vunpack.c.l.b16 %v632
    %v1223 = vunpack.c.h.b16 %v632
    %v1224 = vunpack.c.l.b16 %v633
    %v1225 = vunpack.c.h.b16 %v633
    %v1226 = vunpack.c.l.b16 %v634
    %v1227 = vunpack.c.h.b16 %v634
    %v1228 = vunpack.c.l.b16 %v635
    %v1229 = vunpack.c.h.b16 %v635
    %v1230 = vunpack.c.l.b16 %v636
    %v1231 = vunpack.c.h.b16 %v636
    %v1232 = vunpack.c.l.b16 %v637
    %v1233 = vunpack.c.h.b16 %v637
    %v1234 = vunpack.c.l.b16 %v638
    %v1235 = vunpack.c.h.b16 %v638
    %v1236 = vunpack.c.l.b16 %v639
    %v1237 = vunpack.c.h.b16 %v639
    %v1238 = vunpack.c.l.b16 %v640
    %v1239 = vunpack.c.h.b16 %v640
    %v1240 = vunpack.c.l.b16 %v641
    %v1241 = vunpack.c.h.b16 %v641
    %v1242 = vunpack.c.l.b16 %v642
    %v1243 = vunpack.c.h.b16 %v642
    %v1244 = vunpack.c.l.b16 %v643
    %v1245 = vunpack.c.h.b16 %v643
    %v1246 = vunpack.c.l.b16 %v644
    %v1247 = vunpack.c.h.b16 %v644
    %v1248 = vunpack.c.l.b16 %v645
    %v1249 = vunpack.c.h.b16 %v645
    %v1250 = vunpack.c.l.b16 %v646
    %v1251 = vunpack.c.h.b16 %v646
    %v1252 = vunpack.c.l.b16 %v647
    %v1253 = vunpack.c.h.b16 %v647
    %v1254 = vunpack.c.l.b16 %v648
    %v1255 = vunpack.c.h.b16 %v648
    %v1256 = vunpack.c.l.b16 %v649
    %v1257 = vunpack.c.h.b16 %v649
    %v1258 = vunpack.c.l.b16 %v650
    %v1259 = vunpack.c.h.b16 %v650
    %v1260 = vunpack.c.l.b16 %v651
    %v1261 = vunpack.c.h.b16 %v651
    %v1262 = vunpack.c.l.b16 %v652
    %v1263 = vunpack.c.h.b16 %v652
    %v1264 = vunpack.c.l.b16 %v653
    %v1265 = vunpack.c.h.b16 %v653
    %v1266 = vunpack.c.l.b16 %v654
    %v1267 = vunpack.c.h.b16 %v654
    %v1268 = vunpack.c.l.b16 %v655
    %v1269 = vunpack.c.h.b16 %v655
    %v1270 = vunpack.c.l.b16 %v656
    %v1271 = vunpack.c.h.b16 %v656
    %v1272 = vunpack.c.l.b16 %v657
    %v1273 = vunpack.c.h.b16 %v657
    %v1274 = vunpack.c.l.b16 %v658
    %v1275 = vunpack.c.h.b16 %v658
    %v1276 = vunpack.c.l.b16 %v659
    %v1277 = vunpack.c.h.b16 %v659
    %v1278 = vunpack.c.l.b16 %v660
    %v1279 = vunpack.c.h.b16 %v660
    %v1280 = vunpack.c.l.b16 %v661
    %v1281 = vunpack.c.h.b16 %v661
    %v1282 = vunpack.c.l.b16 %v662
    %v1283 = vunpack.c.h.b16 %v662
    %v1284 = vunpack.c.l.b16 %v663
    %v1285 = vunpack.c.h.b16 %v663
    %v1286 = vunpack.c.l.b16 %v664
    %v1287 = vunpack.c.h.b16 %v664
    %v1288 = vunpack.c.l.b16 %v665
    %v1289 = vunpack.c.h.b16 %v665
    %v1290 = vunpack.c.l.b16 %v666
    %v1291 = vunpack.c.h.b16 %v666
    %v1292 = vunpack.c.l.b16 %v667
    %v1293 = vunpack.c.h.b16 %v667
    %v1294 = vunpack.c.l.b16 %v668
    %v1295 = vunpack.c.h.b16 %v668
    %v1296 = vunpack.c.l.b16 %v669
    %v1297 = vunpack.c.h.b16 %v669
    %v1298 = vunpack.c.l.b16 %v670
    %v1299 = vunpack.c.h.b16 %v670
    %v1300 = vunpack.c.l.b16 %v671
    %v1301 = vunpack.c.h.b16 %v671
    %v1302 = vunpack.c.l.b16 %v672
    %v1303 = vunpack.c.h.b16 %v672
    %v1304 = vunpack.c.l.b16 %v673
    %v1305 = vunpack.c.h.b16 %v673
    %v1306 = vunpack.c.l.b16 %v674
    %v1307 = vunpack.c.h.b16 %v674
    %v1308 = vunpack.c.l.b16 %v675
    %v1309 = vunpack.c.h.b16 %v675
    %v1310 = vunpack.c.l.b16 %v676
    %v1311 = vunpack.c.h.b16 %v676
    %v1312 = vunpack.c.l.b16 %v677
    %v1313 = vunpack.c.h.b16 %v677
    %v1314 = vunpack.c.l.b16 %v678
    %v1315 = vunpack.c.h.b16 %v678
    %v1316 = vunpack.c.l.b16 %v679
    %v1317 = vunpack.c.h.b16 %v679
    %v1318 = vunpack.c.l.b16 %v680
    %v1319 = vunpack.c.h.b16 %v680
    %v1320 = vunpack.c.l.b16 %v681
    %v1321 = vunpack.c.h.b16 %v681
    %v1322 = vunpack.c.l.b16 %v682
    %v1323 = vunpack.c.h.b16 %v682
    %v1324 = vunpack.c.l.b16 %v683
    %v1325 = vunpack.c.h.b16 %v683
    %v1326 = vunpack.c.l.b16 %v684
    %v1327 = vunpack.c.h.b16 %v684
    %v1328 = vunpack.c.l.b16 %v685
    %v1329 = vunpack.c.h.b16 %v685
    %v1330 = vunpack.c.l.b16 %v686
    %v1331 = vunpack.c.h.b16 %v686
    %v1332 = vunpack.c.l.b16 %v687
    %v1333 = vunpack.c.h.b16 %v687
    %v1334 = vunpack.c.l.b16 %v688
    %v1335 = vunpack.c.h.b16 %v688
    %v1336 = vunpack.c.l.b16 %v689
    %v1337 = vunpack.c.h.b16 %v689
    %v1338 = vunpack.c.l.b16 %v690
    %v1339 = vunpack.c.h.b16 %v690
    %v1340 = vunpack.c.l.b16 %v691
    %v1341 = vunpack.c.h.b16 %v691
    %v1342 = vunpack.c.l.b16 %v692
    %v1343 = vunpack.c.h.b16 %v692
    %v1344 = vunpack.c.l.b16 %v693
    %v1345 = vunpack.c.h.b16 %v693
    %v1346 = vunpack.c.l.b16 %v694
    %v1347 = vunpack.c.h.b16 %v694
    %v1348 = vunpack.c.l.b16 %v695
    %v1349 = vunpack.c.h.b16 %v695
    %v1350 = vunpack.c.l.b16 %v696
    %v1351 = vunpack.c.h.b16 %v696
    %v1352 = vunpack.c.l.b16 %v697
    %v1353 = vunpack.c.h.b16 %v697
    %v1354 = vunpack.c.l.b16 %v698
    %v1355 = vunpack.c.h.b16 %v698
    %v1356 = vunpack.c.l.b16 %v699
    %v1357 = vunpack.c.h.b16 %v699
    %v1358 = vunpack.c.l.b16 %v700
    %v1359 = vunpack.c.h.b16 %v700
    %v1360 = vunpack.c.l.b16 %v701
    %v1361 = vunpack.c.h.b16 %v701
    %v1362 = vunpack.c.l.b16 %v702
    %v1363 = vunpack.c.h.b16 %v702
    %v1364 = vunpack.c.l.b16 %v703
    %v1365 = vunpack.c.h.b16 %v703
    %v1366 = vunpack.c.l.b16 %v704
    %v1367 = vunpack.c.h.b16 %v704
    %v1368 = vunpack.c.l.b16 %v705
    %v1369 = vunpack.c.h.b16 %v705
    %v1370 = vunpack.c.l.b16 %v706
    %v1371 = vunpack.c.h.b16 %v706
    %v1372 = vunpack.c.l.b16 %v707
    %v1373 = vunpack.c.h.b16 %v707
    %v1374 = vunpack.c.l.b16 %v708
    %v1375 = vunpack.c.h.b16 %v708
    %v1376 = vunpack.c.l.b16 %v709
    %v1377 = vunpack.c.h.b16 %v709
    %v1378 = vunpack.c.l.b16 %v710
    %v1379 = vunpack.c.h.b16 %v710
    %v1380 = vunpack.c.l.b16 %v711
    %v1381 = vunpack.c.h.b16 %v711
    %v1382 = vunpack.c.l.b16 %v712
    %v1383 = vunpack.c.h.b16 %v712
    %v1384 = vunpack.c.l.b16 %v713
    %v1385 = vunpack.c.h.b16 %v713
    %v1386 = vunpack.c.l.b16 %v714
    %v1387 = vunpack.c.h.b16 %v714
    %v1388 = vunpack.c.l.b16 %v715
    %v1389 = vunpack.c.h.b16 %v715
    %v1390 = vunpack.c.l.b16 %v716
    %v1391 = vunpack.c.h.b16 %v716
    %v1392 = vunpack.c.l.b16 %v717
    %v1393 = vunpack.c.h.b16 %v717
    %v1394 = vunpack.c.l.b16 %v718
    %v1395 = vunpack.c.h.b16 %v718
    %v1396 = vunpack.c.l.b16 %v719
    %v1397 = vunpack.c.h.b16 %v719
    %v1398 = vunpack.c.l.b16 %v720
    %v1399 = vunpack.c.h.b16 %v720
    %v1400 = vunpack.c.l.b16 %v721
    %v1401 = vunpack.c.h.b16 %v721
    %v1402 = vunpack.c.l.b16 %v722
    %v1403 = vunpack.c.h.b16 %v722
    %v1404 = vunpack.c.l.b16 %v723
    %v1405 = vunpack.c.h.b16 %v723
    %v1406 = vunpack.c.l.b16 %v724
    %v1407 = vunpack.c.h.b16 %v724
    %v1408 = vunpack.c.l.b16 %v725
    %v1409 = vunpack.c.h.b16 %v725
    %v1410 = vunpack.c.l.b16 %v726
    %v1411 = vunpack.c.h.b16 %v726
    %v1412 = vunpack.c.l.b16 %v727
    %v1413 = vunpack.c.h.b16 %v727
    %v1414 = vunpack.c.l.b16 %v728
    %v1415 = vunpack.c.h.b16 %v728
    %v1416 = vunpack.c.l.b16 %v729
    %v1417 = vunpack.c.h.b16 %v729
    %v1418 = vunpack.c.l.b16 %v730
    %v1419 = vunpack.c.h.b16 %v730
    %v1420 = vunpack.c.l.b16 %v731
    %v1421 = vunpack.c.h.b16 %v731
    %v1422 = vunpack.c.l.b16 %v732
    %v1423 = vunpack.c.h.b16 %v732
    %v1424 = vunpack.c.l.b16 %v733
    %v1425 = vunpack.c.h.b16 %v733
    %v1426 = vunpack.c.l.b16 %v734
    %v1427 = vunpack.c.h.b16 %v734
    %v1428 = vunpack.c.l.b16 %v735
    %v1429 = vunpack.c.h.b16 %v735
    %v1430 = vunpack.c.l.b16 %v736
    %v1431 = vunpack.c.h.b16 %v736
    %v1432 = vunpack.c.l.b16 %v737
    %v1433 = vunpack.c.h.b16 %v737
    %v1434 = vunpack.c.l.b16 %v738
    %v1435 = vunpack.c.h.b16 %v738
    %v1436 = vunpack.c.l.b16 %v739
    %v1437 = vunpack.c.h.b16 %v739
    %v1438 = vunpack.c.l.b16 %v740
    %v1439 = vunpack.c.h.b16 %v740
    %v1440 = vunpack.c.l.b16 %v741
    %v1441 = vunpack.c.h.b16 %v741
    %v1442 = vunpack.c.l.b16 %v742
    %v1443 = vunpack.c.h.b16 %v742
    %v1444 = vunpack.c.l.b16 %v743
    %v1445 = vunpack.c.h.b16 %v743
    %v1446 = vunpack.c.l.b16 %v744
    %v1447 = vunpack.c.h.b16 %v744
    %v1448 = vunpack.c.l.b16 %v745
    %v1449 = vunpack.c.h.b16 %v745
    %v1450 = vunpack.c.l.b16 %v746
    %v1451 = vunpack.c.h.b16 %v746
    %v1452 = vunpack.c.l.b16 %v747
    %v1453 = vunpack.c.h.b16 %v747
    %v1454 = vunpack.c.l.b16 %v748
    %v1455 = vunpack.c.h.b16 %v748
    %v1456 = vunpack.c.l.b16 %v749
    %v1457 = vunpack.c.h.b16 %v749
    %v1458 = vunpack.c.l.b16 %v750
    %v1459 = vunpack.c.h.b16 %v750
    %v1460 = vunpack.c.l.b16 %v751
    %v1461 = vunpack.c.h.b16 %v751
    %v1462 = vunpack.c.l.b16 %v752
    %v1463 = vunpack.c.h.b16 %v752
    %v1464 = vunpack.c.l.b16 %v753
    %v1465 = vunpack.c.h.b16 %v753
    %v1466 = vunpack.c.l.b16 %v754
    %v1467 = vunpack.c.h.b16 %v754
    %v1468 = vunpack.c.l.b16 %v755
    %v1469 = vunpack.c.h.b16 %v755
    %v1470 = vunpack.c.l.b16 %v756
    %v1471 = vunpack.c.h.b16 %v756
    %v1472 = vunpack.c.l.b16 %v757
    %v1473 = vunpack.c.h.b16 %v757
    %v1474 = vunpack.c.l.b16 %v758
    %v1475 = vunpack.c.h.b16 %v758
    %v1476 = vunpack.c.l.b16 %v759
    %v1477 = vunpack.c.h.b16 %v759
    %v1478 = vunpack.c.l.b16 %v760
    %v1479 = vunpack.c.h.b16 %v760
    %v1480 = vunpack.c.l.b16 %v761
    %v1481 = vunpack.c.h.b16 %v761
    %v1482 = vunpack.c.l.b16 %v762
    %v1483 = vunpack.c.h.b16 %v762
    %v1484 = vunpack.c.l.b16 %v763
    %v1485 = vunpack.c.h.b16 %v763
    %v1486 = vunpack.c.l.b16 %v764
    %v1487 = vunpack.c.h.b16 %v764
    %v1488 = vunpack.c.l.b16 %v765
    %v1489 = vunpack.c.h.b16 %v765
    %v1490 = vunpack.c.l.b16 %v766
    %v1491 = vunpack.c.h.b16 %v766
    %v1492 = vunpack.c.l.b16 %v767
    %v1493 = vunpack.c.h.b16 %v767
    %v1494 = vunpack.c.l.b16 %v768
    %v1495 = vunpack.c.h.b16 %v768
    %v1496 = vunpack.c.l.b16 %v769
    %v1497 = vunpack.c.h.b16 %v769
    %v1498 = vunpack.c.l.b16 %v770
    %v1499 = vunpack.c.h.b16 %v770
    %v1500 = vunpack.c.l.b16 %v771
    %v1501 = vunpack.c.h.b16 %v771
    %v1502 = vunpack.c.l.b16 %v772
    %v1503 = vunpack.c.h.b16 %v772
    %v1504 = vunpack.c.l.b16 %v773
    %v1505 = vunpack.c.h.b16 %v773
    %v1506 = vunpack.c.l.b16 %v774
    %v1507 = vunpack.c.h.b16 %v774
    %v1508 = vunpack.c.l.b16 %v775
    %v1509 = vunpack.c.h.b16 %v775
    %v1510 = vunpack.c.l.b16 %v776
    %v1511 = vunpack.c.h.b16 %v776
    %v1512 = vunpack.c.l.b16 %v777
    %v1513 = vunpack.c.h.b16 %v777
    %v1514 = vunpack.c.l.b16 %v778
    %v1515 = vunpack.c.h.b16 %v778
    %v1516 = vunpack.c.l.b16 %v779
    %v1517 = vunpack.c.h.b16 %v779
    %v1518 = vunpack.c.l.b16 %v780
    %v1519 = vunpack.c.h.b16 %v780
    %v1520 = vunpack.c.l.b16 %v781
    %v1521 = vunpack.c.h.b16 %v781
    %v1522 = vunpack.c.l.b16 %v782
    %v1523 = vunpack.c.h.b16 %v782
    %v1524 = vunpack.c.l.b16 %v783
    %v1525 = vunpack.c.h.b16 %v783
    %v1526 = vunpack.c.l.b16 %v784
    %v1527 = vunpack.c.h.b16 %v784
    %v1528 = vunpack.c.l.b16 %v785
    %v1529 = vunpack.c.h.b16 %v785
    %v1530 = vunpack.c.l.b16 %v786
    %v1531 = vunpack.c.h.b16 %v786
    %v1532 = vunpack.c.l.b16 %v787
    %v1533 = vunpack.c.h.b16 %v787
    %v1534 = vunpack.c.l.b16 %v788
    %v1535 = vunpack.c.h.b16 %v788
    %v1536 = vunpack.c.l.b16 %v789
    %v1537 = vunpack.c.h.b16 %v789
    %v1538 = vunpack.c.l.b16 %v790
    %v1539 = vunpack.c.h.b16 %v790
    %v1540 = vunpack.c.l.b16 %v791
    %v1541 = vunpack.c.h.b16 %v791
    %v1542 = vunpack.c.l.b16 %v792
    %v1543 = vunpack.c.h.b16 %v792
    %v1544 = vunpack.c.l.b16 %v793
    %v1545 = vunpack.c.h.b16 %v793
    %v1546 = vunpack.c.l.b16 %v794
    %v1547 = vunpack.c.h.b16 %v794
    %v1548 = vunpack.c.l.b16 %v795
    %v1549 = vunpack.c.h.b16 %v795
    %v1550 = vunpack.c.l.b16 %v796
    %v1551 = vunpack.c.h.b16 %v796
    %v1552 = vunpack.c.l.b16 %v797
    %v1553 = vunpack.c.h.b16 %v797
    %v1554 = vunpack.c.l.b16 %v798
    %v1555 = vunpack.c.h.b16 %v798
    %v1556 = vunpack.c.l.b16 %v799
    %v1557 = vunpack.c.h.b16 %v799
    %v1558 = vunpack.c.l.b16 %v800
    %v1559 = vunpack.c.h.b16 %v800
    %v1560 = vunpack.c.l.b16 %v801
    %v1561 = vunpack.c.h.b16 %v801
    %v1562 = vunpack.c.l.b16 %v802
    %v1563 = vunpack.c.h.b16 %v802
    %v1564 = vunpack.c.l.b16 %v803
    %v1565 = vunpack.c.h.b16 %v803
    %v1566 = vunpack.c.l.b16 %v804
    %v1567 = vunpack.c.h.b16 %v804
    %v1568 = vunpack.c.l.b16 %v805
    %v1569 = vunpack.c.h.b16 %v805
    %v1570 = vunpack.c.l.b16 %v806
    %v1571 = vunpack.c.h.b16 %v806
    %v1572 = vunpack.c.l.b16 %v807
    %v1573 = vunpack.c.h.b16 %v807
    %v1574 = vunpack.c.l.b16 %v808
    %v1575 = vunpack.c.h.b16 %v808
    %v1576 = vunpack.c.l.b16 %v809
    %v1577 = vunpack.c.h.b16 %v809
    %v1578 = vunpack.c.l.b16 %v810
    %v1579 = vunpack.c.h.b16 %v810
    %v1580 = vunpack.c.l.b16 %v811
    %v1581 = vunpack.c.h.b16 %v811
    %v1582 = vunpack.c.l.b16 %v812
    %v1583 = vunpack.c.h.b16 %v812
    %v1584 = vunpack.c.l.b16 %v813
    %v1585 = vunpack.c.h.b16 %v813
    %v1586 = vunpack.c.l.b16 %v814
    %v1587 = vunpack.c.h.b16 %v814
    %v1588 = vunpack.c.l.b16 %v815
    %v1589 = vunpack.c.h.b16 %v815
    %v1590 = vunpack.c.l.b16 %v816
    %v1591 = vunpack.c.h.b16 %v816
    %v1592 = vunpack.c.l.b16 %v817
    %v1593 = vunpack.c.h.b16 %v817
    %v1594 = vunpack.c.l.b16 %v818
    %v1595 = vunpack.c.h.b16 %v818
    %v1596 = vunpack.c.l.b16 %v819
    %v1597 = vunpack.c.h.b16 %v819
    %v1598 = vunpack.c.l.b16 %v820
    %v1599 = vunpack.c.h.b16 %v820
    %v1600 = vunpack.c.l.b16 %v821
    %v1601 = vunpack.c.h.b16 %v821
    %v1602 = vunpack.c.l.b16 %v822
    %v1603 = vunpack.c.h.b16 %v822
    %v1604 = vunpack.c.l.b16 %v823
    %v1605 = vunpack.c.h.b16 %v823
    %v1606 = vunpack.c.l.b16 %v824
    %v1607 = vunpack.c.h.b16 %v824
    %v1608 = vunpack.c.l.b16 %v825
    %v1609 = vunpack.c.h.b16 %v825
    %v1610 = vunpack.c.l.b16 %v826
    %v1611 = vunpack.c.h.b16 %v826
    %v1612 = vunpack.c.l.b16 %v827
    %v1613 = vunpack.c.h.b16 %v827
    %v1614 = vunpack.c.l.b16 %v828
    %v1615 = vunpack.c.h.b16 %v828
    %v1616 = vunpack.c.l.b16 %v829
    %v1617 = vunpack.c.h.b16 %v829
    %v1618 = vunpack.c.l.b16 %v830
    %v1619 = vunpack.c.h.b16 %v830
    %v1620 = vunpack.c.l.b16 %v831
    %v1621 = vunpack.c.h.b16 %v831
    %v1622 = vpack.c.b16 %v1114, %v1110
    %v1623 = vpack.c.b16 %v1115, %v1111
    %v1624 = vpack.c.b16 %v1116, %v1112
    %v1625 = vpack.c.b16 %v1117, %v1113
    %v1626 = vpack.c.b16 %v1122, %v1118
    %v1627 = vpack.c.b16 %v1123, %v1119
    %v1628 = vpack.c.b16 %v1124, %v1120
    %v1629 = vpack.c.b16 %v1125, %v1121
    %v1630 = vpack.c.b16 %v1130, %v1126
    %v1631 = vpack.c.b16 %v1131, %v1127
    %v1632 = vpack.c.b16 %v1132, %v1128
    %v1633 = vpack.c.b16 %v1133, %v1129
    %v1634 = vpack.c.b16 %v1138, %v1134
    %v1635 = vpack.c.b16 %v1139, %v1135
    %v1636 = vpack.c.b16 %v1140, %v1136
    %v1637 = vpack.c.b16 %v1141, %v1137
    %v1638 = vpack.c.b16 %v1146, %v1142
    %v1639 = vpack.c.b16 %v1147, %v1143
    %v1640 = vpack.c.b16 %v1148, %v1144
    %v1641 = vpack.c.b16 %v1149, %v1145
    %v1642 = vpack.c.b16 %v1154, %v1150
    %v1643 = vpack.c.b16 %v1155, %v1151
    %v1644 = vpack.c.b16 %v1156, %v1152
    %v1645 = vpack.c.b16 %v1157, %v1153
    %v1646 = vpack.c.b16 %v1162, %v1158
    %v1647 = vpack.c.b16 %v1163, %v1159
    %v1648 = vpack.c.b16 %v1164, %v1160
    %v1649 = vpack.c.b16 %v1165, %v1161
    %v1650 = vpack.c.b16 %v1170, %v1166
    %v1651 = vpack.c.b16 %v1171, %v1167
    %v1652 = vpack.c.b16 %v1172, %v1168
    %v1653 = vpack.c.b16 %v1173, %v1169
    %v1654 = vpack.c.b16 %v1178, %v1174
    %v1655 = vpack.c.b16 %v1179, %v1175
    %v1656 = vpack.c.b16 %v1180, %v1176
    %v1657 = vpack.c.b16 %v1181, %v1177
    %v1658 = vpack.c.b16 %v1186, %v1182
    %v1659 = vpack.c.b16 %v1187, %v1183
    %v1660 = vpack.c.b16 %v1188, %v1184
    %v1661 = vpack.c.b16 %v1189, %v1185
    %v1662 = vpack.c.b16 %v1194, %v1190
    %v1663 = vpack.c.b16 %v1195, %v1191
    %v1664 = vpack.c.b16 %v1196, %v1192
    %v1665 = vpack.c.b16 %v1197, %v1193
    %v1666 = vpack.c.b16 %v1202, %v1198
    %v1667 = vpack.c.b16 %v1203, %v1199
    %v1668 = vpack.c.b16 %v1204, %v1200
    %v1669 = vpack.c.b16 %v1205, %v1201
    %v1670 = vpack.c.b16 %v1210, %v1206
    %v1671 = vpack.c.b16 %v1211, %v1207
    %v1672 = vpack.c.b16 %v1212, %v1208
    %v1673 = vpack.c.b16 %v1213, %v1209
    %v1674 = vpack.c.b16 %v1218, %v1214
    %v1675 = vpack.c.b16 %v1219, %v1215
    %v1676 = vpack.c.b16 %v1220, %v1216
    %v1677 = vpack.c.b16 %v1221, %v1217
    %v1678 = vpack.c.b16 %v1226, %v1222
    %v1679 = vpack.c.b16 %v1227, %v1223
    %v1680 = vpack.c.b16 %v1228, %v1224
    %v1681 = vpack.c.b16 %v1229, %v1225
    %v1682 = vpack.c.b16 %v1234, %v1230
    %v1683 = vpack.c.b16 %v1235, %v1231
    %v1684 = vpack.c.b16 %v1236, %v1232
    %v1685 = vpack.c.b16 %v1237, %v1233
    %v1686 = vpack.c.b16 %v1242, %v1238
    %v1687 = vpack.c.b16 %v1243, %v1239
    %v1688 = vpack.c.b16 %v1244, %v1240
    %v1689 = vpack.c.b16 %v1245, %v1241
    %v1690 = vpack.c.b16 %v1250, %v1246
    %v1691 = vpack.c.b16 %v1251, %v1247
    %v1692 = vpack.c.b16 %v1252, %v1248
    %v1693 = vpack.c.b16 %v1253, %v1249
    %v1694 = vpack.c.b16 %v1258, %v1254
    %v1695 = vpack.c.b16 %v1259, %v1255
    %v1696 = vpack.c.b16 %v1260, %v1256
    %v1697 = vpack.c.b16 %v1261, %v1257
    %v1698 = vpack.c.b16 %v1266, %v1262
    %v1699 = vpack.c.b16 %v1267, %v1263
    %v1700 = vpack.c.b16 %v1268, %v1264
    %v1701 = vpack.c.b16 %v1269, %v1265
    %v1702 = vpack.c.b16 %v1274, %v1270
    %v1703 = vpack.c.b16 %v1275, %v1271
    %v1704 = vpack.c.b16 %v1276, %v1272
    %v1705 = vpack.c.b16 %v1277, %v1273
    %v1706 = vpack.c.b16 %v1282, %v1278
    %v1707 = vpack.c.b16 %v1283, %v1279
    %v1708 = vpack.c.b16 %v1284, %v1280
    %v1709 = vpack.c.b16 %v1285, %v1281
    %v1710 = vpack.c.b16 %v1290, %v1286
    %v1711 = vpack.c.b16 %v1291, %v1287
    %v1712 = vpack.c.b16 %v1292, %v1288
    %v1713 = vpack.c.b16 %v1293, %v1289
    %v1714 = vpack.c.b16 %v1298, %v1294
    %v1715 = vpack.c.b16 %v1299, %v1295
    %v1716 = vpack.c.b16 %v1300, %v1296
    %v1717 = vpack.c.b16 %v1301, %v1297
    %v1718 = vpack.c.b16 %v1306, %v1302
    %v1719 = vpack.c.b16 %v1307, %v1303
    %v1720 = vpack.c.b16 %v1308, %v1304
    %v1721 = vpack.c.b16 %v1309, %v1305
    %v1722 = vpack.c.b16 %v1314, %v1310
    %v1723 = vpack.c.b16 %v1315, %v1311
    %v1724 = vpack.c.b16 %v1316, %v1312
    %v1725 = vpack.c.b16 %v1317, %v1313
    %v1726 = vpack.c.b16 %v1322, %v1318
    %v1727 = vpack.c.b16 %v1323, %v1319
    %v1728 = vpack.c.b16 %v1324, %v1320
    %v1729 = vpack.c.b16 %v1325, %v1321
    %v1730 = vpack.c.b16 %v1330, %v1326
    %v1731 = vpack.c.b16 %v1331, %v1327
    %v1732 = vpack.c.b16 %v1332, %v1328
    %v1733 = vpack.c.b16 %v1333, %v1329
    %v1734 = vpack.c.b16 %v1338, %v1334
    %v1735 = vpack.c.b16 %v1339, %v1335
    %v1736 = vpack.c.b16 %v1340, %v1336
    %v1737 = vpack.c.b16 %v1341, %v1337
    %v1738 = vpack.c.b16 %v1346, %v1342
    %v1739 = vpack.c.b16 %v1347, %v1343
    %v1740 = vpack.c.b16 %v1348, %v1344
    %v1741 = vpack.c.b16 %v1349, %v1345
    %v1742 = vpack.c.b16 %v1354, %v1350
    %v1743 = vpack.c.b16 %v1355, %v1351
    %v1744 = vpack.c.b16 %v1356, %v1352
    %v1745 = vpack.c.b16 %v1357, %v1353
    %v1746 = vpack.c.b16 %v1362, %v1358
    %v1747 = vpack.c.b16 %v1363, %v1359
    %v1748 = vpack.c.b16 %v1364, %v1360
    %v1749 = vpack.c.b16 %v1365, %v1361
    %v1750 = vpack.c.b16 %v1370, %v1366
    %v1751 = vpack.c.b16 %v1371, %v1367
    %v1752 = vpack.c.b16 %v1372, %v1368
    %v1753 = vpack.c.b16 %v1373, %v1369
    %v1754 = vpack.c.b16 %v1378, %v1374
    %v1755 = vpack.c.b16 %v1379, %v1375
    %v1756 = vpack.c.b16 %v1380, %v1376
    %v1757 = vpack.c.b16 %v1381, %v1377
    %v1758 = vpack.c.b16 %v1386, %v1382
    %v1759 = vpack.c.b16 %v1387, %v1383
    %v1760 = vpack.c.b16 %v1388, %v1384
    %v1761 = vpack.c.b16 %v1389, %v1385
    %v1762 = vpack.c.b16 %v1394, %v1390
    %v1763 = vpack.c.b16 %v1395, %v1391
    %v1764 = vpack.c.b16 %v1396, %v1392
    %v1765 = vpack.c.b16 %v1397, %v1393
    %v1766 = vpack.c.b16 %v1402, %v1398
    %v1767 = vpack.c.b16 %v1403, %v1399
    %v1768 = vpack.c.b16 %v1404, %v1400
    %v1769 = vpack.c.b16 %v1405, %v1401
    %v1770 = vpack.c.b16 %v1410, %v1406
    %v1771 = vpack.c.b16 %v1411, %v1407
    %v1772 = vpack.c.b16 %v1412, %v1408
    %v1773 = vpack.c.b16 %v1413, %v1409
    %v1774 = vpack.c.b16 %v1418, %v1414
    %v1775 = vpack.c.b16 %v1419, %v1415
    %v1776 = vpack.c.b16 %v1420, %v1416
    %v1777 = vpack.c.b16 %v1421, %v1417
    %v1778 = vpack.c.b16 %v1426, %v1422
    %v1779 = vpack.c.b16 %v1427, %v1423
    %v1780 = vpack.c.b16 %v1428, %v1424
    %v1781 = vpack.c.b16 %v1429, %v1425
    %v1782 = vpack.c.b16 %v1434, %v1430
    %v1783 = vpack.c.b16 %v1435, %v1431
    %v1784 = vpack.c.b16 %v1436, %v1432
    %v1785 = vpack.c.b16 %v1437, %v1433
    %v1786 = vpack.c.b16 %v1442, %v1438
    %v1787 = vpack.c.b16 %v1443, %v1439
    %v1788 = vpack.c.b16 %v1444, %v1440
    %v1789 = vpack.c.b16 %v1445, %v1441
    %v1790 = vpack.c.b16 %v1450, %v1446
    %v1791 = vpack.c.b16 %v1451, %v1447
    %v1792 = vpack.c.b16 %v1452, %v1448
    %v1793 = vpack.c.b16 %v1453, %v1449
    %v1794 = vpack.c.b16 %v1458, %v1454
    %v1795 = vpack.c.b16 %v1459, %v1455
    %v1796 = vpack.c.b16 %v1460, %v1456
    %v1797 = vpack.c.b16 %v1461, %v1457
    %v1798 = vpack.c.b16 %v1466, %v1462
    %v1799 = vpack.c.b16 %v1467, %v1463
    %v1800 = vpack.c.b16 %v1468, %v1464
    %v1801 = vpack.c.b16 %v1469, %v1465
    %v1802 = vpack.c.b16 %v1474, %v1470
    %v1803 = vpack.c.b16 %v1475, %v1471
    %v1804 = vpack.c.b16 %v1476, %v1472
    %v1805 = vpack.c.b16 %v1477, %v1473
    %v1806 = vpack.c.b16 %v1482, %v1478
    %v1807 = vpack.c.b16 %v1483, %v1479
    %v1808 = vpack.c.b16 %v1484, %v1480
    %v1809 = vpack.c.b16 %v1485, %v1481
    %v1810 = vpack.c.b16 %v1490, %v1486
    %v1811 = vpack.c.b16 %v1491, %v1487
    %v1812 = vpack.c.b16 %v1492, %v1488
    %v1813 = vpack.c.b16 %v1493, %v1489
    %v1814 = vpack.c.b16 %v1498, %v1494
    %v1815 = vpack.c.b16 %v1499, %v1495
    %v1816 = vpack.c.b16 %v1500, %v1496
    %v1817 = vpack.c.b16 %v1501, %v1497
    %v1818 = vpack.c.b16 %v1506, %v1502
    %v1819 = vpack.c.b16 %v1507, %v1503
    %v1820 = vpack.c.b16 %v1508, %v1504
    %v1821 = vpack.c.b16 %v1509, %v1505
    %v1822 = vpack.c.b16 %v1514, %v1510
    %v1823 = vpack.c.b16 %v1515, %v1511
    %v1824 = vpack.c.b16 %v1516, %v1512
    %v1825 = vpack.c.b16 %v1517, %v1513
    %v1826 = vpack.c.b16 %v1522, %v1518
    %v1827 = vpack.c.b16 %v1523, %v1519
    %v1828 = vpack.c.b16 %v1524, %v1520
    %v1829 = vpack.c.b16 %v1525, %v1521
    %v1830 = vpack.c.b16 %v1530, %v1526
    %v1831 = vpack.c.b16 %v1531, %v1527
    %v1832 = vpack.c.b16 %v1532, %v1528
    %v1833 = vpack.c.b16 %v1533, %v1529
    %v1834 = vpack.c.b16 %v1538, %v1534
    %v1835 = vpack.c.b16 %v1539, %v1535
    %v1836 = vpack.c.b16 %v1540, %v1536
    %v1837 = vpack.c.b16 %v1541, %v1537
    %v1838 = vpack.c.b16 %v1546, %v1542
    %v1839 = vpack.c.b16 %v1547, %v1543
    %v1840 = vpack.c.b16 %v1548, %v1544
    %v1841 = vpack.c.b16 %v1549, %v1545
    %v1842 = vpack.c.b16 %v1554, %v1550
    %v1843 = vpack.c.b16 %v1555, %v1551
    %v1844 = vpack.c.b16 %v1556, %v1552
    %v1845 = vpack.c.b16 %v1557, %v1553
    %v1846 = vpack.c.b16 %v1562, %v1558
    %v1847 = vpack.c.b16 %v1563, %v1559
    %v1848 = vpack.c.b16 %v1564, %v1560
    %v1849 = vpack.c.b16 %v1565, %v1561
    %v1850 = vpack.c.b16 %v1570, %v1566
    %v1851 = vpack.c.b16 %v1571, %v1567
    %v1852 = vpack.c.b16 %v1572, %v1568
    %v1853 = vpack.c.b16 %v1573, %v1569
    %v1854 = vpack.c.b16 %v1578, %v1574
    %v1855 = vpack.c.b16 %v1579, %v1575
    %v1856 = vpack.c.b16 %v1580, %v1576
    %v1857 = vpack.c.b16 %v1581, %v1577
    %v1858 = vpack.c.b16 %v1586, %v1582
    %v1859 = vpack.c.b16 %v1587, %v1583
    %v1860 = vpack.c.b16 %v1588, %v1584
    %v1861 = vpack.c.b16 %v1589, %v1585
    %v1862 = vpack.c.b16 %v1594, %v1590
    %v1863 = vpack.c.b16 %v1595, %v1591
    %v1864 = vpack.c.b16 %v1596, %v1592
    %v1865 = vpack.c.b16 %v1597, %v1593
    %v1866 = vpack.c.b16 %v1602, %v1598
    %v1867 = vpack.c.b16 %v1603, %v1599
    %v1868 = vpack.c.b16 %v1604, %v1600
    %v1869 = vpack.c.b16 %v1605, %v1601
    %v1870 = vpack.c.b16 %v1610, %v1606
    %v1871 = vpack.c.b16 %v1611, %v1607
    %v1872 = vpack.c.b16 %v1612, %v1608
    %v1873 = vpack.c.b16 %v1613, %v1609
    %v1874 = vpack.c.b16 %v1618, %v1614
    %v1875 = vpack.c.b16 %v1619, %v1615
    %v1876 = vpack.c.b16 %v1620, %v1616
    %v1877 = vpack.c.b16 %v1621, %v1617
    %2134 = vmatprep.subr.bf16.mxu0 %v1623
    %2135 = vmatpush1.bf16.msra.mxu0 %v1622
    %2136 = vmatprep.subr.bf16.mxu0 %v1627
    %2137 = vmatpush1.bf16.msra.mxu0 %v1626
    %2138 = vmatprep.subr.bf16.mxu0 %v1631
    %2139 = vmatpush1.bf16.msra.mxu0 %v1630
    %2140 = vmatprep.subr.bf16.mxu0 %v1635
    %2141 = vmatpush1.bf16.msra.mxu0 %v1634
    %2142 = vmatprep.subr.bf16.mxu0 %v1639
    %2143 = vmatpush1.bf16.msra.mxu0 %v1638
    %2144 = vmatprep.subr.bf16.mxu0 %v1643
    %2145 = vmatpush1.bf16.msra.mxu0 %v1642
    %2146 = vmatprep.subr.bf16.mxu0 %v1647
    %2147 = vmatpush1.bf16.msra.mxu0 %v1646
    %2148 = vmatprep.subr.bf16.mxu0 %v1651
    %2149 = vmatpush1.bf16.msra.mxu0 %v1650
    %2150 = vmatprep.subr.bf16.mxu0 %v1655
    %2151 = vmatpush1.bf16.msra.mxu0 %v1654
    %2152 = vmatprep.subr.bf16.mxu0 %v1659
    %2153 = vmatpush1.bf16.msra.mxu0 %v1658
    %2154 = vmatprep.subr.bf16.mxu0 %v1663
    %2155 = vmatpush1.bf16.msra.mxu0 %v1662
    %2156 = vmatprep.subr.bf16.mxu0 %v1667
    %2157 = vmatpush1.bf16.msra.mxu0 %v1666
    %2158 = vmatprep.subr.bf16.mxu0 %v1671
    %2159 = vmatpush1.bf16.msra.mxu0 %v1670
    %2160 = vmatprep.subr.bf16.mxu0 %v1675
    %2161 = vmatpush1.bf16.msra.mxu0 %v1674
    %2162 = vmatprep.subr.bf16.mxu0 %v1679
    %2163 = vmatpush1.bf16.msra.mxu0 %v1678
    %2164 = vmatprep.subr.bf16.mxu0 %v1683
    %2165 = vmatpush1.bf16.msra.mxu0 %v1682
    %2166 = vmatprep.mubr.bf16.mxu0 %v545
    %2167 = vmatmul.mubr.bf16.gmra.mrb[0].mxu0 %v544
    %v2168 = vpop.f32.mrb[0].mxu0
    %v2169 = vadd.f32 %v837, %v2168
    %v2170 = vpop.f32.mrb[0].mxu0
    %v2171 = vadd.f32 %v841, %v2170
    %v2172 = vpop.f32.mrb[0].mxu0
    %v2173 = vadd.f32 %v837, %v2172
    %v2174 = vpop.f32.mrb[0].mxu0
    %v2175 = vadd.f32 %v841, %v2174
    %2176 = vmatprep.mubr.bf16.mxu0 %v553
    %2177 = vmatmul.mubr.bf16.gmra.mrb[0].mxu0 %v552
    %v2178 = vpop.f32.mrb[0].mxu0
    %v2179 = vadd.f32 %v837, %v2178
    %v2180 = vpop.f32.mrb[0].mxu0
    %v2181 = vadd.f32 %v841, %v2180
    %v2182 = vpop.f32.mrb[0].mxu0
    %v2183 = vadd.f32 %v837, %v2182
    %v2184 = vpop.f32.mrb[0].mxu0
    %v2185 = vadd.f32 %v841, %v2184
    %2186 = vmatprep.mubr.bf16.mxu0 %v561
    %2187 = vmatmul.mubr.bf16.gmra.mrb[0].mxu0 %v560
    %v2188 = vpop.f32.mrb[0].mxu0
    %v2189 = vadd.f32 %v837, %v2188
    %v2190 = vpop.f32.mrb[0].mxu0
    %v2191 = vadd.f32 %v841, %v2190
    %v2192 = vpop.f32.mrb[0].mxu0
    %v2193 = vadd.f32 %v837, %v2192
    %v2194 = vpop.f32.mrb[0].mxu0
    %v2195 = vadd.f32 %v841, %v2194
    %2196 = vmatprep.mubr.bf16.mxu0 %v569
    %2197 = vmatmul.mubr.bf16.gmra.mrb[0].mxu0 %v568
    %v2198 = vpop.f32.mrb[0].mxu0
    %v2199 = vadd.f32 %v837, %v2198
    %v2200 = vpop.f32.mrb[0].mxu0
    %v2201 = vadd.f32 %v841, %v2200
    %v2202 = vpop.f32.mrb[0].mxu0
    %v2203 = vadd.f32 %v837, %v2202
    %v2204 = vpop.f32.mrb[0].mxu0
    %v2205 = vadd.f32 %v841, %v2204
    %2206 = vdwg.mxu0
    %2207 = vmatprep.subr.bf16.mxu0 %v1687
    %2208 = vmatpush1.bf16.msra.mxu0 %v1686
    %2209 = vmatprep.subr.bf16.mxu0 %v1691
    %2210 = vmatpush1.bf16.msra.mxu0 %v1690
    %2211 = vmatprep.subr.bf16.mxu0 %v1695
    %2212 = vmatpush1.bf16.msra.mxu0 %v1694
    %2213 = vmatprep.subr.bf16.mxu0 %v1699
    %2214 = vmatpush1.bf16.msra.mxu0 %v1698
    %2215 = vmatprep.subr.bf16.mxu0 %v1703
    %2216 = vmatpush1.bf16.msra.mxu0 %v1702
    %2217 = vmatprep.subr.bf16.mxu0 %v1707
    %2218 = vmatpush1.bf16.msra.mxu0 %v1706
    %2219 = vmatprep.subr.bf16.mxu0 %v1711
    %2220 = vmatpush1.bf16.msra.mxu0 %v1710
    %2221 = vmatprep.subr.bf16.mxu0 %v1715
    %2222 = vmatpush1.bf16.msra.mxu0 %v1714
    %2223 = vmatprep.subr.bf16.mxu0 %v1719
    %2224 = vmatpush1.bf16.msra.mxu0 %v1718
    %2225 = vmatprep.subr.bf16.mxu0 %v1723
    %2226 = vmatpush1.bf16.msra.mxu0 %v1722
    %2227 = vmatprep.subr.bf16.mxu0 %v1727
    %2228 = vmatpush1.bf16.msra.mxu0 %v1726
    %2229 = vmatprep.subr.bf16.mxu0 %v1731
    %2230 = vmatpush1.bf16.msra.mxu0 %v1730
    %2231 = vmatprep.subr.bf16.mxu0 %v1735
    %2232 = vmatpush1.bf16.msra.mxu0 %v1734
    %2233 = vmatprep.subr.bf16.mxu0 %v1739
    %2234 = vmatpush1.bf16.msra.mxu0 %v1738
    %2235 = vmatprep.subr.bf16.mxu0 %v1743
    %2236 = vmatpush1.bf16.msra.mxu0 %v1742
    %2237 = vmatprep.subr.bf16.mxu0 %v1747
    %2238 = vmatpush1.bf16.msra.mxu0 %v1746
    %2239 = vmatprep.mubr.bf16.mxu0 %v547
    %2240 = vmatmul.mubr.bf16.gmra.mrb[0].mxu0 %v546
    %v2241 = vpop.f32.mrb[0].mxu0
    %v2242 = vadd.f32 %v2169, %v2241
    %v2243 = vpop.f32.mrb[0].mxu0
    %v2244 = vadd.f32 %v2171, %v2243
    %v2245 = vpop.f32.mrb[0].mxu0
    %v2246 = vadd.f32 %v2173, %v2245
    %v2247 = vpop.f32.mrb[0].mxu0
    %v2248 = vadd.f32 %v2175, %v2247
    %2249 = vmatprep.mubr.bf16.mxu0 %v555
    %2250 = vmatmul.mubr.bf16.gmra.mrb[0].mxu0 %v554
    %v2251 = vpop.f32.mrb[0].mxu0
    %v2252 = vadd.f32 %v2179, %v2251
    %v2253 = vpop.f32.mrb[0].mxu0
    %v2254 = vadd.f32 %v2181, %v2253
    %v2255 = vpop.f32.mrb[0].mxu0
    %v2256 = vadd.f32 %v2183, %v2255
    %v2257 = vpop.f32.mrb[0].mxu0
    %v2258 = vadd.f32 %v2185, %v2257
    %2259 = vmatprep.mubr.bf16.mxu0 %v563
    %2260 = vmatmul.mubr.bf16.gmra.mrb[0].mxu0 %v562
    %v2261 = vpop.f32.mrb[0].mxu0
    %v2262 = vadd.f32 %v2189, %v2261
    %v2263 = vpop.f32.mrb[0].mxu0
    %v2264 = vadd.f32 %v2191, %v2263
    %v2265 = vpop.f32.mrb[0].mxu0
    %v2266 = vadd.f32 %v2193, %v2265
    %v2267 = vpop.f32.mrb[0].mxu0
    %v2268 = vadd.f32 %v2195, %v2267
    %2269 = vmatprep.mubr.bf16.mxu0 %v571
    %2270 = vmatmul.mubr.bf16.gmra.mrb[0].mxu0 %v570
    %v2271 = vpop.f32.mrb[0].mxu0
    %v2272 = vadd.f32 %v2199, %v2271
    %v2273 = vpop.f32.mrb[0].mxu0
    %v2274 = vadd.f32 %v2201, %v2273
    %v2275 = vpop.f32.mrb[0].mxu0
    %v2276 = vadd.f32 %v2203, %v2275
    %v2277 = vpop.f32.mrb[0].mxu0
    %v2278 = vadd.f32 %v2205, %v2277
    %2279 = vdwg.mxu0
    %2280 = vmatprep.subr.bf16.mxu0 %v1751
    %2281 = vmatpush1.bf16.msra.mxu0 %v1750
    %2282 = vmatprep.subr.bf16.mxu0 %v1755
    %2283 = vmatpush1.bf16.msra.mxu0 %v1754
    %2284 = vmatprep.subr.bf16.mxu0 %v1759
    %2285 = vmatpush1.bf16.msra.mxu0 %v1758
    %2286 = vmatprep.subr.bf16.mxu0 %v1763
    %2287 = vmatpush1.bf16.msra.mxu0 %v1762
    %2288 = vmatprep.subr.bf16.mxu0 %v1767
    %2289 = vmatpush1.bf16.msra.mxu0 %v1766
    %2290 = vmatprep.subr.bf16.mxu0 %v1771
    %2291 = vmatpush1.bf16.msra.mxu0 %v1770
    %2292 = vmatprep.subr.bf16.mxu0 %v1775
    %2293 = vmatpush1.bf16.msra.mxu0 %v1774
    %2294 = vmatprep.subr.bf16.mxu0 %v1779
    %2295 = vmatpush1.bf16.msra.mxu0 %v1778
    %2296 = vmatprep.subr.bf16.mxu0 %v1783
    %2297 = vmatpush1.bf16.msra.mxu0 %v1782
    %2298 = vmatprep.subr.bf16.mxu0 %v1787
    %2299 = vmatpush1.bf16.msra.mxu0 %v1786
    %2300 = vmatprep.subr.bf16.mxu0 %v1791
    %2301 = vmatpush1.bf16.msra.mxu0 %v1790
    %2302 = vmatprep.subr.bf16.mxu0 %v1795
    %2303 = vmatpush1.bf16.msra.mxu0 %v1794
    %2304 = vmatprep.subr.bf16.mxu0 %v1799
    %2305 = vmatpush1.bf16.msra.mxu0 %v1798
    %2306 = vmatprep.subr.bf16.mxu0 %v1803
    %2307 = vmatpush1.bf16.msra.mxu0 %v1802
    %2308 = vmatprep.subr.bf16.mxu0 %v1807
    %2309 = vmatpush1.bf16.msra.mxu0 %v1806
    %2310 = vmatprep.subr.bf16.mxu0 %v1811
    %2311 = vmatpush1.bf16.msra.mxu0 %v1810
    %2312 = vmatprep.mubr.bf16.mxu0 %v549
    %2313 = vmatmul.mubr.bf16.gmra.mrb[0].mxu0 %v548
    %v2314 = vpop.f32.mrb[0].mxu0
    %v2315 = vadd.f32 %v2242, %v2314
    %v2316 = vpop.f32.mrb[0].mxu0
    %v2317 = vadd.f32 %v2244, %v2316
    %v2318 = vpop.f32.mrb[0].mxu0
    %v2319 = vadd.f32 %v2246, %v2318
    %v2320 = vpop.f32.mrb[0].mxu0
    %v2321 = vadd.f32 %v2248, %v2320
    %2322 = vmatprep.mubr.bf16.mxu0 %v557
    %2323 = vmatmul.mubr.bf16.gmra.mrb[0].mxu0 %v556
    %v2324 = vpop.f32.mrb[0].mxu0
    %v2325 = vadd.f32 %v2252, %v2324
    %v2326 = vpop.f32.mrb[0].mxu0
    %v2327 = vadd.f32 %v2254, %v2326
    %v2328 = vpop.f32.mrb[0].mxu0
    %v2329 = vadd.f32 %v2256, %v2328
    %v2330 = vpop.f32.mrb[0].mxu0
    %v2331 = vadd.f32 %v2258, %v2330
    %2332 = vmatprep.mubr.bf16.mxu0 %v565
    %2333 = vmatmul.mubr.bf16.gmra.mrb[0].mxu0 %v564
    %v2334 = vpop.f32.mrb[0].mxu0
    %v2335 = vadd.f32 %v2262, %v2334
    %v2336 = vpop.f32.mrb[0].mxu0
    %v2337 = vadd.f32 %v2264, %v2336
    %v2338 = vpop.f32.mrb[0].mxu0
    %v2339 = vadd.f32 %v2266, %v2338
    %v2340 = vpop.f32.mrb[0].mxu0
    %v2341 = vadd.f32 %v2268, %v2340
    %2342 = vmatprep.mubr.bf16.mxu0 %v573
    %2343 = vmatmul.mubr.bf16.gmra.mrb[0].mxu0 %v572
    %v2344 = vpop.f32.mrb[0].mxu0
    %v2345 = vadd.f32 %v2272, %v2344
    %v2346 = vpop.f32.mrb[0].mxu0
    %v2347 = vadd.f32 %v2274, %v2346
    %v2348 = vpop.f32.mrb[0].mxu0
    %v2349 = vadd.f32 %v2276, %v2348
    %v2350 = vpop.f32.mrb[0].mxu0
    %v2351 = vadd.f32 %v2278, %v2350
    %2352 = vdwg.mxu0
    %2353 = vmatprep.subr.bf16.mxu0 %v1815
    %2354 = vmatpush1.bf16.msra.mxu0 %v1814
    %2355 = vmatprep.subr.bf16.mxu0 %v1819
    %2356 = vmatpush1.bf16.msra.mxu0 %v1818
    %2357 = vmatprep.subr.bf16.mxu0 %v1823
    %2358 = vmatpush1.bf16.msra.mxu0 %v1822
    %2359 = vmatprep.subr.bf16.mxu0 %v1827
    %2360 = vmatpush1.bf16.msra.mxu0 %v1826
    %2361 = vmatprep.subr.bf16.mxu0 %v1831
    %2362 = vmatpush1.bf16.msra.mxu0 %v1830
    %2363 = vmatprep.subr.bf16.mxu0 %v1835
    %2364 = vmatpush1.bf16.msra.mxu0 %v1834
    %2365 = vmatprep.subr.bf16.mxu0 %v1839
    %2366 = vmatpush1.bf16.msra.mxu0 %v1838
    %2367 = vmatprep.subr.bf16.mxu0 %v1843
    %2368 = vmatpush1.bf16.msra.mxu0 %v1842
    %2369 = vmatprep.subr.bf16.mxu0 %v1847
    %2370 = vmatpush1.bf16.msra.mxu0 %v1846
    %2371 = vmatprep.subr.bf16.mxu0 %v1851
    %2372 = vmatpush1.bf16.msra.mxu0 %v1850
    %2373 = vmatprep.subr.bf16.mxu0 %v1855
    %2374 = vmatpush1.bf16.msra.mxu0 %v1854
    %2375 = vmatprep.subr.bf16.mxu0 %v1859
    %2376 = vmatpush1.bf16.msra.mxu0 %v1858
    %2377 = vmatprep.subr.bf16.mxu0 %v1863
    %2378 = vmatpush1.bf16.msra.mxu0 %v1862
    %2379 = vmatprep.subr.bf16.mxu0 %v1867
    %2380 = vmatpush1.bf16.msra.mxu0 %v1866
    %2381 = vmatprep.subr.bf16.mxu0 %v1871
    %2382 = vmatpush1.bf16.msra.mxu0 %v1870
    %2383 = vmatprep.subr.bf16.mxu0 %v1875
    %2384 = vmatpush1.bf16.msra.mxu0 %v1874
    %2385 = vmatprep.mubr.bf16.mxu0 %v551
    %2386 = vmatmul.mubr.bf16.gmra.mrb[0].mxu0 %v550
    %v2387 = vpop.f32.mrb[0].mxu0
    %v2388 = vadd.f32 %v2315, %v2387
    %v2389 = vpop.f32.mrb[0].mxu0
    %v2390 = vadd.f32 %v2317, %v2389
    %v2391 = vpop.f32.mrb[0].mxu0
    %v2392 = vadd.f32 %v2319, %v2391
    %v2393 = vpop.f32.mrb[0].mxu0
    %v2394 = vadd.f32 %v2321, %v2393
    %2395 = vmatprep.mubr.bf16.mxu0 %v559
    %2396 = vmatmul.mubr.bf16.gmra.mrb[0].mxu0 %v558
    %v2397 = vpop.f32.mrb[0].mxu0
    %v2398 = vadd.f32 %v2325, %v2397
    %v2399 = vpop.f32.mrb[0].mxu0
    %v2400 = vadd.f32 %v2327, %v2399
    %v2401 = vpop.f32.mrb[0].mxu0
    %v2402 = vadd.f32 %v2329, %v2401
    %v2403 = vpop.f32.mrb[0].mxu0
    %v2404 = vadd.f32 %v2331, %v2403
    %2405 = vmatprep.mubr.bf16.mxu0 %v567
    %2406 = vmatmul.mubr.bf16.gmra.mrb[0].mxu0 %v566
    %v2407 = vpop.f32.mrb[0].mxu0
    %v2408 = vadd.f32 %v2335, %v2407
    %v2409 = vpop.f32.mrb[0].mxu0
    %v2410 = vadd.f32 %v2337, %v2409
    %v2411 = vpop.f32.mrb[0].mxu0
    %v2412 = vadd.f32 %v2339, %v2411
    %v2413 = vpop.f32.mrb[0].mxu0
    %v2414 = vadd.f32 %v2341, %v2413
    %2415 = vmatprep.mubr.bf16.mxu0 %v575
    %2416 = vmatmul.mubr.bf16.gmra.mrb[0].mxu0 %v574
    %v2417 = vpop.f32.mrb[0].mxu0
    %v2418 = vadd.f32 %v2345, %v2417
    %v2419 = vpop.f32.mrb[0].mxu0
    %v2420 = vadd.f32 %v2347, %v2419
    %v2421 = vpop.f32.mrb[0].mxu0
    %v2422 = vadd.f32 %v2349, %v2421
    %v2423 = vpop.f32.mrb[0].mxu0
    %v2424 = vadd.f32 %v2351, %v2423
    %2425 = vdwg.mxu0
    %2426 = vmatprep.subr.bf16.mxu0 %v1625
    %2427 = vmatpush1.bf16.msra.mxu0 %v1624
    %2428 = vmatprep.subr.bf16.mxu0 %v1629
    %2429 = vmatpush1.bf16.msra.mxu0 %v1628
    %2430 = vmatprep.subr.bf16.mxu0 %v1633
    %2431 = vmatpush1.bf16.msra.mxu0 %v1632
    %2432 = vmatprep.subr.bf16.mxu0 %v1637
    %2433 = vmatpush1.bf16.msra.mxu0 %v1636
    %2434 = vmatprep.subr.bf16.mxu0 %v1641
    %2435 = vmatpush1.bf16.msra.mxu0 %v1640
    %2436 = vmatprep.subr.bf16.mxu0 %v1645
    %2437 = vmatpush1.bf16.msra.mxu0 %v1644
    %2438 = vmatprep.subr.bf16.mxu0 %v1649
    %2439 = vmatpush1.bf16.msra.mxu0 %v1648
    %2440 = vmatprep.subr.bf16.mxu0 %v1653
    %2441 = vmatpush1.bf16.msra.mxu0 %v1652
    %2442 = vmatprep.subr.bf16.mxu0 %v1657
    %2443 = vmatpush1.bf16.msra.mxu0 %v1656
    %2444 = vmatprep.subr.bf16.mxu0 %v1661
    %2445 = vmatpush1.bf16.msra.mxu0 %v1660
    %2446 = vmatprep.subr.bf16.mxu0 %v1665
    %2447 = vmatpush1.bf16.msra.mxu0 %v1664
    %2448 = vmatprep.subr.bf16.mxu0 %v1669
    %2449 = vmatpush1.bf16.msra.mxu0 %v1668
    %2450 = vmatprep.subr.bf16.mxu0 %v1673
    %2451 = vmatpush1.bf16.msra.mxu0 %v1672
    %2452 = vmatprep.subr.bf16.mxu0 %v1677
    %2453 = vmatpush1.bf16.msra.mxu0 %v1676
    %2454 = vmatprep.subr.bf16.mxu0 %v1681
    %2455 = vmatpush1.bf16.msra.mxu0 %v1680
    %2456 = vmatprep.subr.bf16.mxu0 %v1685
    %2457 = vmatpush1.bf16.msra.mxu0 %v1684
    %2458 = vmatprep.mubr.bf16.mxu0 %v545
    %2459 = vmatmul.mubr.bf16.gmra.mrb[0].mxu0 %v544
    %v2460 = vpop.f32.mrb[0].mxu0
    %v2461 = vadd.f32 %v845, %v2460
    %v2462 = vpop.f32.mrb[0].mxu0
    %v2463 = vadd.f32 %v849, %v2462
    %v2464 = vpop.f32.mrb[0].mxu0
    %v2465 = vadd.f32 %v845, %v2464
    %v2466 = vpop.f32.mrb[0].mxu0
    %v2467 = vadd.f32 %v849, %v2466
    %2468 = vmatprep.mubr.bf16.mxu0 %v553
    %2469 = vmatmul.mubr.bf16.gmra.mrb[0].mxu0 %v552
    %v2470 = vpop.f32.mrb[0].mxu0
    %v2471 = vadd.f32 %v845, %v2470
    %v2472 = vpop.f32.mrb[0].mxu0
    %v2473 = vadd.f32 %v849, %v2472
    %v2474 = vpop.f32.mrb[0].mxu0
    %v2475 = vadd.f32 %v845, %v2474
    %v2476 = vpop.f32.mrb[0].mxu0
    %v2477 = vadd.f32 %v849, %v2476
    %2478 = vmatprep.mubr.bf16.mxu0 %v561
    %2479 = vmatmul.mubr.bf16.gmra.mrb[0].mxu0 %v560
    %v2480 = vpop.f32.mrb[0].mxu0
    %v2481 = vadd.f32 %v845, %v2480
    %v2482 = vpop.f32.mrb[0].mxu0
    %v2483 = vadd.f32 %v849, %v2482
    %v2484 = vpop.f32.mrb[0].mxu0
    %v2485 = vadd.f32 %v845, %v2484
    %v2486 = vpop.f32.mrb[0].mxu0
    %v2487 = vadd.f32 %v849, %v2486
    %2488 = vmatprep.mubr.bf16.mxu0 %v569
    %2489 = vmatmul.mubr.bf16.gmra.mrb[0].mxu0 %v568
    %v2490 = vpop.f32.mrb[0].mxu0
    %v2491 = vadd.f32 %v845, %v2490
    %v2492 = vpop.f32.mrb[0].mxu0
    %v2493 = vadd.f32 %v849, %v2492
    %v2494 = vpop.f32.mrb[0].mxu0
    %v2495 = vadd.f32 %v845, %v2494
    %v2496 = vpop.f32.mrb[0].mxu0
    %v2497 = vadd.f32 %v849, %v2496
    %2498 = vdwg.mxu0
    %2499 = vmatprep.subr.bf16.mxu0 %v1689
    %2500 = vmatpush1.bf16.msra.mxu0 %v1688
    %2501 = vmatprep.subr.bf16.mxu0 %v1693
    %2502 = vmatpush1.bf16.msra.mxu0 %v1692
    %2503 = vmatprep.subr.bf16.mxu0 %v1697
    %2504 = vmatpush1.bf16.msra.mxu0 %v1696
    %2505 = vmatprep.subr.bf16.mxu0 %v1701
    %2506 = vmatpush1.bf16.msra.mxu0 %v1700
    %2507 = vmatprep.subr.bf16.mxu0 %v1705
    %2508 = vmatpush1.bf16.msra.mxu0 %v1704
    %2509 = vmatprep.subr.bf16.mxu0 %v1709
    %2510 = vmatpush1.bf16.msra.mxu0 %v1708
    %2511 = vmatprep.subr.bf16.mxu0 %v1713
    %2512 = vmatpush1.bf16.msra.mxu0 %v1712
    %2513 = vmatprep.subr.bf16.mxu0 %v1717
    %2514 = vmatpush1.bf16.msra.mxu0 %v1716
    %2515 = vmatprep.subr.bf16.mxu0 %v1721
    %2516 = vmatpush1.bf16.msra.mxu0 %v1720
    %2517 = vmatprep.subr.bf16.mxu0 %v1725
    %2518 = vmatpush1.bf16.msra.mxu0 %v1724
    %2519 = vmatprep.subr.bf16.mxu0 %v1729
    %2520 = vmatpush1.bf16.msra.mxu0 %v1728
    %2521 = vmatprep.subr.bf16.mxu0 %v1733
    %2522 = vmatpush1.bf16.msra.mxu0 %v1732
    %2523 = vmatprep.subr.bf16.mxu0 %v1737
    %2524 = vmatpush1.bf16.msra.mxu0 %v1736
    %2525 = vmatprep.subr.bf16.mxu0 %v1741
    %2526 = vmatpush1.bf16.msra.mxu0 %v1740
    %2527 = vmatprep.subr.bf16.mxu0 %v1745
    %2528 = vmatpush1.bf16.msra.mxu0 %v1744
    %2529 = vmatprep.subr.bf16.mxu0 %v1749
    %2530 = vmatpush1.bf16.msra.mxu0 %v1748
    %2531 = vmatprep.mubr.bf16.mxu0 %v547
    %2532 = vmatmul.mubr.bf16.gmra.mrb[0].mxu0 %v546
    %v2533 = vpop.f32.mrb[0].mxu0
    %v2534 = vadd.f32 %v2461, %v2533
    %v2535 = vpop.f32.mrb[0].mxu0
    %v2536 = vadd.f32 %v2463, %v2535
    %v2537 = vpop.f32.mrb[0].mxu0
    %v2538 = vadd.f32 %v2465, %v2537
    %v2539 = vpop.f32.mrb[0].mxu0
    %v2540 = vadd.f32 %v2467, %v2539
    %2541 = vmatprep.mubr.bf16.mxu0 %v555
    %2542 = vmatmul.mubr.bf16.gmra.mrb[0].mxu0 %v554
    %v2543 = vpop.f32.mrb[0].mxu0
    %v2544 = vadd.f32 %v2471, %v2543
    %v2545 = vpop.f32.mrb[0].mxu0
    %v2546 = vadd.f32 %v2473, %v2545
    %v2547 = vpop.f32.mrb[0].mxu0
    %v2548 = vadd.f32 %v2475, %v2547
    %v2549 = vpop.f32.mrb[0].mxu0
    %v2550 = vadd.f32 %v2477, %v2549
    %2551 = vmatprep.mubr.bf16.mxu0 %v563
    %2552 = vmatmul.mubr.bf16.gmra.mrb[0].mxu0 %v562
    %v2553 = vpop.f32.mrb[0].mxu0
    %v2554 = vadd.f32 %v2481, %v2553
    %v2555 = vpop.f32.mrb[0].mxu0
    %v2556 = vadd.f32 %v2483, %v2555
    %v2557 = vpop.f32.mrb[0].mxu0
    %v2558 = vadd.f32 %v2485, %v2557
    %v2559 = vpop.f32.mrb[0].mxu0
    %v2560 = vadd.f32 %v2487, %v2559
    %2561 = vmatprep.mubr.bf16.mxu0 %v571
    %2562 = vmatmul.mubr.bf16.gmra.mrb[0].mxu0 %v570
    %v2563 = vpop.f32.mrb[0].mxu0
    %v2564 = vadd.f32 %v2491, %v2563
    %v2565 = vpop.f32.mrb[0].mxu0
    %v2566 = vadd.f32 %v2493, %v2565
    %v2567 = vpop.f32.mrb[0].mxu0
    %v2568 = vadd.f32 %v2495, %v2567
    %v2569 = vpop.f32.mrb[0].mxu0
    %v2570 = vadd.f32 %v2497, %v2569
    %2571 = vdwg.mxu0
    %2572 = vmatprep.subr.bf16.mxu0 %v1753
    %2573 = vmatpush1.bf16.msra.mxu0 %v1752
    %2574 = vmatprep.subr.bf16.mxu0 %v1757
    %2575 = vmatpush1.bf16.msra.mxu0 %v1756
    %2576 = vmatprep.subr.bf16.mxu0 %v1761
    %2577 = vmatpush1.bf16.msra.mxu0 %v1760
    %2578 = vmatprep.subr.bf16.mxu0 %v1765
    %2579 = vmatpush1.bf16.msra.mxu0 %v1764
    %2580 = vmatprep.subr.bf16.mxu0 %v1769
    %2581 = vmatpush1.bf16.msra.mxu0 %v1768
    %2582 = vmatprep.subr.bf16.mxu0 %v1773
    %2583 = vmatpush1.bf16.msra.mxu0 %v1772
    %2584 = vmatprep.subr.bf16.mxu0 %v1777
    %2585 = vmatpush1.bf16.msra.mxu0 %v1776
    %2586 = vmatprep.subr.bf16.mxu0 %v1781
    %2587 = vmatpush1.bf16.msra.mxu0 %v1780
    %2588 = vmatprep.subr.bf16.mxu0 %v1785
    %2589 = vmatpush1.bf16.msra.mxu0 %v1784
    %2590 = vmatprep.subr.bf16.mxu0 %v1789
    %2591 = vmatpush1.bf16.msra.mxu0 %v1788
    %2592 = vmatprep.subr.bf16.mxu0 %v1793
    %2593 = vmatpush1.bf16.msra.mxu0 %v1792
    %2594 = vmatprep.subr.bf16.mxu0 %v1797
    %2595 = vmatpush1.bf16.msra.mxu0 %v1796
    %2596 = vmatprep.subr.bf16.mxu0 %v1801
    %2597 = vmatpush1.bf16.msra.mxu0 %v1800
    %2598 = vmatprep.subr.bf16.mxu0 %v1805
    %2599 = vmatpush1.bf16.msra.mxu0 %v1804
    %2600 = vmatprep.subr.bf16.mxu0 %v1809
    %2601 = vmatpush1.bf16.msra.mxu0 %v1808
    %2602 = vmatprep.subr.bf16.mxu0 %v1813
    %2603 = vmatpush1.bf16.msra.mxu0 %v1812
    %2604 = vmatprep.mubr.bf16.mxu0 %v549
    %2605 = vmatmul.mubr.bf16.gmra.mrb[0].mxu0 %v548
    %v2606 = vpop.f32.mrb[0].mxu0
    %v2607 = vadd.f32 %v2534, %v2606
    %v2608 = vpop.f32.mrb[0].mxu0
    %v2609 = vadd.f32 %v2536, %v2608
    %v2610 = vpop.f32.mrb[0].mxu0
    %v2611 = vadd.f32 %v2538, %v2610
    %v2612 = vpop.f32.mrb[0].mxu0
    %v2613 = vadd.f32 %v2540, %v2612
    %2614 = vmatprep.mubr.bf16.mxu0 %v557
    %2615 = vmatmul.mubr.bf16.gmra.mrb[0].mxu0 %v556
    %v2616 = vpop.f32.mrb[0].mxu0
    %v2617 = vadd.f32 %v2544, %v2616
    %v2618 = vpop.f32.mrb[0].mxu0
    %v2619 = vadd.f32 %v2546, %v2618
    %v2620 = vpop.f32.mrb[0].mxu0
    %v2621 = vadd.f32 %v2548, %v2620
    %v2622 = vpop.f32.mrb[0].mxu0
    %v2623 = vadd.f32 %v2550, %v2622
    %2624 = vmatprep.mubr.bf16.mxu0 %v565
    %2625 = vmatmul.mubr.bf16.gmra.mrb[0].mxu0 %v564
    %v2626 = vpop.f32.mrb[0].mxu0
    %v2627 = vadd.f32 %v2554, %v2626
    %v2628 = vpop.f32.mrb[0].mxu0
    %v2629 = vadd.f32 %v2556, %v2628
    %v2630 = vpop.f32.mrb[0].mxu0
    %v2631 = vadd.f32 %v2558, %v2630
    %v2632 = vpop.f32.mrb[0].mxu0
    %v2633 = vadd.f32 %v2560, %v2632
    %2634 = vmatprep.mubr.bf16.mxu0 %v573
    %2635 = vmatmul.mubr.bf16.gmra.mrb[0].mxu0 %v572
    %v2636 = vpop.f32.mrb[0].mxu0
    %v2637 = vadd.f32 %v2564, %v2636
    %v2638 = vpop.f32.mrb[0].mxu0
    %v2639 = vadd.f32 %v2566, %v2638
    %v2640 = vpop.f32.mrb[0].mxu0
    %v2641 = vadd.f32 %v2568, %v2640
    %v2642 = vpop.f32.mrb[0].mxu0
    %v2643 = vadd.f32 %v2570, %v2642
    %2644 = vdwg.mxu0
    %2645 = vmatprep.subr.bf16.mxu0 %v1817
    %2646 = vmatpush1.bf16.msra.mxu0 %v1816
    %2647 = vmatprep.subr.bf16.mxu0 %v1821
    %2648 = vmatpush1.bf16.msra.mxu0 %v1820
    %2649 = vmatprep.subr.bf16.mxu0 %v1825
    %2650 = vmatpush1.bf16.msra.mxu0 %v1824
    %2651 = vmatprep.subr.bf16.mxu0 %v1829
    %2652 = vmatpush1.bf16.msra.mxu0 %v1828
    %2653 = vmatprep.subr.bf16.mxu0 %v1833
    %2654 = vmatpush1.bf16.msra.mxu0 %v1832
    %2655 = vmatprep.subr.bf16.mxu0 %v1837
    %2656 = vmatpush1.bf16.msra.mxu0 %v1836
    %2657 = vmatprep.subr.bf16.mxu0 %v1841
    %2658 = vmatpush1.bf16.msra.mxu0 %v1840
    %2659 = vmatprep.subr.bf16.mxu0 %v1845
    %2660 = vmatpush1.bf16.msra.mxu0 %v1844
    %2661 = vmatprep.subr.bf16.mxu0 %v1849
    %2662 = vmatpush1.bf16.msra.mxu0 %v1848
    %2663 = vmatprep.subr.bf16.mxu0 %v1853
    %2664 = vmatpush1.bf16.msra.mxu0 %v1852
    %2665 = vmatprep.subr.bf16.mxu0 %v1857
    %2666 = vmatpush1.bf16.msra.mxu0 %v1856
    %2667 = vmatprep.subr.bf16.mxu0 %v1861
    %2668 = vmatpush1.bf16.msra.mxu0 %v1860
    %2669 = vmatprep.subr.bf16.mxu0 %v1865
    %2670 = vmatpush1.bf16.msra.mxu0 %v1864
    %2671 = vmatprep.subr.bf16.mxu0 %v1869
    %2672 = vmatpush1.bf16.msra.mxu0 %v1868
    %2673 = vmatprep.subr.bf16.mxu0 %v1873
    %2674 = vmatpush1.bf16.msra.mxu0 %v1872
    %2675 = vmatprep.subr.bf16.mxu0 %v1877
    %2676 = vmatpush1.bf16.msra.mxu0 %v1876
    %2677 = vmatprep.mubr.bf16.mxu0 %v551
    %2678 = vmatmul.mubr.bf16.gmra.mrb[0].mxu0 %v550
    %v2679 = vpop.f32.mrb[0].mxu0
    %v2680 = vadd.f32 %v2607, %v2679
    %v2681 = vpop.f32.mrb[0].mxu0
    %v2682 = vadd.f32 %v2609, %v2681
    %v2683 = vpop.f32.mrb[0].mxu0
    %v2684 = vadd.f32 %v2611, %v2683
    %v2685 = vpop.f32.mrb[0].mxu0
    %v2686 = vadd.f32 %v2613, %v2685
    %2687 = vmatprep.mubr.bf16.mxu0 %v559
    %2688 = vmatmul.mubr.bf16.gmra.mrb[0].mxu0 %v558
    %v2689 = vpop.f32.mrb[0].mxu0
    %v2690 = vadd.f32 %v2617, %v2689
    %v2691 = vpop.f32.mrb[0].mxu0
    %v2692 = vadd.f32 %v2619, %v2691
    %v2693 = vpop.f32.mrb[0].mxu0
    %v2694 = vadd.f32 %v2621, %v2693
    %v2695 = vpop.f32.mrb[0].mxu0
    %v2696 = vadd.f32 %v2623, %v2695
    %2697 = vmatprep.mubr.bf16.mxu0 %v567
    %2698 = vmatmul.mubr.bf16.gmra.mrb[0].mxu0 %v566
    %v2699 = vpop.f32.mrb[0].mxu0
    %v2700 = vadd.f32 %v2627, %v2699
    %v2701 = vpop.f32.mrb[0].mxu0
    %v2702 = vadd.f32 %v2629, %v2701
    %v2703 = vpop.f32.mrb[0].mxu0
    %v2704 = vadd.f32 %v2631, %v2703
    %v2705 = vpop.f32.mrb[0].mxu0
    %v2706 = vadd.f32 %v2633, %v2705
    %2707 = vmatprep.mubr.bf16.mxu0 %v575
    %2708 = vmatmul.mubr.bf16.gmra.mrb[0].mxu0 %v574
    %v2709 = vpop.f32.mrb[0].mxu0
    %v2710 = vadd.f32 %v2637, %v2709
    %v2711 = vpop.f32.mrb[0].mxu0
    %v2712 = vadd.f32 %v2639, %v2711
    %v2713 = vpop.f32.mrb[0].mxu0
    %v2714 = vadd.f32 %v2641, %v2713
    %v2715 = vpop.f32.mrb[0].mxu0
    %v2716 = vadd.f32 %v2643, %v2715
    %2717 = vdwg.mxu0
    %v2718 = vmax.f32 %v2388, 0.0
    %v2719 = vmax.f32 %v2390, 0.0
    %v2720 = vmax.f32 %v2680, 0.0
    %v2721 = vmax.f32 %v2682, 0.0
    %v2722 = vmax.f32 %v2392, 0.0
    %v2723 = vmax.f32 %v2394, 0.0
    %v2724 = vmax.f32 %v2684, 0.0
    %v2725 = vmax.f32 %v2686, 0.0
    %v2726 = vmax.f32 %v2398, 0.0
    %v2727 = vmax.f32 %v2400, 0.0
    %v2728 = vmax.f32 %v2690, 0.0
    %v2729 = vmax.f32 %v2692, 0.0
    %v2730 = vmax.f32 %v2402, 0.0
    %v2731 = vmax.f32 %v2404, 0.0
    %v2732 = vmax.f32 %v2694, 0.0
    %v2733 = vmax.f32 %v2696, 0.0
    %v2734 = vmax.f32 %v2408, 0.0
    %v2735 = vmax.f32 %v2410, 0.0
    %v2736 = vmax.f32 %v2700, 0.0
    %v2737 = vmax.f32 %v2702, 0.0
    %v2738 = vmax.f32 %v2412, 0.0
    %v2739 = vmax.f32 %v2414, 0.0
    %v2740 = vmax.f32 %v2704, 0.0
    %v2741 = vmax.f32 %v2706, 0.0
    %v2742 = vmax.f32 %v2418, 0.0
    %v2743 = vmax.f32 %v2420, 0.0
    %v2744 = vmax.f32 %v2710, 0.0
    %v2745 = vmax.f32 %v2712, 0.0
    %v2746 = vmax.f32 %v2422, 0.0
    %v2747 = vmax.f32 %v2424, 0.0
    %v2748 = vmax.f32 %v2714, 0.0
    %v2749 = vmax.f32 %v2716, 0.0
    %v2750 = vpack.c.bf16 %v2722, %v2718
    %v2751 = vpack.c.bf16 %v2723, %v2719
    %v2752 = vpack.c.bf16 %v2724, %v2720
    %v2753 = vpack.c.bf16 %v2725, %v2721
    %v2754 = vpack.c.bf16 %v2730, %v2726
    %v2755 = vpack.c.bf16 %v2731, %v2727
    %v2756 = vpack.c.bf16 %v2732, %v2728
    %v2757 = vpack.c.bf16 %v2733, %v2729
    %v2758 = vpack.c.bf16 %v2738, %v2734
    %v2759 = vpack.c.bf16 %v2739, %v2735
    %v2760 = vpack.c.bf16 %v2740, %v2736
    %v2761 = vpack.c.bf16 %v2741, %v2737
    %v2762 = vpack.c.bf16 %v2746, %v2742
    %v2763 = vpack.c.bf16 %v2747, %v2743
    %v2764 = vpack.c.bf16 %v2748, %v2744
    %v2765 = vpack.c.bf16 %v2749, %v2745
    %v2766 = vld [vmem:[%s4] sm:$0xf]
    %v2767 = vld [vmem:[%s4 + $0x4] sm:$0xf]
    %v2768 = vld [vmem:[%s4 + $0x8] sm:$0xf]
    %v2769 = vld [vmem:[%s4 + $0xc] sm:$0xf]
    %v2770 = vld [vmem:[%s4 + $0x10] sm:$0xf]
    %v2771 = vld [vmem:[%s4 + $0x14] sm:$0xf]
    %v2772 = vld [vmem:[%s4 + $0x18] sm:$0xf]
    %v2773 = vld [vmem:[%s4 + $0x1c] sm:$0xf]
    %v2774 = vld [vmem:[%s4 + $0x20] sm:$0xf]
    %v2775 = vld [vmem:[%s4 + $0x24] sm:$0xf]
    %v2776 = vld [vmem:[%s4 + $0x28] sm:$0xf]
    %v2777 = vld [vmem:[%s4 + $0x2c] sm:$0xf]
    %v2778 = vld [vmem:[%s4 + $0x30] sm:$0xf]
    %v2779 = vld [vmem:[%s4 + $0x34] sm:$0xf]
    %v2780 = vld [vmem:[%s4 + $0x38] sm:$0xf]
    %v2781 = vld [vmem:[%s4 + $0x3c] sm:$0xf]
    %v2782 = vld [vmem:[%s4 + $0x40] sm:$0xf]
    %v2783 = vld [vmem:[%s4 + $0x44] sm:$0xf]
    %v2784 = vld [vmem:[%s4 + $0x48] sm:$0xf]
    %v2785 = vld [vmem:[%s4 + $0x4c] sm:$0xf]
    %v2786 = vld [vmem:[%s4 + $0x50] sm:$0xf]
    %v2787 = vld [vmem:[%s4 + $0x54] sm:$0xf]
    %v2788 = vld [vmem:[%s4 + $0x58] sm:$0xf]
    %v2789 = vld [vmem:[%s4 + $0x5c] sm:$0xf]
    %v2790 = vld [vmem:[%s4 + $0x60] sm:$0xf]
    %v2791 = vld [vmem:[%s4 + $0x64] sm:$0xf]
    %v2792 = vld [vmem:[%s4 + $0x68] sm:$0xf]
    %v2793 = vld [vmem:[%s4 + $0x6c] sm:$0xf]
    %v2794 = vld [vmem:[%s4 + $0x70] sm:$0xf]
    %v2795 = vld [vmem:[%s4 + $0x74] sm:$0xf]
    %v2796 = vld [vmem:[%s4 + $0x78] sm:$0xf]
    %v2797 = vld [vmem:[%s4 + $0x7c] sm:$0xf]
    %v2798 = vld [vmem:[%s4 + $0x80] sm:$0xf]
    %v2799 = vld [vmem:[%s4 + $0x84] sm:$0xf]
    %v2800 = vld [vmem:[%s4 + $0x88] sm:$0xf]
    %v2801 = vld [vmem:[%s4 + $0x8c] sm:$0xf]
    %v2802 = vld [vmem:[%s4 + $0x90] sm:$0xf]
    %v2803 = vld [vmem:[%s4 + $0x94] sm:$0xf]
    %v2804 = vld [vmem:[%s4 + $0x98] sm:$0xf]
    %v2805 = vld [vmem:[%s4 + $0x9c] sm:$0xf]
    %v2806 = vld [vmem:[%s4 + $0xa0] sm:$0xf]
    %v2807 = vld [vmem:[%s4 + $0xa4] sm:$0xf]
    %v2808 = vld [vmem:[%s4 + $0xa8] sm:$0xf]
    %v2809 = vld [vmem:[%s4 + $0xac] sm:$0xf]
    %v2810 = vld [vmem:[%s4 + $0xb0] sm:$0xf]
    %v2811 = vld [vmem:[%s4 + $0xb4] sm:$0xf]
    %v2812 = vld [vmem:[%s4 + $0xb8] sm:$0xf]
    %v2813 = vld [vmem:[%s4 + $0xbc] sm:$0xf]
    %v2814 = vld [vmem:[%s4 + $0xc0] sm:$0xf]
    %v2815 = vld [vmem:[%s4 + $0xc4] sm:$0xf]
    %v2816 = vld [vmem:[%s4 + $0xc8] sm:$0xf]
    %v2817 = vld [vmem:[%s4 + $0xcc] sm:$0xf]
    %v2818 = vld [vmem:[%s4 + $0xd0] sm:$0xf]
    %v2819 = vld [vmem:[%s4 + $0xd4] sm:$0xf]
    %v2820 = vld [vmem:[%s4 + $0xd8] sm:$0xf]
    %v2821 = vld [vmem:[%s4 + $0xdc] sm:$0xf]
    %v2822 = vld [vmem:[%s4 + $0xe0] sm:$0xf]
    %v2823 = vld [vmem:[%s4 + $0xe4] sm:$0xf]
    %v2824 = vld [vmem:[%s4 + $0xe8] sm:$0xf]
    %v2825 = vld [vmem:[%s4 + $0xec] sm:$0xf]
    %v2826 = vld [vmem:[%s4 + $0xf0] sm:$0xf]
    %v2827 = vld [vmem:[%s4 + $0xf4] sm:$0xf]
    %v2828 = vld [vmem:[%s4 + $0xf8] sm:$0xf]
    %v2829 = vld [vmem:[%s4 + $0xfc] sm:$0xf]
    %v2830 = vld [vmem:[%s11 + $0xc] sm:$0x1]
    %v2832 = vlaneseq
    %v2833 = vshrl.u32 %v2832, 7
    %v2834 = vsub.s32 0, %v2833
    %v2835 = vrot.slane %v2830, %v2834
    %v2901 = vunpack.c.l.b16 %v2766
    %v2902 = vunpack.c.l.b16 %v2767
    %v2903 = vunpack.c.l.b16 %v2768
    %v2904 = vunpack.c.l.b16 %v2769
    %v2905 = vunpack.c.l.b16 %v2770
    %v2906 = vunpack.c.l.b16 %v2771
    %v2907 = vunpack.c.l.b16 %v2772
    %v2908 = vunpack.c.l.b16 %v2773
    %v2909 = vunpack.c.l.b16 %v2774
    %v2910 = vunpack.c.l.b16 %v2775
    %v2911 = vunpack.c.l.b16 %v2776
    %v2912 = vunpack.c.l.b16 %v2777
    %v2913 = vunpack.c.l.b16 %v2778
    %v2914 = vunpack.c.l.b16 %v2779
    %v2915 = vunpack.c.l.b16 %v2780
    %v2916 = vunpack.c.l.b16 %v2781
    %v2917 = vunpack.c.l.b16 %v2782
    %v2918 = vunpack.c.l.b16 %v2783
    %v2919 = vunpack.c.l.b16 %v2784
    %v2920 = vunpack.c.l.b16 %v2785
    %v2921 = vunpack.c.l.b16 %v2786
    %v2922 = vunpack.c.l.b16 %v2787
    %v2923 = vunpack.c.l.b16 %v2788
    %v2924 = vunpack.c.l.b16 %v2789
    %v2925 = vunpack.c.l.b16 %v2790
    %v2926 = vunpack.c.l.b16 %v2791
    %v2927 = vunpack.c.l.b16 %v2792
    %v2928 = vunpack.c.l.b16 %v2793
    %v2929 = vunpack.c.l.b16 %v2794
    %v2930 = vunpack.c.l.b16 %v2795
    %v2931 = vunpack.c.l.b16 %v2796
    %v2932 = vunpack.c.l.b16 %v2797
    %v2933 = vunpack.c.l.b16 %v2798
    %v2934 = vunpack.c.l.b16 %v2799
    %v2935 = vunpack.c.l.b16 %v2800
    %v2936 = vunpack.c.l.b16 %v2801
    %v2937 = vunpack.c.l.b16 %v2802
    %v2938 = vunpack.c.l.b16 %v2803
    %v2939 = vunpack.c.l.b16 %v2804
    %v2940 = vunpack.c.l.b16 %v2805
    %v2941 = vunpack.c.l.b16 %v2806
    %v2942 = vunpack.c.l.b16 %v2807
    %v2943 = vunpack.c.l.b16 %v2808
    %v2944 = vunpack.c.l.b16 %v2809
    %v2945 = vunpack.c.l.b16 %v2810
    %v2946 = vunpack.c.l.b16 %v2811
    %v2947 = vunpack.c.l.b16 %v2812
    %v2948 = vunpack.c.l.b16 %v2813
    %v2949 = vunpack.c.l.b16 %v2814
    %v2950 = vunpack.c.l.b16 %v2815
    %v2951 = vunpack.c.l.b16 %v2816
    %v2952 = vunpack.c.l.b16 %v2817
    %v2953 = vunpack.c.l.b16 %v2818
    %v2954 = vunpack.c.l.b16 %v2819
    %v2955 = vunpack.c.l.b16 %v2820
    %v2956 = vunpack.c.l.b16 %v2821
    %v2957 = vunpack.c.l.b16 %v2822
    %v2958 = vunpack.c.l.b16 %v2823
    %v2959 = vunpack.c.l.b16 %v2824
    %v2960 = vunpack.c.l.b16 %v2825
    %v2961 = vunpack.c.l.b16 %v2826
    %v2962 = vunpack.c.l.b16 %v2827
    %v2963 = vunpack.c.l.b16 %v2828
    %v2964 = vunpack.c.l.b16 %v2829
    %v2965 = vpack.c.b16 %v2902, %v2901
    %v2966 = vpack.c.b16 %v2904, %v2903
    %v2967 = vpack.c.b16 %v2906, %v2905
    %v2968 = vpack.c.b16 %v2908, %v2907
    %v2969 = vpack.c.b16 %v2910, %v2909
    %v2970 = vpack.c.b16 %v2912, %v2911
    %v2971 = vpack.c.b16 %v2914, %v2913
    %v2972 = vpack.c.b16 %v2916, %v2915
    %v2973 = vpack.c.b16 %v2918, %v2917
    %v2974 = vpack.c.b16 %v2920, %v2919
    %v2975 = vpack.c.b16 %v2922, %v2921
    %v2976 = vpack.c.b16 %v2924, %v2923
    %v2977 = vpack.c.b16 %v2926, %v2925
    %v2978 = vpack.c.b16 %v2928, %v2927
    %v2979 = vpack.c.b16 %v2930, %v2929
    %v2980 = vpack.c.b16 %v2932, %v2931
    %v2981 = vpack.c.b16 %v2934, %v2933
    %v2982 = vpack.c.b16 %v2936, %v2935
    %v2983 = vpack.c.b16 %v2938, %v2937
    %v2984 = vpack.c.b16 %v2940, %v2939
    %v2985 = vpack.c.b16 %v2942, %v2941
    %v2986 = vpack.c.b16 %v2944, %v2943
    %v2987 = vpack.c.b16 %v2946, %v2945
    %v2988 = vpack.c.b16 %v2948, %v2947
    %v2989 = vpack.c.b16 %v2950, %v2949
    %v2990 = vpack.c.b16 %v2952, %v2951
    %v2991 = vpack.c.b16 %v2954, %v2953
    %v2992 = vpack.c.b16 %v2956, %v2955
    %v2993 = vpack.c.b16 %v2958, %v2957
    %v2994 = vpack.c.b16 %v2960, %v2959
    %v2995 = vpack.c.b16 %v2962, %v2961
    %v2996 = vpack.c.b16 %v2964, %v2963
    %3029 = vmatprep.subr.bf16.mxu0 0
    %3030 = vmatpush1.bf16.msra.mxu0 %v2965
    %3031 = vmatprep.subr.bf16.mxu0 0
    %3032 = vmatpush1.bf16.msra.mxu0 %v2966
    %3033 = vmatprep.subr.bf16.mxu0 0
    %3034 = vmatpush1.bf16.msra.mxu0 %v2967
    %3035 = vmatprep.subr.bf16.mxu0 0
    %3036 = vmatpush1.bf16.msra.mxu0 %v2968
    %3037 = vmatprep.subr.bf16.mxu0 0
    %3038 = vmatpush1.bf16.msra.mxu0 %v2969
    %3039 = vmatprep.subr.bf16.mxu0 0
    %3040 = vmatpush1.bf16.msra.mxu0 %v2970
    %3041 = vmatprep.subr.bf16.mxu0 0
    %3042 = vmatpush1.bf16.msra.mxu0 %v2971
    %3043 = vmatprep.subr.bf16.mxu0 0
    %3044 = vmatpush1.bf16.msra.mxu0 %v2972
    %3045 = vmatprep.subr.bf16.mxu0 0
    %3046 = vmatpush1.bf16.msra.mxu0 %v2973
    %3047 = vmatprep.subr.bf16.mxu0 0
    %3048 = vmatpush1.bf16.msra.mxu0 %v2974
    %3049 = vmatprep.subr.bf16.mxu0 0
    %3050 = vmatpush1.bf16.msra.mxu0 %v2975
    %3051 = vmatprep.subr.bf16.mxu0 0
    %3052 = vmatpush1.bf16.msra.mxu0 %v2976
    %3053 = vmatprep.subr.bf16.mxu0 0
    %3054 = vmatpush1.bf16.msra.mxu0 %v2977
    %3055 = vmatprep.subr.bf16.mxu0 0
    %3056 = vmatpush1.bf16.msra.mxu0 %v2978
    %3057 = vmatprep.subr.bf16.mxu0 0
    %3058 = vmatpush1.bf16.msra.mxu0 %v2979
    %3059 = vmatprep.subr.bf16.mxu0 0
    %3060 = vmatpush1.bf16.msra.mxu0 %v2980
    %3061 = vmatprep.mubr.bf16.mxu0 %v2751
    %3062 = vmatmul.mubr.bf16.gmra.mrb[0].mxu0 %v2750
    %v3063 = vpop.f32.mrb[0].mxu0
    %v3064 = vadd.f32 %v2835, %v3063
    %v3065 = vpop.f32.mrb[0].mxu0
    %v3066 = vpop.f32.mrb[0].mxu0
    %v3067 = vadd.f32 %v2835, %v3066
    %v3068 = vpop.f32.mrb[0].mxu0
    %3069 = vmatprep.mubr.bf16.mxu0 %v2755
    %3070 = vmatmul.mubr.bf16.gmra.mrb[0].mxu0 %v2754
    %v3071 = vpop.f32.mrb[0].mxu0
    %v3072 = vadd.f32 %v2835, %v3071
    %v3073 = vpop.f32.mrb[0].mxu0
    %v3074 = vpop.f32.mrb[0].mxu0
    %v3075 = vadd.f32 %v2835, %v3074
    %v3076 = vpop.f32.mrb[0].mxu0
    %3077 = vmatprep.mubr.bf16.mxu0 %v2759
    %3078 = vmatmul.mubr.bf16.gmra.mrb[0].mxu0 %v2758
    %v3079 = vpop.f32.mrb[0].mxu0
    %v3080 = vadd.f32 %v2835, %v3079
    %v3081 = vpop.f32.mrb[0].mxu0
    %v3082 = vpop.f32.mrb[0].mxu0
    %v3083 = vadd.f32 %v2835, %v3082
    %v3084 = vpop.f32.mrb[0].mxu0
    %3085 = vmatprep.mubr.bf16.mxu0 %v2763
    %3086 = vmatmul.mubr.bf16.gmra.mrb[0].mxu0 %v2762
    %v3087 = vpop.f32.mrb[0].mxu0
    %v3088 = vadd.f32 %v2835, %v3087
    %v3089 = vpop.f32.mrb[0].mxu0
    %v3090 = vpop.f32.mrb[0].mxu0
    %v3091 = vadd.f32 %v2835, %v3090
    %v3092 = vpop.f32.mrb[0].mxu0
    %3093 = vdwg.mxu0
    %3094 = vmatprep.subr.bf16.mxu0 0
    %3095 = vmatpush1.bf16.msra.mxu0 %v2981
    %3096 = vmatprep.subr.bf16.mxu0 0
    %3097 = vmatpush1.bf16.msra.mxu0 %v2982
    %3098 = vmatprep.subr.bf16.mxu0 0
    %3099 = vmatpush1.bf16.msra.mxu0 %v2983
    %3100 = vmatprep.subr.bf16.mxu0 0
    %3101 = vmatpush1.bf16.msra.mxu0 %v2984
    %3102 = vmatprep.subr.bf16.mxu0 0
    %3103 = vmatpush1.bf16.msra.mxu0 %v2985
    %3104 = vmatprep.subr.bf16.mxu0 0
    %3105 = vmatpush1.bf16.msra.mxu0 %v2986
    %3106 = vmatprep.subr.bf16.mxu0 0
    %3107 = vmatpush1.bf16.msra.mxu0 %v2987
    %3108 = vmatprep.subr.bf16.mxu0 0
    %3109 = vmatpush1.bf16.msra.mxu0 %v2988
    %3110 = vmatprep.subr.bf16.mxu0 0
    %3111 = vmatpush1.bf16.msra.mxu0 %v2989
    %3112 = vmatprep.subr.bf16.mxu0 0
    %3113 = vmatpush1.bf16.msra.mxu0 %v2990
    %3114 = vmatprep.subr.bf16.mxu0 0
    %3115 = vmatpush1.bf16.msra.mxu0 %v2991
    %3116 = vmatprep.subr.bf16.mxu0 0
    %3117 = vmatpush1.bf16.msra.mxu0 %v2992
    %3118 = vmatprep.subr.bf16.mxu0 0
    %3119 = vmatpush1.bf16.msra.mxu0 %v2993
    %3120 = vmatprep.subr.bf16.mxu0 0
    %3121 = vmatpush1.bf16.msra.mxu0 %v2994
    %3122 = vmatprep.subr.bf16.mxu0 0
    %3123 = vmatpush1.bf16.msra.mxu0 %v2995
    %3124 = vmatprep.subr.bf16.mxu0 0
    %3125 = vmatpush1.bf16.msra.mxu0 %v2996
    %3126 = vmatprep.mubr.bf16.mxu0 %v2753
    %3127 = vmatmul.mubr.bf16.gmra.mrb[0].mxu0 %v2752
    %v3128 = vpop.f32.mrb[0].mxu0
    %v3129 = vadd.f32 %v3064, %v3128
    %v3130 = vpop.f32.mrb[0].mxu0
    %v3131 = vpop.f32.mrb[0].mxu0
    %v3132 = vadd.f32 %v3067, %v3131
    %v3133 = vpop.f32.mrb[0].mxu0
    %3134 = vmatprep.mubr.bf16.mxu0 %v2757
    %3135 = vmatmul.mubr.bf16.gmra.mrb[0].mxu0 %v2756
    %v3136 = vpop.f32.mrb[0].mxu0
    %v3137 = vadd.f32 %v3072, %v3136
    %v3138 = vpop.f32.mrb[0].mxu0
    %v3139 = vpop.f32.mrb[0].mxu0
    %v3140 = vadd.f32 %v3075, %v3139
    %v3141 = vpop.f32.mrb[0].mxu0
    %3142 = vmatprep.mubr.bf16.mxu0 %v2761
    %3143 = vmatmul.mubr.bf16.gmra.mrb[0].mxu0 %v2760
    %v3144 = vpop.f32.mrb[0].mxu0
    %v3145 = vadd.f32 %v3080, %v3144
    %v3146 = vpop.f32.mrb[0].mxu0
    %v3147 = vpop.f32.mrb[0].mxu0
    %v3148 = vadd.f32 %v3083, %v3147
    %v3149 = vpop.f32.mrb[0].mxu0
    %3150 = vmatprep.mubr.bf16.mxu0 %v2765
    %3151 = vmatmul.mubr.bf16.gmra.mrb[0].mxu0 %v2764
    %v3152 = vpop.f32.mrb[0].mxu0
    %v3153 = vadd.f32 %v3088, %v3152
    %v3154 = vpop.f32.mrb[0].mxu0
    %v3155 = vpop.f32.mrb[0].mxu0
    %v3156 = vadd.f32 %v3091, %v3155
    %v3157 = vpop.f32.mrb[0].mxu0
    %3158 = vdwg.mxu0
    %v3159 = vmax.f32 %v3129, 0.0
    %v3160 = vmax.f32 %v3132, 0.0
    %v3161 = vmax.f32 %v3137, 0.0
    %v3162 = vmax.f32 %v3140, 0.0
    %v3163 = vmax.f32 %v3145, 0.0
    %v3164 = vmax.f32 %v3148, 0.0
    %v3165 = vmax.f32 %v3153, 0.0
    %v3166 = vmax.f32 %v3156, 0.0
    %v3167 = vld [vmem:[%s1] sm:$0xff]
    %v3168 = vld [vmem:[%s1 + $0x8] sm:$0xff]
    %v3169 = vld [vmem:[%s1 + $0x10] sm:$0xff]
    %v3170 = vld [vmem:[%s1 + $0x18] sm:$0xff]
    %v3171 = vld [vmem:[%s1 + $0x20] sm:$0xff]
    %v3172 = vld [vmem:[%s1 + $0x28] sm:$0xff]
    %v3173 = vld [vmem:[%s1 + $0x30] sm:$0xff]
    %v3174 = vld [vmem:[%s1 + $0x38] sm:$0xff]
    %v3175 = vpack.c.bf16 %v3168, %v3167
    %v3176 = vpack.c.bf16 %v3170, %v3169
    %v3177 = vpack.c.bf16 %v3172, %v3171
    %v3178 = vpack.c.bf16 %v3174, %v3173
    %v3179 = vld [vmem:[%s5] sm:$0xf]
    %v3180 = vld [vmem:[%s5 + $0x4] sm:$0x1]
    %v3181 = vld [vmem:[%s11 + $0xd] sm:$0x1]
    %v3183 = vlaneseq
    %v3184 = vshrl.u32 %v3183, 7
    %v3185 = vsub.s32 0, %v3184
    %v3186 = vrot.slane %v3181, %v3185
    %v3190 = vunpack.c.l.b16 %v3179
    %v3191 = vunpack.c.l.b16 %v3180
    %v3192 = vpack.c.b16 %v3191, %v3190
    %v3194 = vsel %vm150, %v3175, 0
    %v3197 = vsel %vm150, %v3176, 0
    %v3200 = vsel %vm150, %v3177, 0
    %v3203 = vsel %vm150, %v3178, 0
    %v3206 = vsel %vm163, %v3192, 0
    %3208 = vmatprep.subr.bf16.mxu0 0
    %3209 = vmatpush1.bf16.msra.mxu0 %v3206
    %3210 = vmatprep.subr.bf16.mxu0 0
    %3211 = vmatpush1.bf16.msra.mxu0 0
    %3212 = vmatprep.subr.bf16.mxu0 0
    %3213 = vmatpush1.bf16.msra.mxu0 0
    %3214 = vmatprep.subr.bf16.mxu0 0
    %3215 = vmatpush1.bf16.msra.mxu0 0
    %3216 = vmatprep.subr.bf16.mxu0 0
    %3217 = vmatpush1.bf16.msra.mxu0 0
    %3218 = vmatprep.subr.bf16.mxu0 0
    %3219 = vmatpush1.bf16.msra.mxu0 0
    %3220 = vmatprep.subr.bf16.mxu0 0
    %3221 = vmatpush1.bf16.msra.mxu0 0
    %3222 = vmatprep.subr.bf16.mxu0 0
    %3223 = vmatpush1.bf16.msra.mxu0 0
    %3224 = vmatprep.subr.bf16.mxu0 0
    %3225 = vmatpush1.bf16.msra.mxu0 0
    %3226 = vmatprep.subr.bf16.mxu0 0
    %3227 = vmatpush1.bf16.msra.mxu0 0
    %3228 = vmatprep.subr.bf16.mxu0 0
    %3229 = vmatpush1.bf16.msra.mxu0 0
    %3230 = vmatprep.subr.bf16.mxu0 0
    %3231 = vmatpush1.bf16.msra.mxu0 0
    %3232 = vmatprep.subr.bf16.mxu0 0
    %3233 = vmatpush1.bf16.msra.mxu0 0
    %3234 = vmatprep.subr.bf16.mxu0 0
    %3235 = vmatpush1.bf16.msra.mxu0 0
    %3236 = vmatprep.subr.bf16.mxu0 0
    %3237 = vmatpush1.bf16.msra.mxu0 0
    %3238 = vmatprep.subr.bf16.mxu0 0
    %3239 = vmatpush1.bf16.msra.mxu0 0
    %3240 = vmatprep.mubr.bf16.mxu0 0
    %3241 = vmatmul.mubr.bf16.gmra.mrb[0].mxu0 %v3194
    %v3242 = vpop.f32.mrb[0].mxu0
    %v3243 = vadd.f32 %v3186, %v3242
    %v3244 = vpop.f32.mrb[0].mxu0
    %v3245 = vpop.f32.mrb[0].mxu0
    %v3246 = vadd.f32 %v3186, %v3245
    %v3247 = vpop.f32.mrb[0].mxu0
    %3248 = vmatprep.mubr.bf16.mxu0 0
    %3249 = vmatmul.mubr.bf16.gmra.mrb[0].mxu0 %v3197
    %v3250 = vpop.f32.mrb[0].mxu0
    %v3251 = vadd.f32 %v3186, %v3250
    %v3252 = vpop.f32.mrb[0].mxu0
    %v3253 = vpop.f32.mrb[0].mxu0
    %v3254 = vadd.f32 %v3186, %v3253
    %v3255 = vpop.f32.mrb[0].mxu0
    %3256 = vmatprep.mubr.bf16.mxu0 0
    %3257 = vmatmul.mubr.bf16.gmra.mrb[0].mxu0 %v3200
    %v3258 = vpop.f32.mrb[0].mxu0
    %v3259 = vadd.f32 %v3186, %v3258
    %v3260 = vpop.f32.mrb[0].mxu0
    %v3261 = vpop.f32.mrb[0].mxu0
    %v3262 = vadd.f32 %v3186, %v3261
    %v3263 = vpop.f32.mrb[0].mxu0
    %3264 = vmatprep.mubr.bf16.mxu0 0
    %3265 = vmatmul.mubr.bf16.gmra.mrb[0].mxu0 %v3203
    %v3266 = vpop.f32.mrb[0].mxu0
    %v3267 = vadd.f32 %v3186, %v3266
    %v3268 = vpop.f32.mrb[0].mxu0
    %v3269 = vpop.f32.mrb[0].mxu0
    %v3270 = vadd.f32 %v3186, %v3269
    %v3271 = vpop.f32.mrb[0].mxu0
    %3272 = vdwg.mxu0
    %v3273 = vmax.f32 %v3243, 0.0
    %v3274 = vmax.f32 %v3246, 0.0
    %v3275 = vmax.f32 %v3251, 0.0
    %v3276 = vmax.f32 %v3254, 0.0
    %v3277 = vmax.f32 %v3259, 0.0
    %v3278 = vmax.f32 %v3262, 0.0
    %v3279 = vmax.f32 %v3267, 0.0
    %v3280 = vmax.f32 %v3270, 0.0
    %v3281 = vpack.c.bf16 %v3274, %v3273
    %v3282 = vpack.c.bf16 %v3276, %v3275
    %v3283 = vpack.c.bf16 %v3278, %v3277
    %v3284 = vpack.c.bf16 %v3280, %v3279
    %v3285 = vld [vmem:[%s6] sm:$0xf]
    %v3286 = vld [vmem:[%s6 + $0x4] sm:$0xf]
    %v3287 = vld [vmem:[%s6 + $0x8] sm:$0xf]
    %v3288 = vld [vmem:[%s6 + $0xc] sm:$0xf]
    %v3289 = vld [vmem:[%s6 + $0x10] sm:$0xf]
    %v3290 = vld [vmem:[%s6 + $0x14] sm:$0xf]
    %v3291 = vld [vmem:[%s6 + $0x18] sm:$0xf]
    %v3292 = vld [vmem:[%s6 + $0x1c] sm:$0xf]
    %v3293 = vld [vmem:[%s6 + $0x20] sm:$0xf]
    %v3294 = vld [vmem:[%s6 + $0x24] sm:$0xf]
    %v3295 = vld [vmem:[%s6 + $0x28] sm:$0xf]
    %v3296 = vld [vmem:[%s6 + $0x2c] sm:$0xf]
    %v3297 = vld [vmem:[%s6 + $0x30] sm:$0xf]
    %v3298 = vld [vmem:[%s6 + $0x34] sm:$0xf]
    %v3299 = vld [vmem:[%s6 + $0x38] sm:$0xf]
    %v3300 = vld [vmem:[%s6 + $0x3c] sm:$0xf]
    %v3301 = vld [vmem:[%s11 + $0xe] sm:$0x1]
    %v3303 = vlaneseq
    %v3304 = vshrl.u32 %v3303, 7
    %v3305 = vsub.s32 0, %v3304
    %v3306 = vrot.slane %v3301, %v3305
    %v3324 = vunpack.c.l.b16 %v3285
    %v3325 = vunpack.c.l.b16 %v3286
    %v3326 = vunpack.c.l.b16 %v3287
    %v3327 = vunpack.c.l.b16 %v3288
    %v3328 = vunpack.c.l.b16 %v3289
    %v3329 = vunpack.c.l.b16 %v3290
    %v3330 = vunpack.c.l.b16 %v3291
    %v3331 = vunpack.c.l.b16 %v3292
    %v3332 = vunpack.c.l.b16 %v3293
    %v3333 = vunpack.c.l.b16 %v3294
    %v3334 = vunpack.c.l.b16 %v3295
    %v3335 = vunpack.c.l.b16 %v3296
    %v3336 = vunpack.c.l.b16 %v3297
    %v3337 = vunpack.c.l.b16 %v3298
    %v3338 = vunpack.c.l.b16 %v3299
    %v3339 = vunpack.c.l.b16 %v3300
    %v3340 = vpack.c.b16 %v3325, %v3324
    %v3341 = vpack.c.b16 %v3327, %v3326
    %v3342 = vpack.c.b16 %v3329, %v3328
    %v3343 = vpack.c.b16 %v3331, %v3330
    %v3344 = vpack.c.b16 %v3333, %v3332
    %v3345 = vpack.c.b16 %v3335, %v3334
    %v3346 = vpack.c.b16 %v3337, %v3336
    %v3347 = vpack.c.b16 %v3339, %v3338
    %3356 = vmatprep.subr.bf16.mxu0 0
    %3357 = vmatpush1.bf16.msra.mxu0 %v3340
    %3358 = vmatprep.subr.bf16.mxu0 0
    %3359 = vmatpush1.bf16.msra.mxu0 %v3341
    %3360 = vmatprep.subr.bf16.mxu0 0
    %3361 = vmatpush1.bf16.msra.mxu0 %v3342
    %3362 = vmatprep.subr.bf16.mxu0 0
    %3363 = vmatpush1.bf16.msra.mxu0 %v3343
    %3364 = vmatprep.subr.bf16.mxu0 0
    %3365 = vmatpush1.bf16.msra.mxu0 %v3344
    %3366 = vmatprep.subr.bf16.mxu0 0
    %3367 = vmatpush1.bf16.msra.mxu0 %v3345
    %3368 = vmatprep.subr.bf16.mxu0 0
    %3369 = vmatpush1.bf16.msra.mxu0 %v3346
    %3370 = vmatprep.subr.bf16.mxu0 0
    %3371 = vmatpush1.bf16.msra.mxu0 %v3347
    %3372 = vmatprep.subr.bf16.mxu0 0
    %3373 = vmatpush1.bf16.msra.mxu0 0
    %3374 = vmatprep.subr.bf16.mxu0 0
    %3375 = vmatpush1.bf16.msra.mxu0 0
    %3376 = vmatprep.subr.bf16.mxu0 0
    %3377 = vmatpush1.bf16.msra.mxu0 0
    %3378 = vmatprep.subr.bf16.mxu0 0
    %3379 = vmatpush1.bf16.msra.mxu0 0
    %3380 = vmatprep.subr.bf16.mxu0 0
    %3381 = vmatpush1.bf16.msra.mxu0 0
    %3382 = vmatprep.subr.bf16.mxu0 0
    %3383 = vmatpush1.bf16.msra.mxu0 0
    %3384 = vmatprep.subr.bf16.mxu0 0
    %3385 = vmatpush1.bf16.msra.mxu0 0
    %3386 = vmatprep.subr.bf16.mxu0 0
    %3387 = vmatpush1.bf16.msra.mxu0 0
    %3388 = vmatprep.mubr.bf16.mxu0 0
    %3389 = vmatmul.mubr.bf16.gmra.mrb[0].mxu0 %v3281
    %v3390 = vpop.f32.mrb[0].mxu0
    %v3391 = vadd.f32 %v3306, %v3390
    %v3392 = vpop.f32.mrb[0].mxu0
    %v3393 = vpop.f32.mrb[0].mxu0
    %v3394 = vadd.f32 %v3306, %v3393
    %v3395 = vpop.f32.mrb[0].mxu0
    %3396 = vmatprep.mubr.bf16.mxu0 0
    %3397 = vmatmul.mubr.bf16.gmra.mrb[0].mxu0 %v3282
    %v3398 = vpop.f32.mrb[0].mxu0
    %v3399 = vadd.f32 %v3306, %v3398
    %v3400 = vpop.f32.mrb[0].mxu0
    %v3401 = vpop.f32.mrb[0].mxu0
    %v3402 = vadd.f32 %v3306, %v3401
    %v3403 = vpop.f32.mrb[0].mxu0
    %3404 = vmatprep.mubr.bf16.mxu0 0
    %3405 = vmatmul.mubr.bf16.gmra.mrb[0].mxu0 %v3283
    %v3406 = vpop.f32.mrb[0].mxu0
    %v3407 = vadd.f32 %v3306, %v3406
    %v3408 = vpop.f32.mrb[0].mxu0
    %v3409 = vpop.f32.mrb[0].mxu0
    %v3410 = vadd.f32 %v3306, %v3409
    %v3411 = vpop.f32.mrb[0].mxu0
    %3412 = vmatprep.mubr.bf16.mxu0 0
    %3413 = vmatmul.mubr.bf16.gmra.mrb[0].mxu0 %v3284
    %v3414 = vpop.f32.mrb[0].mxu0
    %v3415 = vadd.f32 %v3306, %v3414
    %v3416 = vpop.f32.mrb[0].mxu0
    %v3417 = vpop.f32.mrb[0].mxu0
    %v3418 = vadd.f32 %v3306, %v3417
    %v3419 = vpop.f32.mrb[0].mxu0
    %3420 = vdwg.mxu0
    %v3421 = vmax.f32 %v3391, 0.0
    %v3422 = vmax.f32 %v3394, 0.0
    %v3423 = vmax.f32 %v3399, 0.0
    %v3424 = vmax.f32 %v3402, 0.0
    %v3425 = vmax.f32 %v3407, 0.0
    %v3426 = vmax.f32 %v3410, 0.0
    %v3427 = vmax.f32 %v3415, 0.0
    %v3428 = vmax.f32 %v3418, 0.0
    %v3429 = vpack.c.bf16 %v3160, %v3159
    %v3430 = vpack.c.bf16 %v3162, %v3161
    %v3431 = vpack.c.bf16 %v3164, %v3163
    %v3432 = vpack.c.bf16 %v3166, %v3165
    %v3433 = vld [vmem:[%s7] sm:$0xff]
    %v3434 = vld [vmem:[%s7 + $0x8] sm:$0xff]
    %v3435 = vld [vmem:[%s7 + $0x10] sm:$0xff]
    %v3436 = vld [vmem:[%s7 + $0x18] sm:$0xff]
    %v3437 = vld [vmem:[%s7 + $0x20] sm:$0xff]
    %v3438 = vld [vmem:[%s7 + $0x28] sm:$0xff]
    %v3439 = vld [vmem:[%s7 + $0x30] sm:$0xff]
    %v3440 = vld [vmem:[%s7 + $0x38] sm:$0xff]
    %v3441 = vpack.c.bf16 %v3422, %v3421
    %v3442 = vpack.c.bf16 %v3424, %v3423
    %v3443 = vpack.c.bf16 %v3426, %v3425
    %v3444 = vpack.c.bf16 %v3428, %v3427
    %v3445 = vld [vmem:[%s8] sm:$0xff]
    %v3446 = vld [vmem:[%s8 + $0x8] sm:$0xff]
    %v3447 = vld [vmem:[%s8 + $0x10] sm:$0xff]
    %v3448 = vld [vmem:[%s8 + $0x18] sm:$0xff]
    %v3449 = vld [vmem:[%s8 + $0x20] sm:$0xff]
    %v3450 = vld [vmem:[%s8 + $0x28] sm:$0xff]
    %v3451 = vld [vmem:[%s8 + $0x30] sm:$0xff]
    %v3452 = vld [vmem:[%s8 + $0x38] sm:$0xff]
    %v3461 = vunpack.c.l.b16 %v3445
    %v3462 = vunpack.c.h.b16 %v3445
    %v3463 = vunpack.c.l.b16 %v3446
    %v3464 = vunpack.c.h.b16 %v3446
    %v3465 = vunpack.c.l.b16 %v3447
    %v3466 = vunpack.c.h.b16 %v3447
    %v3467 = vunpack.c.l.b16 %v3448
    %v3468 = vunpack.c.h.b16 %v3448
    %v3469 = vunpack.c.l.b16 %v3449
    %v3470 = vunpack.c.h.b16 %v3449
    %v3471 = vunpack.c.l.b16 %v3450
    %v3472 = vunpack.c.h.b16 %v3450
    %v3473 = vunpack.c.l.b16 %v3451
    %v3474 = vunpack.c.h.b16 %v3451
    %v3475 = vunpack.c.l.b16 %v3452
    %v3476 = vunpack.c.h.b16 %v3452
    %v3477 = vpack.c.b16 %v3463, %v3461
    %v3478 = vpack.c.b16 %v3464, %v3462
    %v3479 = vpack.c.b16 %v3467, %v3465
    %v3480 = vpack.c.b16 %v3468, %v3466
    %v3481 = vpack.c.b16 %v3471, %v3469
    %v3482 = vpack.c.b16 %v3472, %v3470
    %v3483 = vpack.c.b16 %v3475, %v3473
    %v3484 = vpack.c.b16 %v3476, %v3474
    %vm3493 = vcmask 523264
    %v3495 = vsel %vm3493, %v3441, 0
    %v3498 = vsel %vm3493, %v3442, 0
    %v3501 = vsel %vm3493, %v3443, 0
    %v3504 = vsel %vm3493, %v3444, 0
    %3506 = vmatprep.subr.bf16.mxu0 %v3478
    %3507 = vmatpush1.bf16.msra.mxu0 %v3477
    %3508 = vmatprep.subr.bf16.mxu0 %v3480
    %3509 = vmatpush1.bf16.msra.mxu0 %v3479
    %3510 = vmatprep.subr.bf16.mxu0 %v3482
    %3511 = vmatpush1.bf16.msra.mxu0 %v3481
    %3512 = vmatprep.subr.bf16.mxu0 %v3484
    %3513 = vmatpush1.bf16.msra.mxu0 %v3483
    %3514 = vmatprep.subr.bf16.mxu0 0
    %3515 = vmatpush1.bf16.msra.mxu0 0
    %3516 = vmatprep.subr.bf16.mxu0 0
    %3517 = vmatpush1.bf16.msra.mxu0 0
    %3518 = vmatprep.subr.bf16.mxu0 0
    %3519 = vmatpush1.bf16.msra.mxu0 0
    %3520 = vmatprep.subr.bf16.mxu0 0
    %3521 = vmatpush1.bf16.msra.mxu0 0
    %3522 = vmatprep.subr.bf16.mxu0 0
    %3523 = vmatpush1.bf16.msra.mxu0 0
    %3524 = vmatprep.subr.bf16.mxu0 0
    %3525 = vmatpush1.bf16.msra.mxu0 0
    %3526 = vmatprep.subr.bf16.mxu0 0
    %3527 = vmatpush1.bf16.msra.mxu0 0
    %3528 = vmatprep.subr.bf16.mxu0 0
    %3529 = vmatpush1.bf16.msra.mxu0 0
    %3530 = vmatprep.subr.bf16.mxu0 0
    %3531 = vmatpush1.bf16.msra.mxu0 0
    %3532 = vmatprep.subr.bf16.mxu0 0
    %3533 = vmatpush1.bf16.msra.mxu0 0
    %3534 = vmatprep.subr.bf16.mxu0 0
    %3535 = vmatpush1.bf16.msra.mxu0 0
    %3536 = vmatprep.subr.bf16.mxu0 0
    %3537 = vmatpush1.bf16.msra.mxu0 0
    %3538 = vmatprep.mubr.bf16.mxu0 0
    %3539 = vmatmul.mubr.bf16.gmra.mrb[0].mxu0 %v3495
    %v3540 = vpop.f32.mrb[0].mxu0
    %v3541 = vadd.f32 0.0, %v3540
    %v3542 = vpop.f32.mrb[0].mxu0
    %v3543 = vadd.f32 0.0, %v3542
    %v3544 = vpop.f32.mrb[0].mxu0
    %v3545 = vadd.f32 0.0, %v3544
    %v3546 = vpop.f32.mrb[0].mxu0
    %v3547 = vadd.f32 0.0, %v3546
    %3548 = vmatprep.mubr.bf16.mxu0 0
    %3549 = vmatmul.mubr.bf16.gmra.mrb[0].mxu0 %v3498
    %v3550 = vpop.f32.mrb[0].mxu0
    %v3551 = vadd.f32 0.0, %v3550
    %v3552 = vpop.f32.mrb[0].mxu0
    %v3553 = vadd.f32 0.0, %v3552
    %v3554 = vpop.f32.mrb[0].mxu0
    %v3555 = vadd.f32 0.0, %v3554
    %v3556 = vpop.f32.mrb[0].mxu0
    %v3557 = vadd.f32 0.0, %v3556
    %3558 = vmatprep.mubr.bf16.mxu0 0
    %3559 = vmatmul.mubr.bf16.gmra.mrb[0].mxu0 %v3501
    %v3560 = vpop.f32.mrb[0].mxu0
    %v3561 = vadd.f32 0.0, %v3560
    %v3562 = vpop.f32.mrb[0].mxu0
    %v3563 = vadd.f32 0.0, %v3562
    %v3564 = vpop.f32.mrb[0].mxu0
    %v3565 = vadd.f32 0.0, %v3564
    %v3566 = vpop.f32.mrb[0].mxu0
    %v3567 = vadd.f32 0.0, %v3566
    %3568 = vmatprep.mubr.bf16.mxu0 0
    %3569 = vmatmul.mubr.bf16.gmra.mrb[0].mxu0 %v3504
    %v3570 = vpop.f32.mrb[0].mxu0
    %v3571 = vadd.f32 0.0, %v3570
    %v3572 = vpop.f32.mrb[0].mxu0
    %v3573 = vadd.f32 0.0, %v3572
    %v3574 = vpop.f32.mrb[0].mxu0
    %v3575 = vadd.f32 0.0, %v3574
    %v3576 = vpop.f32.mrb[0].mxu0
    %v3577 = vadd.f32 0.0, %v3576
    %3578 = vdwg.mxu0
    %v3587 = vunpack.c.l.b16 %v3433
    %v3588 = vunpack.c.h.b16 %v3433
    %v3589 = vunpack.c.l.b16 %v3434
    %v3590 = vunpack.c.h.b16 %v3434
    %v3591 = vunpack.c.l.b16 %v3435
    %v3592 = vunpack.c.h.b16 %v3435
    %v3593 = vunpack.c.l.b16 %v3436
    %v3594 = vunpack.c.h.b16 %v3436
    %v3595 = vunpack.c.l.b16 %v3437
    %v3596 = vunpack.c.h.b16 %v3437
    %v3597 = vunpack.c.l.b16 %v3438
    %v3598 = vunpack.c.h.b16 %v3438
    %v3599 = vunpack.c.l.b16 %v3439
    %v3600 = vunpack.c.h.b16 %v3439
    %v3601 = vunpack.c.l.b16 %v3440
    %v3602 = vunpack.c.h.b16 %v3440
    %v3603 = vpack.c.b16 %v3589, %v3587
    %v3604 = vpack.c.b16 %v3590, %v3588
    %v3605 = vpack.c.b16 %v3593, %v3591
    %v3606 = vpack.c.b16 %v3594, %v3592
    %v3607 = vpack.c.b16 %v3597, %v3595
    %v3608 = vpack.c.b16 %v3598, %v3596
    %v3609 = vpack.c.b16 %v3601, %v3599
    %v3610 = vpack.c.b16 %v3602, %v3600
    %v3620 = vsel %vm3493, %v3429, 0
    %v3623 = vsel %vm3493, %v3430, 0
    %v3626 = vsel %vm3493, %v3431, 0
    %v3629 = vsel %vm3493, %v3432, 0
    %3631 = vmatprep.subr.bf16.mxu0 %v3604
    %3632 = vmatpush1.bf16.msra.mxu0 %v3603
    %3633 = vmatprep.subr.bf16.mxu0 %v3606
    %3634 = vmatpush1.bf16.msra.mxu0 %v3605
    %3635 = vmatprep.subr.bf16.mxu0 %v3608
    %3636 = vmatpush1.bf16.msra.mxu0 %v3607
    %3637 = vmatprep.subr.bf16.mxu0 %v3610
    %3638 = vmatpush1.bf16.msra.mxu0 %v3609
    %3639 = vmatprep.subr.bf16.mxu0 0
    %3640 = vmatpush1.bf16.msra.mxu0 0
    %3641 = vmatprep.subr.bf16.mxu0 0
    %3642 = vmatpush1.bf16.msra.mxu0 0
    %3643 = vmatprep.subr.bf16.mxu0 0
    %3644 = vmatpush1.bf16.msra.mxu0 0
    %3645 = vmatprep.subr.bf16.mxu0 0
    %3646 = vmatpush1.bf16.msra.mxu0 0
    %3647 = vmatprep.subr.bf16.mxu0 0
    %3648 = vmatpush1.bf16.msra.mxu0 0
    %3649 = vmatprep.subr.bf16.mxu0 0
    %3650 = vmatpush1.bf16.msra.mxu0 0
    %3651 = vmatprep.subr.bf16.mxu0 0
    %3652 = vmatpush1.bf16.msra.mxu0 0
    %3653 = vmatprep.subr.bf16.mxu0 0
    %3654 = vmatpush1.bf16.msra.mxu0 0
    %3655 = vmatprep.subr.bf16.mxu0 0
    %3656 = vmatpush1.bf16.msra.mxu0 0
    %3657 = vmatprep.subr.bf16.mxu0 0
    %3658 = vmatpush1.bf16.msra.mxu0 0
    %3659 = vmatprep.subr.bf16.mxu0 0
    %3660 = vmatpush1.bf16.msra.mxu0 0
    %3661 = vmatprep.subr.bf16.mxu0 0
    %3662 = vmatpush1.bf16.msra.mxu0 0
    %3663 = vmatprep.mubr.bf16.mxu0 0
    %3664 = vmatmul.mubr.bf16.gmra.mrb[0].mxu0 %v3620
    %v3665 = vpop.f32.mrb[0].mxu0
    %v3666 = vadd.f32 %v3541, %v3665
    %v3667 = vpop.f32.mrb[0].mxu0
    %v3668 = vadd.f32 %v3543, %v3667
    %v3669 = vpop.f32.mrb[0].mxu0
    %v3670 = vadd.f32 %v3545, %v3669
    %v3671 = vpop.f32.mrb[0].mxu0
    %v3672 = vadd.f32 %v3547, %v3671
    %3673 = vmatprep.mubr.bf16.mxu0 0
    %3674 = vmatmul.mubr.bf16.gmra.mrb[0].mxu0 %v3623
    %v3675 = vpop.f32.mrb[0].mxu0
    %v3676 = vadd.f32 %v3551, %v3675
    %v3677 = vpop.f32.mrb[0].mxu0
    %v3678 = vadd.f32 %v3553, %v3677
    %v3679 = vpop.f32.mrb[0].mxu0
    %v3680 = vadd.f32 %v3555, %v3679
    %v3681 = vpop.f32.mrb[0].mxu0
    %v3682 = vadd.f32 %v3557, %v3681
    %3683 = vmatprep.mubr.bf16.mxu0 0
    %3684 = vmatmul.mubr.bf16.gmra.mrb[0].mxu0 %v3626
    %v3685 = vpop.f32.mrb[0].mxu0
    %v3686 = vadd.f32 %v3561, %v3685
    %v3687 = vpop.f32.mrb[0].mxu0
    %v3688 = vadd.f32 %v3563, %v3687
    %v3689 = vpop.f32.mrb[0].mxu0
    %v3690 = vadd.f32 %v3565, %v3689
    %v3691 = vpop.f32.mrb[0].mxu0
    %v3692 = vadd.f32 %v3567, %v3691
    %3693 = vmatprep.mubr.bf16.mxu0 0
    %3694 = vmatmul.mubr.bf16.gmra.mrb[0].mxu0 %v3629
    %v3695 = vpop.f32.mrb[0].mxu0
    %v3696 = vadd.f32 %v3571, %v3695
    %v3697 = vpop.f32.mrb[0].mxu0
    %v3698 = vadd.f32 %v3573, %v3697
    %v3699 = vpop.f32.mrb[0].mxu0
    %v3700 = vadd.f32 %v3575, %v3699
    %v3701 = vpop.f32.mrb[0].mxu0
    %v3702 = vadd.f32 %v3577, %v3701
    %3703 = vdwg.mxu0
    %v3704 = vld [vmem:[%s11 + $0xf] sm:$0x3]
    %v3706 = vlaneseq
    %v3707 = vshrl.u32 %v3706, 7
    %v3708 = vsub.s32 0, %v3707
    %v3709 = vrot.slane %v3704, %v3708
    %v3710 = vlaneseq
    %v3711 = vshrl.u32 %v3710, 7
    %v3712 = vsub.s32 1, %v3711
    %v3713 = vrot.slane %v3704, %v3712
    %v3716 = vadd.f32 %v3666, %v3709
    %v3717 = vadd.f32 %v3668, %v3713
    %v3718 = vadd.f32 %v3670, %v3709
    %v3719 = vadd.f32 %v3672, %v3713
    %v3720 = vadd.f32 %v3676, %v3709
    %v3721 = vadd.f32 %v3678, %v3713
    %v3722 = vadd.f32 %v3680, %v3709
    %v3723 = vadd.f32 %v3682, %v3713
    %v3724 = vadd.f32 %v3686, %v3709
    %v3725 = vadd.f32 %v3688, %v3713
    %v3726 = vadd.f32 %v3690, %v3709
    %v3727 = vadd.f32 %v3692, %v3713
    %v3728 = vadd.f32 %v3696, %v3709
    %v3729 = vadd.f32 %v3698, %v3713
    %v3730 = vadd.f32 %v3700, %v3709
    %v3731 = vadd.f32 %v3702, %v3713
    %v3732 = vmax.f32 %v3716, 0.0
    %v3733 = vmax.f32 %v3717, 0.0
    %v3734 = vmax.f32 %v3718, 0.0
    %v3735 = vmax.f32 %v3719, 0.0
    %v3736 = vmax.f32 %v3720, 0.0
    %v3737 = vmax.f32 %v3721, 0.0
    %v3738 = vmax.f32 %v3722, 0.0
    %v3739 = vmax.f32 %v3723, 0.0
    %v3740 = vmax.f32 %v3724, 0.0
    %v3741 = vmax.f32 %v3725, 0.0
    %v3742 = vmax.f32 %v3726, 0.0
    %v3743 = vmax.f32 %v3727, 0.0
    %v3744 = vmax.f32 %v3728, 0.0
    %v3745 = vmax.f32 %v3729, 0.0
    %v3746 = vmax.f32 %v3730, 0.0
    %v3747 = vmax.f32 %v3731, 0.0
    %v3748 = vpack.c.bf16 %v3734, %v3732
    %v3749 = vpack.c.bf16 %v3735, %v3733
    %v3750 = vpack.c.bf16 %v3738, %v3736
    %v3751 = vpack.c.bf16 %v3739, %v3737
    %v3752 = vpack.c.bf16 %v3742, %v3740
    %v3753 = vpack.c.bf16 %v3743, %v3741
    %v3754 = vpack.c.bf16 %v3746, %v3744
    %v3755 = vpack.c.bf16 %v3747, %v3745
    %v3756 = vld [vmem:[%s9] sm:$0xf]
    %v3757 = vld [vmem:[%s9 + $0x4] sm:$0xf]
    %v3758 = vld [vmem:[%s9 + $0x8] sm:$0xf]
    %v3759 = vld [vmem:[%s9 + $0xc] sm:$0xf]
    %v3760 = vld [vmem:[%s9 + $0x10] sm:$0xf]
    %v3761 = vld [vmem:[%s9 + $0x14] sm:$0xf]
    %v3762 = vld [vmem:[%s9 + $0x18] sm:$0xf]
    %v3763 = vld [vmem:[%s9 + $0x1c] sm:$0xf]
    %v3764 = vld [vmem:[%s9 + $0x20] sm:$0xf]
    %v3765 = vld [vmem:[%s9 + $0x24] sm:$0xf]
    %v3766 = vld [vmem:[%s9 + $0x28] sm:$0xf]
    %v3767 = vld [vmem:[%s9 + $0x2c] sm:$0xf]
    %v3768 = vld [vmem:[%s9 + $0x30] sm:$0xf]
    %v3769 = vld [vmem:[%s9 + $0x34] sm:$0xf]
    %v3770 = vld [vmem:[%s9 + $0x38] sm:$0xf]
    %v3771 = vld [vmem:[%s9 + $0x3c] sm:$0xf]
    %v3772 = vld [vmem:[%s9 + $0x40] sm:$0xf]
    %v3773 = vld [vmem:[%s9 + $0x44] sm:$0xf]
    %v3774 = vld [vmem:[%s9 + $0x48] sm:$0xf]
    %v3775 = vld [vmem:[%s9 + $0x4c] sm:$0xf]
    %v3776 = vld [vmem:[%s9 + $0x50] sm:$0xf]
    %v3777 = vld [vmem:[%s9 + $0x54] sm:$0xf]
    %v3778 = vld [vmem:[%s9 + $0x58] sm:$0xf]
    %v3779 = vld [vmem:[%s9 + $0x5c] sm:$0xf]
    %v3780 = vld [vmem:[%s9 + $0x60] sm:$0xf]
    %v3781 = vld [vmem:[%s9 + $0x64] sm:$0xf]
    %v3782 = vld [vmem:[%s9 + $0x68] sm:$0xf]
    %v3783 = vld [vmem:[%s9 + $0x6c] sm:$0xf]
    %v3784 = vld [vmem:[%s9 + $0x70] sm:$0xf]
    %v3785 = vld [vmem:[%s9 + $0x74] sm:$0xf]
    %v3786 = vld [vmem:[%s9 + $0x78] sm:$0xf]
    %v3787 = vld [vmem:[%s9 + $0x7c] sm:$0xf]
    %v3788 = vld [vmem:[%s11 + $0x11] sm:$0x1]
    %v3790 = vlaneseq
    %v3791 = vshrl.u32 %v3790, 7
    %v3792 = vsub.s32 0, %v3791
    %v3793 = vrot.slane %v3788, %v3792
    %v3827 = vunpack.c.l.b16 %v3756
    %v3828 = vunpack.c.l.b16 %v3757
    %v3829 = vunpack.c.l.b16 %v3758
    %v3830 = vunpack.c.l.b16 %v3759
    %v3831 = vunpack.c.l.b16 %v3760
    %v3832 = vunpack.c.l.b16 %v3761
    %v3833 = vunpack.c.l.b16 %v3762
    %v3834 = vunpack.c.l.b16 %v3763
    %v3835 = vunpack.c.l.b16 %v3764
    %v3836 = vunpack.c.l.b16 %v3765
    %v3837 = vunpack.c.l.b16 %v3766
    %v3838 = vunpack.c.l.b16 %v3767
    %v3839 = vunpack.c.l.b16 %v3768
    %v3840 = vunpack.c.l.b16 %v3769
    %v3841 = vunpack.c.l.b16 %v3770
    %v3842 = vunpack.c.l.b16 %v3771
    %v3843 = vunpack.c.l.b16 %v3772
    %v3844 = vunpack.c.l.b16 %v3773
    %v3845 = vunpack.c.l.b16 %v3774
    %v3846 = vunpack.c.l.b16 %v3775
    %v3847 = vunpack.c.l.b16 %v3776
    %v3848 = vunpack.c.l.b16 %v3777
    %v3849 = vunpack.c.l.b16 %v3778
    %v3850 = vunpack.c.l.b16 %v3779
    %v3851 = vunpack.c.l.b16 %v3780
    %v3852 = vunpack.c.l.b16 %v3781
    %v3853 = vunpack.c.l.b16 %v3782
    %v3854 = vunpack.c.l.b16 %v3783
    %v3855 = vunpack.c.l.b16 %v3784
    %v3856 = vunpack.c.l.b16 %v3785
    %v3857 = vunpack.c.l.b16 %v3786
    %v3858 = vunpack.c.l.b16 %v3787
    %v3859 = vpack.c.b16 %v3828, %v3827
    %v3860 = vpack.c.b16 %v3830, %v3829
    %v3861 = vpack.c.b16 %v3832, %v3831
    %v3862 = vpack.c.b16 %v3834, %v3833
    %v3863 = vpack.c.b16 %v3836, %v3835
    %v3864 = vpack.c.b16 %v3838, %v3837
    %v3865 = vpack.c.b16 %v3840, %v3839
    %v3866 = vpack.c.b16 %v3842, %v3841
    %v3867 = vpack.c.b16 %v3844, %v3843
    %v3868 = vpack.c.b16 %v3846, %v3845
    %v3869 = vpack.c.b16 %v3848, %v3847
    %v3870 = vpack.c.b16 %v3850, %v3849
    %v3871 = vpack.c.b16 %v3852, %v3851
    %v3872 = vpack.c.b16 %v3854, %v3853
    %v3873 = vpack.c.b16 %v3856, %v3855
    %v3874 = vpack.c.b16 %v3858, %v3857
    %3891 = vmatprep.subr.bf16.mxu0 0
    %3892 = vmatpush1.bf16.msra.mxu0 %v3859
    %3893 = vmatprep.subr.bf16.mxu0 0
    %3894 = vmatpush1.bf16.msra.mxu0 %v3860
    %3895 = vmatprep.subr.bf16.mxu0 0
    %3896 = vmatpush1.bf16.msra.mxu0 %v3861
    %3897 = vmatprep.subr.bf16.mxu0 0
    %3898 = vmatpush1.bf16.msra.mxu0 %v3862
    %3899 = vmatprep.subr.bf16.mxu0 0
    %3900 = vmatpush1.bf16.msra.mxu0 %v3863
    %3901 = vmatprep.subr.bf16.mxu0 0
    %3902 = vmatpush1.bf16.msra.mxu0 %v3864
    %3903 = vmatprep.subr.bf16.mxu0 0
    %3904 = vmatpush1.bf16.msra.mxu0 %v3865
    %3905 = vmatprep.subr.bf16.mxu0 0
    %3906 = vmatpush1.bf16.msra.mxu0 %v3866
    %3907 = vmatprep.subr.bf16.mxu0 0
    %3908 = vmatpush1.bf16.msra.mxu0 %v3867
    %3909 = vmatprep.subr.bf16.mxu0 0
    %3910 = vmatpush1.bf16.msra.mxu0 %v3868
    %3911 = vmatprep.subr.bf16.mxu0 0
    %3912 = vmatpush1.bf16.msra.mxu0 %v3869
    %3913 = vmatprep.subr.bf16.mxu0 0
    %3914 = vmatpush1.bf16.msra.mxu0 %v3870
    %3915 = vmatprep.subr.bf16.mxu0 0
    %3916 = vmatpush1.bf16.msra.mxu0 %v3871
    %3917 = vmatprep.subr.bf16.mxu0 0
    %3918 = vmatpush1.bf16.msra.mxu0 %v3872
    %3919 = vmatprep.subr.bf16.mxu0 0
    %3920 = vmatpush1.bf16.msra.mxu0 %v3873
    %3921 = vmatprep.subr.bf16.mxu0 0
    %3922 = vmatpush1.bf16.msra.mxu0 %v3874
    %3923 = vmatprep.mubr.bf16.mxu0 %v3749
    %3924 = vmatmul.mubr.bf16.gmra.mrb[0].mxu0 %v3748
    %v3925 = vpop.f32.mrb[0].mxu0
    %v3926 = vadd.f32 %v3793, %v3925
    %v3927 = vpop.f32.mrb[0].mxu0
    %v3928 = vpop.f32.mrb[0].mxu0
    %v3929 = vadd.f32 %v3793, %v3928
    %v3930 = vpop.f32.mrb[0].mxu0
    %3931 = vmatprep.mubr.bf16.mxu0 %v3751
    %3932 = vmatmul.mubr.bf16.gmra.mrb[0].mxu0 %v3750
    %v3933 = vpop.f32.mrb[0].mxu0
    %v3934 = vadd.f32 %v3793, %v3933
    %v3935 = vpop.f32.mrb[0].mxu0
    %v3936 = vpop.f32.mrb[0].mxu0
    %v3937 = vadd.f32 %v3793, %v3936
    %v3938 = vpop.f32.mrb[0].mxu0
    %3939 = vmatprep.mubr.bf16.mxu0 %v3753
    %3940 = vmatmul.mubr.bf16.gmra.mrb[0].mxu0 %v3752
    %v3941 = vpop.f32.mrb[0].mxu0
    %v3942 = vadd.f32 %v3793, %v3941
    %v3943 = vpop.f32.mrb[0].mxu0
    %v3944 = vpop.f32.mrb[0].mxu0
    %v3945 = vadd.f32 %v3793, %v3944
    %v3946 = vpop.f32.mrb[0].mxu0
    %3947 = vmatprep.mubr.bf16.mxu0 %v3755
    %3948 = vmatmul.mubr.bf16.gmra.mrb[0].mxu0 %v3754
    %v3949 = vpop.f32.mrb[0].mxu0
    %v3950 = vadd.f32 %v3793, %v3949
    %v3951 = vpop.f32.mrb[0].mxu0
    %v3952 = vpop.f32.mrb[0].mxu0
    %v3953 = vadd.f32 %v3793, %v3952
    %v3954 = vpop.f32.mrb[0].mxu0
    %3955 = vdwg.mxu0
    %v3956 = vmax.f32 %v3926, 0.0
    %v3957 = vmax.f32 %v3929, 0.0
    %v3958 = vmax.f32 %v3934, 0.0
    %v3959 = vmax.f32 %v3937, 0.0
    %v3960 = vmax.f32 %v3942, 0.0
    %v3961 = vmax.f32 %v3945, 0.0
    %v3962 = vmax.f32 %v3950, 0.0
    %v3963 = vmax.f32 %v3953, 0.0
    %v3964 = vpack.c.bf16 %v3957, %v3956
    %v3965 = vpack.c.bf16 %v3959, %v3958
    %v3966 = vpack.c.bf16 %v3961, %v3960
    %v3967 = vpack.c.bf16 %v3963, %v3962
    %v3968 = vld [vmem:[%s10] sm:$0xf]
    %v3969 = vld [vmem:[%s10 + $0x4] sm:$0xf]
    %v3970 = vld [vmem:[%s10 + $0x8] sm:$0xf]
    %v3971 = vld [vmem:[%s10 + $0xc] sm:$0xf]
    %v3972 = vld [vmem:[%s10 + $0x10] sm:$0xf]
    %v3973 = vld [vmem:[%s10 + $0x14] sm:$0xf]
    %v3974 = vld [vmem:[%s10 + $0x18] sm:$0xf]
    %v3975 = vld [vmem:[%s10 + $0x1c] sm:$0xf]
    %v3976 = vld [vmem:[%s10 + $0x20] sm:$0xf]
    %v3977 = vld [vmem:[%s10 + $0x24] sm:$0xf]
    %v3978 = vld [vmem:[%s10 + $0x28] sm:$0xf]
    %v3979 = vld [vmem:[%s10 + $0x2c] sm:$0xf]
    %v3980 = vld [vmem:[%s10 + $0x30] sm:$0xf]
    %v3981 = vld [vmem:[%s10 + $0x34] sm:$0xf]
    %v3982 = vld [vmem:[%s10 + $0x38] sm:$0xf]
    %v3983 = vld [vmem:[%s10 + $0x3c] sm:$0xf]
    %v3984 = vld [vmem:[%s11 + $0x12] sm:$0x1]
    %v3986 = vlaneseq
    %v3987 = vshrl.u32 %v3986, 7
    %v3988 = vsub.s32 0, %v3987
    %v3989 = vrot.slane %v3984, %v3988
    %v4007 = vunpack.c.l.b16 %v3968
    %v4008 = vunpack.c.l.b16 %v3969
    %v4009 = vunpack.c.l.b16 %v3970
    %v4010 = vunpack.c.l.b16 %v3971
    %v4011 = vunpack.c.l.b16 %v3972
    %v4012 = vunpack.c.l.b16 %v3973
    %v4013 = vunpack.c.l.b16 %v3974
    %v4014 = vunpack.c.l.b16 %v3975
    %v4015 = vunpack.c.l.b16 %v3976
    %v4016 = vunpack.c.l.b16 %v3977
    %v4017 = vunpack.c.l.b16 %v3978
    %v4018 = vunpack.c.l.b16 %v3979
    %v4019 = vunpack.c.l.b16 %v3980
    %v4020 = vunpack.c.l.b16 %v3981
    %v4021 = vunpack.c.l.b16 %v3982
    %v4022 = vunpack.c.l.b16 %v3983
    %v4023 = vpack.c.b16 %v4008, %v4007
    %v4024 = vpack.c.b16 %v4010, %v4009
    %v4025 = vpack.c.b16 %v4012, %v4011
    %v4026 = vpack.c.b16 %v4014, %v4013
    %v4027 = vpack.c.b16 %v4016, %v4015
    %v4028 = vpack.c.b16 %v4018, %v4017
    %v4029 = vpack.c.b16 %v4020, %v4019
    %v4030 = vpack.c.b16 %v4022, %v4021
    %4039 = vmatprep.subr.bf16.mxu0 0
    %4040 = vmatpush1.bf16.msra.mxu0 %v4023
    %4041 = vmatprep.subr.bf16.mxu0 0
    %4042 = vmatpush1.bf16.msra.mxu0 %v4024
    %4043 = vmatprep.subr.bf16.mxu0 0
    %4044 = vmatpush1.bf16.msra.mxu0 %v4025
    %4045 = vmatprep.subr.bf16.mxu0 0
    %4046 = vmatpush1.bf16.msra.mxu0 %v4026
    %4047 = vmatprep.subr.bf16.mxu0 0
    %4048 = vmatpush1.bf16.msra.mxu0 %v4027
    %4049 = vmatprep.subr.bf16.mxu0 0
    %4050 = vmatpush1.bf16.msra.mxu0 %v4028
    %4051 = vmatprep.subr.bf16.mxu0 0
    %4052 = vmatpush1.bf16.msra.mxu0 %v4029
    %4053 = vmatprep.subr.bf16.mxu0 0
    %4054 = vmatpush1.bf16.msra.mxu0 %v4030
    %4055 = vmatprep.subr.bf16.mxu0 0
    %4056 = vmatpush1.bf16.msra.mxu0 0
    %4057 = vmatprep.subr.bf16.mxu0 0
    %4058 = vmatpush1.bf16.msra.mxu0 0
    %4059 = vmatprep.subr.bf16.mxu0 0
    %4060 = vmatpush1.bf16.msra.mxu0 0
    %4061 = vmatprep.subr.bf16.mxu0 0
    %4062 = vmatpush1.bf16.msra.mxu0 0
    %4063 = vmatprep.subr.bf16.mxu0 0
    %4064 = vmatpush1.bf16.msra.mxu0 0
    %4065 = vmatprep.subr.bf16.mxu0 0
    %4066 = vmatpush1.bf16.msra.mxu0 0
    %4067 = vmatprep.subr.bf16.mxu0 0
    %4068 = vmatpush1.bf16.msra.mxu0 0
    %4069 = vmatprep.subr.bf16.mxu0 0
    %4070 = vmatpush1.bf16.msra.mxu0 0
    %4071 = vmatprep.mubr.bf16.mxu0 0
    %4072 = vmatmul.mubr.bf16.gmra.mrb[0].mxu0 %v3964
    %v4073 = vpop.f32.mrb[0].mxu0
    %v4074 = vadd.f32 %v3989, %v4073
    %v4075 = vpop.f32.mrb[0].mxu0
    %v4076 = vpop.f32.mrb[0].mxu0
    %v4077 = vadd.f32 %v3989, %v4076
    %v4078 = vpop.f32.mrb[0].mxu0
    %4079 = vmatprep.mubr.bf16.mxu0 0
    %4080 = vmatmul.mubr.bf16.gmra.mrb[0].mxu0 %v3965
    %v4081 = vpop.f32.mrb[0].mxu0
    %v4082 = vadd.f32 %v3989, %v4081
    %v4083 = vpop.f32.mrb[0].mxu0
    %v4084 = vpop.f32.mrb[0].mxu0
    %v4085 = vadd.f32 %v3989, %v4084
    %v4086 = vpop.f32.mrb[0].mxu0
    %4087 = vmatprep.mubr.bf16.mxu0 0
    %4088 = vmatmul.mubr.bf16.gmra.mrb[0].mxu0 %v3966
    %v4089 = vpop.f32.mrb[0].mxu0
    %v4090 = vadd.f32 %v3989, %v4089
    %v4091 = vpop.f32.mrb[0].mxu0
    %v4092 = vpop.f32.mrb[0].mxu0
    %v4093 = vadd.f32 %v3989, %v4092
    %v4094 = vpop.f32.mrb[0].mxu0
    %4095 = vmatprep.mubr.bf16.mxu0 0
    %4096 = vmatmul.mubr.bf16.gmra.mrb[0].mxu0 %v3967
    %v4097 = vpop.f32.mrb[0].mxu0
    %v4098 = vadd.f32 %v3989, %v4097
    %v4099 = vpop.f32.mrb[0].mxu0
    %v4100 = vpop.f32.mrb[0].mxu0
    %v4101 = vadd.f32 %v3989, %v4100
    %v4102 = vpop.f32.mrb[0].mxu0
    %4103 = vdwg.mxu0
    %v4104 = vmax.f32 %v4074, 0.0
    %v4105 = vmax.f32 %v4077, 0.0
    %v4106 = vmax.f32 %v4082, 0.0
    %v4107 = vmax.f32 %v4085, 0.0
    %v4108 = vmax.f32 %v4090, 0.0
    %v4109 = vmax.f32 %v4093, 0.0
    %v4110 = vmax.f32 %v4098, 0.0
    %v4111 = vmax.f32 %v4101, 0.0
    %v4112 = vld [vmem:[%s11 + $0x14] sm:$0x1]
    %v4114 = vlaneseq
    %v4115 = vshrl.u32 %v4114, 7
    %v4116 = vsub.s32 0, %v4115
    %v4117 = vrot.slane %v4112, %v4116
    %v4119 = vmul.f32 %v4104, %v4117
    %v4120 = vmul.f32 %v4105, %v4117
    %v4121 = vmul.f32 %v4106, %v4117
    %v4122 = vmul.f32 %v4107, %v4117
    %v4123 = vmul.f32 %v4108, %v4117
    %v4124 = vmul.f32 %v4109, %v4117
    %v4125 = vmul.f32 %v4110, %v4117
    %v4126 = vmul.f32 %v4111, %v4117
    %v4127 = vsel %vm3493, %v4119, 0.0
    %4128 = vadd.xlane.f32.xlu0 %v4127
    %v4129 = vpop.xlane.xlu0 %4128
    %v4130 = vsel %vm3493, %v4120, 0.0
    %4131 = vadd.xlane.f32.xlu0 %v4130
    %v4132 = vpop.xlane.xlu0 %4131
    %v4133 = vsel %vm3493, %v4121, 0.0
    %4134 = vadd.xlane.f32.xlu0 %v4133
    %v4135 = vpop.xlane.xlu0 %4134
    %v4136 = vsel %vm3493, %v4122, 0.0
    %4137 = vadd.xlane.f32.xlu0 %v4136
    %v4138 = vpop.xlane.xlu0 %4137
    %v4139 = vsel %vm3493, %v4123, 0.0
    %4140 = vadd.xlane.f32.xlu0 %v4139
    %v4141 = vpop.xlane.xlu0 %4140
    %v4142 = vsel %vm3493, %v4124, 0.0
    %4143 = vadd.xlane.f32.xlu0 %v4142
    %v4144 = vpop.xlane.xlu0 %4143
    %v4145 = vsel %vm3493, %v4125, 0.0
    %4146 = vadd.xlane.f32.xlu0 %v4145
    %v4147 = vpop.xlane.xlu0 %4146
    %v4148 = vsel %vm3493, %v4126, 0.0
    %4149 = vadd.xlane.f32.xlu0 %v4148
    %v4150 = vpop.xlane.xlu0 %4149
    %v4151 = vld [vmem:[%s11 + $0x13] sm:$0x1]
    %v4153 = vlaneseq
    %v4154 = vshrl.u32 %v4153, 7
    %v4155 = vsub.s32 0, %v4154
    %v4156 = vrot.slane %v4151, %v4155
    %v4158 = vadd.f32 %v4129, %v4156
    %v4159 = vadd.f32 %v4132, %v4156
    %v4160 = vadd.f32 %v4135, %v4156
    %v4161 = vadd.f32 %v4138, %v4156
    %v4162 = vadd.f32 %v4141, %v4156
    %v4163 = vadd.f32 %v4144, %v4156
    %v4164 = vadd.f32 %v4147, %v4156
    %v4165 = vadd.f32 %v4150, %v4156
    %v4166 = vxor.u32 %v4158, 2147483648
    %v4167 = vxor.u32 %v4159, 2147483648
    %v4168 = vxor.u32 %v4160, 2147483648
    %v4169 = vxor.u32 %v4161, 2147483648
    %v4170 = vxor.u32 %v4162, 2147483648
    %v4171 = vxor.u32 %v4163, 2147483648
    %v4172 = vxor.u32 %v4164, 2147483648
    %v4173 = vxor.u32 %v4165, 2147483648
    %v4174 = vmul.f32 %v4166, 1.442695
    %v4175 = vpow.pop %v4174
    %v4176 = vmul.f32 %v4167, 1.442695
    %v4177 = vpow.pop %v4176
    %v4178 = vmul.f32 %v4168, 1.442695
    %v4179 = vpow.pop %v4178
    %v4180 = vmul.f32 %v4169, 1.442695
    %v4181 = vpow.pop %v4180
    %v4182 = vmul.f32 %v4170, 1.442695
    %v4183 = vpow.pop %v4182
    %v4184 = vmul.f32 %v4171, 1.442695
    %v4185 = vpow.pop %v4184
    %v4186 = vmul.f32 %v4172, 1.442695
    %v4187 = vpow.pop %v4186
    %v4188 = vmul.f32 %v4173, 1.442695
    %v4189 = vpow.pop %v4188
    %v4190 = vadd.f32 %v4175, 1.0
    %v4191 = vadd.f32 %v4177, 1.0
    %v4192 = vadd.f32 %v4179, 1.0
    %v4193 = vadd.f32 %v4181, 1.0
    %v4194 = vadd.f32 %v4183, 1.0
    %v4195 = vadd.f32 %v4185, 1.0
    %v4196 = vadd.f32 %v4187, 1.0
    %v4197 = vadd.f32 %v4189, 1.0
    %v4198 = vrcp.pop %v4190
    %v4199 = vmul.f32 1.0, %v4198
    %v4200 = vrcp.pop %v4191
    %v4201 = vmul.f32 1.0, %v4200
    %v4202 = vrcp.pop %v4192
    %v4203 = vmul.f32 1.0, %v4202
    %v4204 = vrcp.pop %v4193
    %v4205 = vmul.f32 1.0, %v4204
    %v4206 = vrcp.pop %v4194
    %v4207 = vmul.f32 1.0, %v4206
    %v4208 = vrcp.pop %v4195
    %v4209 = vmul.f32 1.0, %v4208
    %v4210 = vrcp.pop %v4196
    %v4211 = vmul.f32 1.0, %v4210
    %v4212 = vrcp.pop %v4197
    %v4213 = vmul.f32 1.0, %v4212
    %vm4214 = vcmask 7168
    %4215 = vst.msk [vmem:[%s12] sm:$0xff] %vm4214, %v4199
    %4216 = vst.msk [vmem:[%s12 + $0x8] sm:$0xff] %vm4214, %v4201
    %4217 = vst.msk [vmem:[%s12 + $0x10] sm:$0xff] %vm4214, %v4203
    %4218 = vst.msk [vmem:[%s12 + $0x18] sm:$0xff] %vm4214, %v4205
    %4219 = vst.msk [vmem:[%s12 + $0x20] sm:$0xff] %vm4214, %v4207
    %4220 = vst.msk [vmem:[%s12 + $0x28] sm:$0xff] %vm4214, %v4209
    %4221 = vst.msk [vmem:[%s12 + $0x30] sm:$0xff] %vm4214, %v4211
    %4222 = vst.msk [vmem:[%s12 + $0x38] sm:$0xff] %vm4214, %v4213
    // Predicated region
    $region54: #{_forward_impl.1} parent=1 // pred_check
      _
    $region55: #{_forward_impl.1} parent=1 // pred_check_branch
      %4224 = sbr.rel (0) target = $region57
    $region56: #{_forward_impl.1} parent=1 // pred_region
      _
    $region57: #{_forward_impl.1} parent=1 // pred_fallthru
      _
    // Predicated region
    $region58: #{_forward_impl.1} parent=1 // pred_check
      _
    $region59: #{_forward_impl.1} parent=1 // pred_check_branch
      %4226 = sbr.rel (0) target = $region61
    $region60: #{_forward_impl.1} parent=1 // pred_region
      _
    $region61: #{_forward_impl.1} parent=1 // pred_fallthru
      _
    %4227 = vsyncpa [#allocation3], 1

</llo_original>
